<compile_context>
chip_gen: v7x
topology: tpu7x:2x2x1
jax: 0.10.0
libtpu: 0.0.40
codegen_flags: <defaults>
</compile_context>

<pallas_src>
import functools
import math

import jax
import jax.numpy as jnp
from jax import lax
from jax.experimental import pallas as pl
from jax.experimental.pallas import tpu as pltpu


def _sigmoid_via_tanh(x):
    # sigmoid(x) == 0.5 * (tanh(x/2) + 1): one EUP transcendental instead of two.
    return 0.5 * (jnp.tanh(0.5 * x) + 1.0)


def _lstm_chunk_kernel(xp_ref, wh_ref, hseq_ref, hfin_ref, cfin_ref, h_sc, c_sc,
                       *, t_total, t_chunk, needs_mask, mxu_dtype):
    """One grid step = t_chunk timesteps of the recurrence for one batch tile.

    xp_ref  : (t_chunk, b_tile, 4Hp) bf16  precomputed x @ W_x + bias (gates i|f|g|o)
    wh_ref  : (Hp, 4Hp)              bf16  recurrent weight (single-buffered)
    hseq_ref: (t_chunk, b_tile, Hp)  f32   per-step hidden outputs (chunked writeback)
    hfin_ref/cfin_ref: (b_tile, Hp)  f32   resident final-state blocks
    h_sc/c_sc: (b_tile, Hp)          f32   cross-chunk state scratch
    """
    chunk = pl.program_id(1)
    Hp = h_sc.shape[-1]

    @pl.when(chunk == 0)
    def _():
        h_sc[...] = jnp.zeros_like(h_sc)
        c_sc[...] = jnp.zeros_like(c_sc)

    # State crosses grid steps through VMEM scratch, but within a chunk it lives in
    # the fori_loop carry (vregs): no per-step VMEM round-trip on the serial chain.
    h0 = h_sc[...]
    c0 = c_sc[...]

    def step(k, carry):
        h_prev, c_prev = carry

        # (b_tile, 4Hp): x-projection (biases folded in the wrapper) + h @ W_h (MXU).
        gates = xp_ref[k].astype(jnp.float32) + jnp.dot(
            h_prev.astype(mxu_dtype), wh_ref[...],
            preferred_element_type=jnp.float32)

        i = _sigmoid_via_tanh(gates[:, 0 * Hp:1 * Hp])
        f = _sigmoid_via_tanh(gates[:, 1 * Hp:2 * Hp])
        g = jnp.tanh(gates[:, 2 * Hp:3 * Hp])
        o = _sigmoid_via_tanh(gates[:, 3 * Hp:4 * Hp])

        c_new = f * c_prev + i * g
        h_new = o * jnp.tanh(c_new)

        if needs_mask:
            # Padded tail steps (global t >= T): keep state frozen.
            valid = (chunk * t_chunk + k) < t_total
            c_new = jnp.where(valid, c_new, c_prev)
            h_new = jnp.where(valid, h_new, h_prev)

        hseq_ref[k] = h_new
        return (h_new, c_new)

    h_last, c_last = lax.fori_loop(0, t_chunk, step, (h0, c0), unroll=True)

    # Commit state once per chunk (not per step).
    h_sc[...] = h_last
    c_sc[...] = c_last

    @pl.when(chunk == pl.num_programs(1) - 1)
    def _():
        hfin_ref[...] = h_last
        cfin_ref[...] = c_last


def _pick_t_chunk(T, want):
    """Largest divisor of T <= want (avoids time padding); pad+mask only if that
    divisor would be pathologically small (e.g. prime T)."""
    want = max(1, min(want, T))
    best = 1
    for d in range(1, want + 1):
        if T % d == 0:
            best = d
    if 2 * best >= want:
        return best, False
    return want, True


def naive_lstm_forward(inputs, w_x, w_h, b, *,
                       t_chunk=8, b_tile=None,
                       mxu_dtype=jnp.bfloat16, xp_dtype=jnp.bfloat16,
                       single_buffer_wh=True):
    """inputs: [B, T, I] f32; w_x: [I, 4H]; w_h: [H, 4H]; b: [1, 4H] (gate order i|f|g|o)."""
    B, T, I = inputs.shape
    H = w_h.shape[0]
    assert w_x.shape == (I, 4 * H) and w_h.shape == (H, 4 * H) and b.shape == (1, 4 * H)

    # ---- Lane-align hidden dim (gate slices + hseq writeback become 128-dense). ----
    Hp = H if H % 128 == 0 else ((H + 127) // 128) * 128
    if Hp != H:
        pad = Hp - H
        # Zero-padded gate columns produce i=f=o=0.5, g=0 -> padded h/c stay exactly 0.
        w_x = jnp.pad(w_x.reshape(I, 4, H), ((0, 0), (0, 0), (0, pad))).reshape(I, 4 * Hp)
        w_h = jnp.pad(w_h.reshape(H, 4, H), ((0, pad), (0, 0), (0, pad))).reshape(Hp, 4 * Hp)
        b = jnp.pad(b.reshape(1, 4, H), ((0, 0), (0, 0), (0, pad))).reshape(1, 4 * Hp)
    G = 4 * Hp

    # ---- Batch tiling: split batch when possible so "parallel" axis uses both v7x TCs.
    if b_tile is None:
        if B % 2 == 0 and (B // 2) % 8 == 0:
            b_tile = B // 2
        else:
            b_tile = B
    assert B % b_tile == 0, "b_tile must divide B"
    assert b_tile == B or b_tile % 8 == 0, "batch tile must be 8-aligned (sublanes)"
    n_btiles = B // b_tile

    t_chunk, needs_mask = _pick_t_chunk(T, t_chunk)
    n_chunks = pl.cdiv(T, t_chunk)
    t_pad = n_chunks * t_chunk

    # ---- Hoisted input projection: one big MXU matmul entirely off the serial chain.
    # Bias (b_i* + b_h*) folded in; stream to the kernel in bf16 (dominant HBM read).
    x_proj = (jnp.einsum('bti,ig->tbg', inputs, w_x) + b).astype(xp_dtype)  # [T,B,4Hp]
    if t_pad != T:
        x_proj = jnp.pad(x_proj, ((0, t_pad - T), (0, 0), (0, 0)))

    wh = w_h.astype(mxu_dtype)  # bf16 MXU path (f32 accumulation in-kernel)

    kernel = functools.partial(_lstm_chunk_kernel, t_total=T, t_chunk=t_chunk,
                               needs_mask=needs_mask, mxu_dtype=mxu_dtype)

    # ---- VMEM budget (bytes): 2*xp bufs + W_h bufs + 2*hseq bufs + state outs + scratch.
    xp_bytes = t_chunk * b_tile * G * jnp.dtype(xp_dtype).itemsize
    wh_bytes = Hp * G * jnp.dtype(mxu_dtype).itemsize
    hseq_bytes = t_chunk * b_tile * Hp * 4
    st_bytes = b_tile * Hp * 4

    def build(wh_bufs):
        need = (2 * xp_bytes + wh_bufs * wh_bytes + 2 * hseq_bytes
                + 2 * 2 * st_bytes + 2 * st_bytes)
        # Leave headroom; clamp so tiny problems don't under-provision Mosaic's own
        # scratch.  (On v7x keep tiles such that `need` stays well under 64 MiB.)
        vmem_limit = int(min(max(1.3 * need + (4 << 20), 32 << 20), 100 << 20))

        if wh_bufs == 1:
            wh_spec = pl.BlockSpec((Hp, G), lambda bi, ci: (0, 0),
                                   pipeline_mode=pl.Buffered(1))
        else:
            wh_spec = pl.BlockSpec((Hp, G), lambda bi, ci: (0, 0))

        return pl.pallas_call(
            kernel,
            out_shape=(
                jax.ShapeDtypeStruct((t_pad, B, Hp), jnp.float32),   # hidden_seq
                jax.ShapeDtypeStruct((B, Hp), jnp.float32),          # h_n
                jax.ShapeDtypeStruct((B, Hp), jnp.float32),          # c_n
            ),
            grid_spec=pltpu.PrefetchScalarGridSpec(
                num_scalar_prefetch=0,
                grid=(n_btiles, n_chunks),                           # (parallel, time)
                in_specs=[
                    pl.BlockSpec((t_chunk, b_tile, G), lambda bi, ci: (ci, bi, 0)),
                    wh_spec,
                ],
                out_specs=[
                    pl.BlockSpec((t_chunk, b_tile, Hp), lambda bi, ci: (ci, bi, 0)),
                    pl.BlockSpec((b_tile, Hp), lambda bi, ci: (bi, 0)),
                    pl.BlockSpec((b_tile, Hp), lambda bi, ci: (bi, 0)),
                ],
                scratch_shapes=[
                    pltpu.VMEM((b_tile, Hp), jnp.float32),           # h state
                    pltpu.VMEM((b_tile, Hp), jnp.float32),           # c state
                ],
            ),
            compiler_params=pltpu.CompilerParams(
                dimension_semantics=("parallel", "arbitrary"),
                vmem_limit_bytes=vmem_limit),
        )

    if single_buffer_wh:
        try:
            hseq, h_fin, c_fin = build(1)(x_proj, wh)
        except Exception:
            # Older jax without BlockSpec.pipeline_mode / pl.Buffered: double-buffer W_h.
            hseq, h_fin, c_fin = build(2)(x_proj, wh)
    else:
        hseq, h_fin, c_fin = build(2)(x_proj, wh)

    # Only slice when padding actually happened (no-op copy otherwise).
    if t_pad != T or Hp != H:
        hseq = hseq[:T, :, :H]
    if Hp != H:
        h_fin = h_fin[:, :H]
        c_fin = c_fin[:, :H]

    # Match PyTorch return shapes: hidden_seq [T,B,H], (h_n [1,B,H], c_n [1,B,H])
    return hseq, (h_fin[None], c_fin[None])


def init_params(key, input_size, hidden_size):
    """Deterministic re-implementation of NaiveLSTM.reset_weigths()."""
    stdv = 1.0 / math.sqrt(hidden_size)
    names = ["w_ii", "w_hi", "b_ii", "b_hi",
             "w_if", "w_hf", "b_if", "b_hf",
             "w_io", "w_ho", "b_io", "b_ho",
             "w_ig", "w_hg", "b_ig", "b_hg"]
    shapes = {
        "w_i": (hidden_size, input_size),
        "w_h": (hidden_size, hidden_size),
        "b_": (hidden_size, 1),
    }
    params = {}
    keys = jax.random.split(key, len(names))
    for k, name in zip(keys, names):
        if name.startswith("w_i"):
            shp = shapes["w_i"]
        elif name.startswith("w_h"):
            shp = shapes["w_h"]
        else:
            shp = shapes["b_"]
        params[name] = jax.random.uniform(k, shp, jnp.float32, -stdv, stdv)
    return params


def pack_params(p):
    """Stack per-gate weights into MXU-friendly [in, 4H] form (gate order i|f|g|o)."""
    w_x = jnp.concatenate(
        [p["w_ii"].T, p["w_if"].T, p["w_ig"].T, p["w_io"].T], axis=1)   # [I, 4H]
    w_h = jnp.concatenate(
        [p["w_hi"].T, p["w_hf"].T, p["w_hg"].T, p["w_ho"].T], axis=1)   # [H, 4H]
    b = jnp.concatenate(
        [(p["b_ii"] + p["b_hi"]).T, (p["b_if"] + p["b_hf"]).T,
         (p["b_ig"] + p["b_hg"]).T, (p["b_io"] + p["b_ho"]).T], axis=1)  # [1, 4H]
    return w_x, w_h, b


def reference_forward(inputs, p):
    """Pure-JAX f32 transcription of the PyTorch loop (correctness check)."""
    B, T, _ = inputs.shape
    H = p["w_hi"].shape[0]
    h_t = jnp.zeros((H, B), jnp.float32)
    c_t = jnp.zeros((H, B), jnp.float32)
    outs = []
    for t in range(T):
        x = inputs[:, t, :].T                                  # [I, B]
        i = jax.nn.sigmoid(p["w_ii"] @ x + p["b_ii"] + p["w_hi"] @ h_t + p["b_hi"])
        f = jax.nn.sigmoid(p["w_if"] @ x + p["b_if"] + p["w_hf"] @ h_t + p["b_hf"])
        g = jnp.tanh(p["w_ig"] @ x + p["b_ig"] + p["w_hg"] @ h_t + p["b_hg"])
        o = jax.nn.sigmoid(p["w_io"] @ x + p["b_io"] + p["w_ho"] @ h_t + p["b_ho"])
        c_t = f * c_t + i * g
        h_t = o * jnp.tanh(c_t)
        outs.append(h_t.T[None])
    return jnp.concatenate(outs, axis=0), (h_t.T[None], c_t.T[None])


if __name__ == "__main__":
    B, T, I, H = 2, 8, 16, 32
    key = jax.random.PRNGKey(0)
    k_in, k_par = jax.random.split(key)

    inputs = jax.random.normal(k_in, (B, T, I), jnp.float32)
    params = init_params(k_par, I, H)
    w_x, w_h, b = pack_params(params)

    hseq, (h_n, c_n) = naive_lstm_forward(inputs, w_x, w_h, b)
    jax.block_until_ready(hseq)

    hseq_ref, (h_ref, c_ref) = reference_forward(inputs, params)
    assert hseq.shape == (T, B, H)
    assert h_n.shape == (1, B, H) and c_n.shape == (1, B, H)
    # bf16 W_h and bf16 x_proj stream (f32 accumulation, f32 state) -> loosened
    # tolerance; validated here at T=8, H=32 — re-check drift at production T/H.
    assert jnp.allclose(hseq, hseq_ref, atol=2e-2, rtol=2e-2)
    assert jnp.allclose(h_n, h_ref, atol=2e-2, rtol=2e-2)
    assert jnp.allclose(c_n, c_ref, atol=2e-2, rtol=2e-2)

    print("KERNEL_OK")
</pallas_src>

<mosaic_0001>
module attributes {stable_mosaic.version = 11 : i64} {
  func.func @_lstm_chunk_kernel(%arg0: i32, %arg1: i32, %arg2: memref<8x2x512xbf16, #tpu.memory_space<vmem>>, %arg3: memref<128x512xbf16, #tpu.memory_space<vmem>>, %arg4: memref<8x2x128xf32, #tpu.memory_space<vmem>>, %arg5: memref<2x128xf32, #tpu.memory_space<vmem>>, %arg6: memref<2x128xf32, #tpu.memory_space<vmem>>, %arg7: memref<2x128xf32, #tpu.memory_space<vmem>>, %arg8: memref<2x128xf32, #tpu.memory_space<vmem>>) attributes {dimension_semantics = [#tpu.dimension_semantics<parallel>, #tpu.dimension_semantics<arbitrary>], iteration_bounds = array<i64: 1, 1>, scalar_prefetch = 0 : i64, scratch_operands = 2 : i64, tpu.core_type = #tpu.core_type<tc>, window_params = [{transform_indices = @transform_0, window_bounds = array<i64: 8, 2, 512>}, {pipeline_mode = #tpu.pipeline_mode<synchronous>, transform_indices = @transform_1, window_bounds = array<i64: 128, 512>}, {transform_indices = @transform_2, window_bounds = array<i64: 8, 2, 128>}, {transform_indices = @transform_3, window_bounds = array<i64: 2, 128>}, {transform_indices = @transform_4, window_bounds = array<i64: 2, 128>}]} {
    %c0_i32 = arith.constant 0 : i32
    %0 = arith.cmpi eq, %arg1, %c0_i32 : i32
    %1 = arith.extui %0 : i1 to i32
    %c0_i32_0 = arith.constant 0 : i32
    %2 = arith.cmpi ne, %1, %c0_i32_0 : i32
    scf.if %2 {
      %cst_138 = arith.constant 0.000000e+00 : f32
      %354 = vector.broadcast %cst_138 : f32 to vector<2x128xf32>
      %c0_139 = arith.constant 0 : index
      %c0_140 = arith.constant 0 : index
      %355 = vector.load %arg7[%c0_139, %c0_140] : memref<2x128xf32, #tpu.memory_space<vmem>>, vector<2x128xf32>
      tpu.vector_store %arg7[%c0_139, %c0_140], %354 {strides = array<i32>} : memref<2x128xf32, #tpu.memory_space<vmem>>, vector<2x128xf32>,
      %cst_141 = arith.constant 0.000000e+00 : f32
      %356 = vector.broadcast %cst_141 : f32 to vector<2x128xf32>
      %c0_142 = arith.constant 0 : index
      %c0_143 = arith.constant 0 : index
      %357 = vector.load %arg8[%c0_142, %c0_143] : memref<2x128xf32, #tpu.memory_space<vmem>>, vector<2x128xf32>
      tpu.vector_store %arg8[%c0_142, %c0_143], %356 {strides = array<i32>} : memref<2x128xf32, #tpu.memory_space<vmem>>, vector<2x128xf32>,
    } else {
    }
    %c0 = arith.constant 0 : index
    %c0_1 = arith.constant 0 : index
    %3 = vector.load %arg7[%c0, %c0_1] : memref<2x128xf32, #tpu.memory_space<vmem>>, vector<2x128xf32>
    %c0_2 = arith.constant 0 : index
    %c0_3 = arith.constant 0 : index
    %4 = vector.load %arg8[%c0_2, %c0_3] : memref<2x128xf32, #tpu.memory_space<vmem>>, vector<2x128xf32>
    %c0_i32_4 = arith.constant 0 : i32
    %5 = arith.index_cast %c0_i32_4 : i32 to index
    %c0_5 = arith.constant 0 : index
    %c0_6 = arith.constant 0 : index
    %6 = vector.load %arg2[%5, %c0_5, %c0_6] : memref<8x2x512xbf16, #tpu.memory_space<vmem>>, vector<1x2x512xbf16>
    %7 = vector.shape_cast %6 : vector<1x2x512xbf16> to vector<2x512xbf16>
    %8 = arith.extf %7 : vector<2x512xbf16> to vector<2x512xf32>
    %9 = arith.truncf %3 : vector<2x128xf32> to vector<2x128xbf16>
    %c0_7 = arith.constant 0 : index
    %c0_8 = arith.constant 0 : index
    %10 = vector.load %arg3[%c0_7, %c0_8] : memref<128x512xbf16, #tpu.memory_space<vmem>>, vector<128x512xbf16>
    %cst = arith.constant dense<0.000000e+00> : vector<2x512xf32>
    %11 = tpu.matmul %9, %10, %cst {dimension_numbers = #tpu.dot_dimension_numbers<[1], [0], [0], [1], [0, 0, 1, 1], [], []>} : vector<2x128xbf16>, vector<128x512xbf16>, vector<2x512xf32> -> vector<2x512xf32>
    %12 = arith.addf %8, %11 : vector<2x512xf32>
    %13 = vector.extract_strided_slice %12 {offsets = [0, 0], sizes = [2, 128], strides = [1, 1]} : vector<2x512xf32> to vector<2x128xf32>
    %cst_9 = arith.constant 5.000000e-01 : f32
    %14 = vector.broadcast %cst_9 : f32 to vector<2x128xf32>
    %15 = arith.mulf %14, %13 : vector<2x128xf32>
    %16 = math.tanh %15 : vector<2x128xf32>
    %cst_10 = arith.constant 1.000000e+00 : f32
    %17 = vector.broadcast %cst_10 : f32 to vector<2x128xf32>
    %18 = arith.addf %16, %17 : vector<2x128xf32>
    %cst_11 = arith.constant 5.000000e-01 : f32
    %19 = vector.broadcast %cst_11 : f32 to vector<2x128xf32>
    %20 = arith.mulf %19, %18 : vector<2x128xf32>
    %21 = vector.extract_strided_slice %12 {offsets = [0, 128], sizes = [2, 128], strides = [1, 1]} : vector<2x512xf32> to vector<2x128xf32>
    %cst_12 = arith.constant 5.000000e-01 : f32
    %22 = vector.broadcast %cst_12 : f32 to vector<2x128xf32>
    %23 = arith.mulf %22, %21 : vector<2x128xf32>
    %24 = math.tanh %23 : vector<2x128xf32>
    %cst_13 = arith.constant 1.000000e+00 : f32
    %25 = vector.broadcast %cst_13 : f32 to vector<2x128xf32>
    %26 = arith.addf %24, %25 : vector<2x128xf32>
    %cst_14 = arith.constant 5.000000e-01 : f32
    %27 = vector.broadcast %cst_14 : f32 to vector<2x128xf32>
    %28 = arith.mulf %27, %26 : vector<2x128xf32>
    %29 = vector.extract_strided_slice %12 {offsets = [0, 256], sizes = [2, 128], strides = [1, 1]} : vector<2x512xf32> to vector<2x128xf32>
    %30 = math.tanh %29 : vector<2x128xf32>
    %31 = vector.extract_strided_slice %12 {offsets = [0, 384], sizes = [2, 128], strides = [1, 1]} : vector<2x512xf32> to vector<2x128xf32>
    %cst_15 = arith.constant 5.000000e-01 : f32
    %32 = vector.broadcast %cst_15 : f32 to vector<2x128xf32>
    %33 = arith.mulf %32, %31 : vector<2x128xf32>
    %34 = math.tanh %33 : vector<2x128xf32>
    %cst_16 = arith.constant 1.000000e+00 : f32
    %35 = vector.broadcast %cst_16 : f32 to vector<2x128xf32>
    %36 = arith.addf %34, %35 : vector<2x128xf32>
    %cst_17 = arith.constant 5.000000e-01 : f32
    %37 = vector.broadcast %cst_17 : f32 to vector<2x128xf32>
    %38 = arith.mulf %37, %36 : vector<2x128xf32>
    %39 = arith.mulf %28, %4 : vector<2x128xf32>
    %40 = arith.mulf %20, %30 : vector<2x128xf32>
    %41 = arith.addf %39, %40 : vector<2x128xf32>
    %42 = math.tanh %41 : vector<2x128xf32>
    %43 = arith.mulf %38, %42 : vector<2x128xf32>
    %44 = arith.index_cast %c0_i32_4 : i32 to index
    %c0_18 = arith.constant 0 : index
    %c0_19 = arith.constant 0 : index
    %45 = vector.load %arg4[%44, %c0_18, %c0_19] : memref<8x2x128xf32, #tpu.memory_space<vmem>>, vector<1x2x128xf32>
    %46 = vector.shape_cast %45 : vector<1x2x128xf32> to vector<2x128xf32>
    %47 = vector.shape_cast %43 : vector<2x128xf32> to vector<1x2x128xf32>
    tpu.vector_store %arg4[%44, %c0_18, %c0_19], %47 {strides = array<i32>} : memref<8x2x128xf32, #tpu.memory_space<vmem>>, vector<1x2x128xf32>,
    %c1_i32 = arith.constant 1 : i32
    %48 = arith.index_cast %c1_i32 : i32 to index
    %c0_20 = arith.constant 0 : index
    %c0_21 = arith.constant 0 : index
    %49 = vector.load %arg2[%48, %c0_20, %c0_21] : memref<8x2x512xbf16, #tpu.memory_space<vmem>>, vector<1x2x512xbf16>
    %50 = vector.shape_cast %49 : vector<1x2x512xbf16> to vector<2x512xbf16>
    %51 = arith.extf %50 : vector<2x512xbf16> to vector<2x512xf32>
    %52 = arith.truncf %43 : vector<2x128xf32> to vector<2x128xbf16>
    %c0_22 = arith.constant 0 : index
    %c0_23 = arith.constant 0 : index
    %53 = vector.load %arg3[%c0_22, %c0_23] : memref<128x512xbf16, #tpu.memory_space<vmem>>, vector<128x512xbf16>
    %cst_24 = arith.constant dense<0.000000e+00> : vector<2x512xf32>
    %54 = tpu.matmul %52, %53, %cst_24 {dimension_numbers = #tpu.dot_dimension_numbers<[1], [0], [0], [1], [0, 0, 1, 1], [], []>} : vector<2x128xbf16>, vector<128x512xbf16>, vector<2x512xf32> -> vector<2x512xf32>
    %55 = arith.addf %51, %54 : vector<2x512xf32>
    %56 = vector.extract_strided_slice %55 {offsets = [0, 0], sizes = [2, 128], strides = [1, 1]} : vector<2x512xf32> to vector<2x128xf32>
    %cst_25 = arith.constant 5.000000e-01 : f32
    %57 = vector.broadcast %cst_25 : f32 to vector<2x128xf32>
    %58 = arith.mulf %57, %56 : vector<2x128xf32>
    %59 = math.tanh %58 : vector<2x128xf32>
    %cst_26 = arith.constant 1.000000e+00 : f32
    %60 = vector.broadcast %cst_26 : f32 to vector<2x128xf32>
    %61 = arith.addf %59, %60 : vector<2x128xf32>
    %cst_27 = arith.constant 5.000000e-01 : f32
    %62 = vector.broadcast %cst_27 : f32 to vector<2x128xf32>
    %63 = arith.mulf %62, %61 : vector<2x128xf32>
    %64 = vector.extract_strided_slice %55 {offsets = [0, 128], sizes = [2, 128], strides = [1, 1]} : vector<2x512xf32> to vector<2x128xf32>
    %cst_28 = arith.constant 5.000000e-01 : f32
    %65 = vector.broadcast %cst_28 : f32 to vector<2x128xf32>
    %66 = arith.mulf %65, %64 : vector<2x128xf32>
    %67 = math.tanh %66 : vector<2x128xf32>
    %cst_29 = arith.constant 1.000000e+00 : f32
    %68 = vector.broadcast %cst_29 : f32 to vector<2x128xf32>
    %69 = arith.addf %67, %68 : vector<2x128xf32>
    %cst_30 = arith.constant 5.000000e-01 : f32
    %70 = vector.broadcast %cst_30 : f32 to vector<2x128xf32>
    %71 = arith.mulf %70, %69 : vector<2x128xf32>
    %72 = vector.extract_strided_slice %55 {offsets = [0, 256], sizes = [2, 128], strides = [1, 1]} : vector<2x512xf32> to vector<2x128xf32>
    %73 = math.tanh %72 : vector<2x128xf32>
    %74 = vector.extract_strided_slice %55 {offsets = [0, 384], sizes = [2, 128], strides = [1, 1]} : vector<2x512xf32> to vector<2x128xf32>
    %cst_31 = arith.constant 5.000000e-01 : f32
    %75 = vector.broadcast %cst_31 : f32 to vector<2x128xf32>
    %76 = arith.mulf %75, %74 : vector<2x128xf32>
    %77 = math.tanh %76 : vector<2x128xf32>
    %cst_32 = arith.constant 1.000000e+00 : f32
    %78 = vector.broadcast %cst_32 : f32 to vector<2x128xf32>
    %79 = arith.addf %77, %78 : vector<2x128xf32>
    %cst_33 = arith.constant 5.000000e-01 : f32
    %80 = vector.broadcast %cst_33 : f32 to vector<2x128xf32>
    %81 = arith.mulf %80, %79 : vector<2x128xf32>
    %82 = arith.mulf %71, %41 : vector<2x128xf32>
    %83 = arith.mulf %63, %73 : vector<2x128xf32>
    %84 = arith.addf %82, %83 : vector<2x128xf32>
    %85 = math.tanh %84 : vector<2x128xf32>
    %86 = arith.mulf %81, %85 : vector<2x128xf32>
    %87 = arith.index_cast %c1_i32 : i32 to index
    %c0_34 = arith.constant 0 : index
    %c0_35 = arith.constant 0 : index
    %88 = vector.load %arg4[%87, %c0_34, %c0_35] : memref<8x2x128xf32, #tpu.memory_space<vmem>>, vector<1x2x128xf32>
    %89 = vector.shape_cast %88 : vector<1x2x128xf32> to vector<2x128xf32>
    %90 = vector.shape_cast %86 : vector<2x128xf32> to vector<1x2x128xf32>
    tpu.vector_store %arg4[%87, %c0_34, %c0_35], %90 {strides = array<i32>} : memref<8x2x128xf32, #tpu.memory_space<vmem>>, vector<1x2x128xf32>,
    %c2_i32 = arith.constant 2 : i32
    %91 = arith.index_cast %c2_i32 : i32 to index
    %c0_36 = arith.constant 0 : index
    %c0_37 = arith.constant 0 : index
    %92 = vector.load %arg2[%91, %c0_36, %c0_37] : memref<8x2x512xbf16, #tpu.memory_space<vmem>>, vector<1x2x512xbf16>
    %93 = vector.shape_cast %92 : vector<1x2x512xbf16> to vector<2x512xbf16>
    %94 = arith.extf %93 : vector<2x512xbf16> to vector<2x512xf32>
    %95 = arith.truncf %86 : vector<2x128xf32> to vector<2x128xbf16>
    %c0_38 = arith.constant 0 : index
    %c0_39 = arith.constant 0 : index
    %96 = vector.load %arg3[%c0_38, %c0_39] : memref<128x512xbf16, #tpu.memory_space<vmem>>, vector<128x512xbf16>
    %cst_40 = arith.constant dense<0.000000e+00> : vector<2x512xf32>
    %97 = tpu.matmul %95, %96, %cst_40 {dimension_numbers = #tpu.dot_dimension_numbers<[1], [0], [0], [1], [0, 0, 1, 1], [], []>} : vector<2x128xbf16>, vector<128x512xbf16>, vector<2x512xf32> -> vector<2x512xf32>
    %98 = arith.addf %94, %97 : vector<2x512xf32>
    %99 = vector.extract_strided_slice %98 {offsets = [0, 0], sizes = [2, 128], strides = [1, 1]} : vector<2x512xf32> to vector<2x128xf32>
    %cst_41 = arith.constant 5.000000e-01 : f32
    %100 = vector.broadcast %cst_41 : f32 to vector<2x128xf32>
    %101 = arith.mulf %100, %99 : vector<2x128xf32>
    %102 = math.tanh %101 : vector<2x128xf32>
    %cst_42 = arith.constant 1.000000e+00 : f32
    %103 = vector.broadcast %cst_42 : f32 to vector<2x128xf32>
    %104 = arith.addf %102, %103 : vector<2x128xf32>
    %cst_43 = arith.constant 5.000000e-01 : f32
    %105 = vector.broadcast %cst_43 : f32 to vector<2x128xf32>
    %106 = arith.mulf %105, %104 : vector<2x128xf32>
    %107 = vector.extract_strided_slice %98 {offsets = [0, 128], sizes = [2, 128], strides = [1, 1]} : vector<2x512xf32> to vector<2x128xf32>
    %cst_44 = arith.constant 5.000000e-01 : f32
    %108 = vector.broadcast %cst_44 : f32 to vector<2x128xf32>
    %109 = arith.mulf %108, %107 : vector<2x128xf32>
    %110 = math.tanh %109 : vector<2x128xf32>
    %cst_45 = arith.constant 1.000000e+00 : f32
    %111 = vector.broadcast %cst_45 : f32 to vector<2x128xf32>
    %112 = arith.addf %110, %111 : vector<2x128xf32>
    %cst_46 = arith.constant 5.000000e-01 : f32
    %113 = vector.broadcast %cst_46 : f32 to vector<2x128xf32>
    %114 = arith.mulf %113, %112 : vector<2x128xf32>
    %115 = vector.extract_strided_slice %98 {offsets = [0, 256], sizes = [2, 128], strides = [1, 1]} : vector<2x512xf32> to vector<2x128xf32>
    %116 = math.tanh %115 : vector<2x128xf32>
    %117 = vector.extract_strided_slice %98 {offsets = [0, 384], sizes = [2, 128], strides = [1, 1]} : vector<2x512xf32> to vector<2x128xf32>
    %cst_47 = arith.constant 5.000000e-01 : f32
    %118 = vector.broadcast %cst_47 : f32 to vector<2x128xf32>
    %119 = arith.mulf %118, %117 : vector<2x128xf32>
    %120 = math.tanh %119 : vector<2x128xf32>
    %cst_48 = arith.constant 1.000000e+00 : f32
    %121 = vector.broadcast %cst_48 : f32 to vector<2x128xf32>
    %122 = arith.addf %120, %121 : vector<2x128xf32>
    %cst_49 = arith.constant 5.000000e-01 : f32
    %123 = vector.broadcast %cst_49 : f32 to vector<2x128xf32>
    %124 = arith.mulf %123, %122 : vector<2x128xf32>
    %125 = arith.mulf %114, %84 : vector<2x128xf32>
    %126 = arith.mulf %106, %116 : vector<2x128xf32>
    %127 = arith.addf %125, %126 : vector<2x128xf32>
    %128 = math.tanh %127 : vector<2x128xf32>
    %129 = arith.mulf %124, %128 : vector<2x128xf32>
    %130 = arith.index_cast %c2_i32 : i32 to index
    %c0_50 = arith.constant 0 : index
    %c0_51 = arith.constant 0 : index
    %131 = vector.load %arg4[%130, %c0_50, %c0_51] : memref<8x2x128xf32, #tpu.memory_space<vmem>>, vector<1x2x128xf32>
    %132 = vector.shape_cast %131 : vector<1x2x128xf32> to vector<2x128xf32>
    %133 = vector.shape_cast %129 : vector<2x128xf32> to vector<1x2x128xf32>
    tpu.vector_store %arg4[%130, %c0_50, %c0_51], %133 {strides = array<i32>} : memref<8x2x128xf32, #tpu.memory_space<vmem>>, vector<1x2x128xf32>,
    %c3_i32 = arith.constant 3 : i32
    %134 = arith.index_cast %c3_i32 : i32 to index
    %c0_52 = arith.constant 0 : index
    %c0_53 = arith.constant 0 : index
    %135 = vector.load %arg2[%134, %c0_52, %c0_53] : memref<8x2x512xbf16, #tpu.memory_space<vmem>>, vector<1x2x512xbf16>
    %136 = vector.shape_cast %135 : vector<1x2x512xbf16> to vector<2x512xbf16>
    %137 = arith.extf %136 : vector<2x512xbf16> to vector<2x512xf32>
    %138 = arith.truncf %129 : vector<2x128xf32> to vector<2x128xbf16>
    %c0_54 = arith.constant 0 : index
    %c0_55 = arith.constant 0 : index
    %139 = vector.load %arg3[%c0_54, %c0_55] : memref<128x512xbf16, #tpu.memory_space<vmem>>, vector<128x512xbf16>
    %cst_56 = arith.constant dense<0.000000e+00> : vector<2x512xf32>
    %140 = tpu.matmul %138, %139, %cst_56 {dimension_numbers = #tpu.dot_dimension_numbers<[1], [0], [0], [1], [0, 0, 1, 1], [], []>} : vector<2x128xbf16>, vector<128x512xbf16>, vector<2x512xf32> -> vector<2x512xf32>
    %141 = arith.addf %137, %140 : vector<2x512xf32>
    %142 = vector.extract_strided_slice %141 {offsets = [0, 0], sizes = [2, 128], strides = [1, 1]} : vector<2x512xf32> to vector<2x128xf32>
    %cst_57 = arith.constant 5.000000e-01 : f32
    %143 = vector.broadcast %cst_57 : f32 to vector<2x128xf32>
    %144 = arith.mulf %143, %142 : vector<2x128xf32>
    %145 = math.tanh %144 : vector<2x128xf32>
    %cst_58 = arith.constant 1.000000e+00 : f32
    %146 = vector.broadcast %cst_58 : f32 to vector<2x128xf32>
    %147 = arith.addf %145, %146 : vector<2x128xf32>
    %cst_59 = arith.constant 5.000000e-01 : f32
    %148 = vector.broadcast %cst_59 : f32 to vector<2x128xf32>
    %149 = arith.mulf %148, %147 : vector<2x128xf32>
    %150 = vector.extract_strided_slice %141 {offsets = [0, 128], sizes = [2, 128], strides = [1, 1]} : vector<2x512xf32> to vector<2x128xf32>
    %cst_60 = arith.constant 5.000000e-01 : f32
    %151 = vector.broadcast %cst_60 : f32 to vector<2x128xf32>
    %152 = arith.mulf %151, %150 : vector<2x128xf32>
    %153 = math.tanh %152 : vector<2x128xf32>
    %cst_61 = arith.constant 1.000000e+00 : f32
    %154 = vector.broadcast %cst_61 : f32 to vector<2x128xf32>
    %155 = arith.addf %153, %154 : vector<2x128xf32>
    %cst_62 = arith.constant 5.000000e-01 : f32
    %156 = vector.broadcast %cst_62 : f32 to vector<2x128xf32>
    %157 = arith.mulf %156, %155 : vector<2x128xf32>
    %158 = vector.extract_strided_slice %141 {offsets = [0, 256], sizes = [2, 128], strides = [1, 1]} : vector<2x512xf32> to vector<2x128xf32>
    %159 = math.tanh %158 : vector<2x128xf32>
    %160 = vector.extract_strided_slice %141 {offsets = [0, 384], sizes = [2, 128], strides = [1, 1]} : vector<2x512xf32> to vector<2x128xf32>
    %cst_63 = arith.constant 5.000000e-01 : f32
    %161 = vector.broadcast %cst_63 : f32 to vector<2x128xf32>
    %162 = arith.mulf %161, %160 : vector<2x128xf32>
    %163 = math.tanh %162 : vector<2x128xf32>
    %cst_64 = arith.constant 1.000000e+00 : f32
    %164 = vector.broadcast %cst_64 : f32 to vector<2x128xf32>
    %165 = arith.addf %163, %164 : vector<2x128xf32>
    %cst_65 = arith.constant 5.000000e-01 : f32
    %166 = vector.broadcast %cst_65 : f32 to vector<2x128xf32>
    %167 = arith.mulf %166, %165 : vector<2x128xf32>
    %168 = arith.mulf %157, %127 : vector<2x128xf32>
    %169 = arith.mulf %149, %159 : vector<2x128xf32>
    %170 = arith.addf %168, %169 : vector<2x128xf32>
    %171 = math.tanh %170 : vector<2x128xf32>
    %172 = arith.mulf %167, %171 : vector<2x128xf32>
    %173 = arith.index_cast %c3_i32 : i32 to index
    %c0_66 = arith.constant 0 : index
    %c0_67 = arith.constant 0 : index
    %174 = vector.load %arg4[%173, %c0_66, %c0_67] : memref<8x2x128xf32, #tpu.memory_space<vmem>>, vector<1x2x128xf32>
    %175 = vector.shape_cast %174 : vector<1x2x128xf32> to vector<2x128xf32>
    %176 = vector.shape_cast %172 : vector<2x128xf32> to vector<1x2x128xf32>
    tpu.vector_store %arg4[%173, %c0_66, %c0_67], %176 {strides = array<i32>} : memref<8x2x128xf32, #tpu.memory_space<vmem>>, vector<1x2x128xf32>,
    %c4_i32 = arith.constant 4 : i32
    %177 = arith.index_cast %c4_i32 : i32 to index
    %c0_68 = arith.constant 0 : index
    %c0_69 = arith.constant 0 : index
    %178 = vector.load %arg2[%177, %c0_68, %c0_69] : memref<8x2x512xbf16, #tpu.memory_space<vmem>>, vector<1x2x512xbf16>
    %179 = vector.shape_cast %178 : vector<1x2x512xbf16> to vector<2x512xbf16>
    %180 = arith.extf %179 : vector<2x512xbf16> to vector<2x512xf32>
    %181 = arith.truncf %172 : vector<2x128xf32> to vector<2x128xbf16>
    %c0_70 = arith.constant 0 : index
    %c0_71 = arith.constant 0 : index
    %182 = vector.load %arg3[%c0_70, %c0_71] : memref<128x512xbf16, #tpu.memory_space<vmem>>, vector<128x512xbf16>
    %cst_72 = arith.constant dense<0.000000e+00> : vector<2x512xf32>
    %183 = tpu.matmul %181, %182, %cst_72 {dimension_numbers = #tpu.dot_dimension_numbers<[1], [0], [0], [1], [0, 0, 1, 1], [], []>} : vector<2x128xbf16>, vector<128x512xbf16>, vector<2x512xf32> -> vector<2x512xf32>
    %184 = arith.addf %180, %183 : vector<2x512xf32>
    %185 = vector.extract_strided_slice %184 {offsets = [0, 0], sizes = [2, 128], strides = [1, 1]} : vector<2x512xf32> to vector<2x128xf32>
    %cst_73 = arith.constant 5.000000e-01 : f32
    %186 = vector.broadcast %cst_73 : f32 to vector<2x128xf32>
    %187 = arith.mulf %186, %185 : vector<2x128xf32>
    %188 = math.tanh %187 : vector<2x128xf32>
    %cst_74 = arith.constant 1.000000e+00 : f32
    %189 = vector.broadcast %cst_74 : f32 to vector<2x128xf32>
    %190 = arith.addf %188, %189 : vector<2x128xf32>
    %cst_75 = arith.constant 5.000000e-01 : f32
    %191 = vector.broadcast %cst_75 : f32 to vector<2x128xf32>
    %192 = arith.mulf %191, %190 : vector<2x128xf32>
    %193 = vector.extract_strided_slice %184 {offsets = [0, 128], sizes = [2, 128], strides = [1, 1]} : vector<2x512xf32> to vector<2x128xf32>
    %cst_76 = arith.constant 5.000000e-01 : f32
    %194 = vector.broadcast %cst_76 : f32 to vector<2x128xf32>
    %195 = arith.mulf %194, %193 : vector<2x128xf32>
    %196 = math.tanh %195 : vector<2x128xf32>
    %cst_77 = arith.constant 1.000000e+00 : f32
    %197 = vector.broadcast %cst_77 : f32 to vector<2x128xf32>
    %198 = arith.addf %196, %197 : vector<2x128xf32>
    %cst_78 = arith.constant 5.000000e-01 : f32
    %199 = vector.broadcast %cst_78 : f32 to vector<2x128xf32>
    %200 = arith.mulf %199, %198 : vector<2x128xf32>
    %201 = vector.extract_strided_slice %184 {offsets = [0, 256], sizes = [2, 128], strides = [1, 1]} : vector<2x512xf32> to vector<2x128xf32>
    %202 = math.tanh %201 : vector<2x128xf32>
    %203 = vector.extract_strided_slice %184 {offsets = [0, 384], sizes = [2, 128], strides = [1, 1]} : vector<2x512xf32> to vector<2x128xf32>
    %cst_79 = arith.constant 5.000000e-01 : f32
    %204 = vector.broadcast %cst_79 : f32 to vector<2x128xf32>
    %205 = arith.mulf %204, %203 : vector<2x128xf32>
    %206 = math.tanh %205 : vector<2x128xf32>
    %cst_80 = arith.constant 1.000000e+00 : f32
    %207 = vector.broadcast %cst_80 : f32 to vector<2x128xf32>
    %208 = arith.addf %206, %207 : vector<2x128xf32>
    %cst_81 = arith.constant 5.000000e-01 : f32
    %209 = vector.broadcast %cst_81 : f32 to vector<2x128xf32>
    %210 = arith.mulf %209, %208 : vector<2x128xf32>
    %211 = arith.mulf %200, %170 : vector<2x128xf32>
    %212 = arith.mulf %192, %202 : vector<2x128xf32>
    %213 = arith.addf %211, %212 : vector<2x128xf32>
    %214 = math.tanh %213 : vector<2x128xf32>
    %215 = arith.mulf %210, %214 : vector<2x128xf32>
    %216 = arith.index_cast %c4_i32 : i32 to index
    %c0_82 = arith.constant 0 : index
    %c0_83 = arith.constant 0 : index
    %217 = vector.load %arg4[%216, %c0_82, %c0_83] : memref<8x2x128xf32, #tpu.memory_space<vmem>>, vector<1x2x128xf32>
    %218 = vector.shape_cast %217 : vector<1x2x128xf32> to vector<2x128xf32>
    %219 = vector.shape_cast %215 : vector<2x128xf32> to vector<1x2x128xf32>
    tpu.vector_store %arg4[%216, %c0_82, %c0_83], %219 {strides = array<i32>} : memref<8x2x128xf32, #tpu.memory_space<vmem>>, vector<1x2x128xf32>,
    %c5_i32 = arith.constant 5 : i32
    %220 = arith.index_cast %c5_i32 : i32 to index
    %c0_84 = arith.constant 0 : index
    %c0_85 = arith.constant 0 : index
    %221 = vector.load %arg2[%220, %c0_84, %c0_85] : memref<8x2x512xbf16, #tpu.memory_space<vmem>>, vector<1x2x512xbf16>
    %222 = vector.shape_cast %221 : vector<1x2x512xbf16> to vector<2x512xbf16>
    %223 = arith.extf %222 : vector<2x512xbf16> to vector<2x512xf32>
    %224 = arith.truncf %215 : vector<2x128xf32> to vector<2x128xbf16>
    %c0_86 = arith.constant 0 : index
    %c0_87 = arith.constant 0 : index
    %225 = vector.load %arg3[%c0_86, %c0_87] : memref<128x512xbf16, #tpu.memory_space<vmem>>, vector<128x512xbf16>
    %cst_88 = arith.constant dense<0.000000e+00> : vector<2x512xf32>
    %226 = tpu.matmul %224, %225, %cst_88 {dimension_numbers = #tpu.dot_dimension_numbers<[1], [0], [0], [1], [0, 0, 1, 1], [], []>} : vector<2x128xbf16>, vector<128x512xbf16>, vector<2x512xf32> -> vector<2x512xf32>
    %227 = arith.addf %223, %226 : vector<2x512xf32>
    %228 = vector.extract_strided_slice %227 {offsets = [0, 0], sizes = [2, 128], strides = [1, 1]} : vector<2x512xf32> to vector<2x128xf32>
    %cst_89 = arith.constant 5.000000e-01 : f32
    %229 = vector.broadcast %cst_89 : f32 to vector<2x128xf32>
    %230 = arith.mulf %229, %228 : vector<2x128xf32>
    %231 = math.tanh %230 : vector<2x128xf32>
    %cst_90 = arith.constant 1.000000e+00 : f32
    %232 = vector.broadcast %cst_90 : f32 to vector<2x128xf32>
    %233 = arith.addf %231, %232 : vector<2x128xf32>
    %cst_91 = arith.constant 5.000000e-01 : f32
    %234 = vector.broadcast %cst_91 : f32 to vector<2x128xf32>
    %235 = arith.mulf %234, %233 : vector<2x128xf32>
    %236 = vector.extract_strided_slice %227 {offsets = [0, 128], sizes = [2, 128], strides = [1, 1]} : vector<2x512xf32> to vector<2x128xf32>
    %cst_92 = arith.constant 5.000000e-01 : f32
    %237 = vector.broadcast %cst_92 : f32 to vector<2x128xf32>
    %238 = arith.mulf %237, %236 : vector<2x128xf32>
    %239 = math.tanh %238 : vector<2x128xf32>
    %cst_93 = arith.constant 1.000000e+00 : f32
    %240 = vector.broadcast %cst_93 : f32 to vector<2x128xf32>
    %241 = arith.addf %239, %240 : vector<2x128xf32>
    %cst_94 = arith.constant 5.000000e-01 : f32
    %242 = vector.broadcast %cst_94 : f32 to vector<2x128xf32>
    %243 = arith.mulf %242, %241 : vector<2x128xf32>
    %244 = vector.extract_strided_slice %227 {offsets = [0, 256], sizes = [2, 128], strides = [1, 1]} : vector<2x512xf32> to vector<2x128xf32>
    %245 = math.tanh %244 : vector<2x128xf32>
    %246 = vector.extract_strided_slice %227 {offsets = [0, 384], sizes = [2, 128], strides = [1, 1]} : vector<2x512xf32> to vector<2x128xf32>
    %cst_95 = arith.constant 5.000000e-01 : f32
    %247 = vector.broadcast %cst_95 : f32 to vector<2x128xf32>
    %248 = arith.mulf %247, %246 : vector<2x128xf32>
    %249 = math.tanh %248 : vector<2x128xf32>
    %cst_96 = arith.constant 1.000000e+00 : f32
    %250 = vector.broadcast %cst_96 : f32 to vector<2x128xf32>
    %251 = arith.addf %249, %250 : vector<2x128xf32>
    %cst_97 = arith.constant 5.000000e-01 : f32
    %252 = vector.broadcast %cst_97 : f32 to vector<2x128xf32>
    %253 = arith.mulf %252, %251 : vector<2x128xf32>
    %254 = arith.mulf %243, %213 : vector<2x128xf32>
    %255 = arith.mulf %235, %245 : vector<2x128xf32>
    %256 = arith.addf %254, %255 : vector<2x128xf32>
    %257 = math.tanh %256 : vector<2x128xf32>
    %258 = arith.mulf %253, %257 : vector<2x128xf32>
    %259 = arith.index_cast %c5_i32 : i32 to index
    %c0_98 = arith.constant 0 : index
    %c0_99 = arith.constant 0 : index
    %260 = vector.load %arg4[%259, %c0_98, %c0_99] : memref<8x2x128xf32, #tpu.memory_space<vmem>>, vector<1x2x128xf32>
    %261 = vector.shape_cast %260 : vector<1x2x128xf32> to vector<2x128xf32>
    %262 = vector.shape_cast %258 : vector<2x128xf32> to vector<1x2x128xf32>
    tpu.vector_store %arg4[%259, %c0_98, %c0_99], %262 {strides = array<i32>} : memref<8x2x128xf32, #tpu.memory_space<vmem>>, vector<1x2x128xf32>,
    %c6_i32 = arith.constant 6 : i32
    %263 = arith.index_cast %c6_i32 : i32 to index
    %c0_100 = arith.constant 0 : index
    %c0_101 = arith.constant 0 : index
    %264 = vector.load %arg2[%263, %c0_100, %c0_101] : memref<8x2x512xbf16, #tpu.memory_space<vmem>>, vector<1x2x512xbf16>
    %265 = vector.shape_cast %264 : vector<1x2x512xbf16> to vector<2x512xbf16>
    %266 = arith.extf %265 : vector<2x512xbf16> to vector<2x512xf32>
    %267 = arith.truncf %258 : vector<2x128xf32> to vector<2x128xbf16>
    %c0_102 = arith.constant 0 : index
    %c0_103 = arith.constant 0 : index
    %268 = vector.load %arg3[%c0_102, %c0_103] : memref<128x512xbf16, #tpu.memory_space<vmem>>, vector<128x512xbf16>
    %cst_104 = arith.constant dense<0.000000e+00> : vector<2x512xf32>
    %269 = tpu.matmul %267, %268, %cst_104 {dimension_numbers = #tpu.dot_dimension_numbers<[1], [0], [0], [1], [0, 0, 1, 1], [], []>} : vector<2x128xbf16>, vector<128x512xbf16>, vector<2x512xf32> -> vector<2x512xf32>
    %270 = arith.addf %266, %269 : vector<2x512xf32>
    %271 = vector.extract_strided_slice %270 {offsets = [0, 0], sizes = [2, 128], strides = [1, 1]} : vector<2x512xf32> to vector<2x128xf32>
    %cst_105 = arith.constant 5.000000e-01 : f32
    %272 = vector.broadcast %cst_105 : f32 to vector<2x128xf32>
    %273 = arith.mulf %272, %271 : vector<2x128xf32>
    %274 = math.tanh %273 : vector<2x128xf32>
    %cst_106 = arith.constant 1.000000e+00 : f32
    %275 = vector.broadcast %cst_106 : f32 to vector<2x128xf32>
    %276 = arith.addf %274, %275 : vector<2x128xf32>
    %cst_107 = arith.constant 5.000000e-01 : f32
    %277 = vector.broadcast %cst_107 : f32 to vector<2x128xf32>
    %278 = arith.mulf %277, %276 : vector<2x128xf32>
    %279 = vector.extract_strided_slice %270 {offsets = [0, 128], sizes = [2, 128], strides = [1, 1]} : vector<2x512xf32> to vector<2x128xf32>
    %cst_108 = arith.constant 5.000000e-01 : f32
    %280 = vector.broadcast %cst_108 : f32 to vector<2x128xf32>
    %281 = arith.mulf %280, %279 : vector<2x128xf32>
    %282 = math.tanh %281 : vector<2x128xf32>
    %cst_109 = arith.constant 1.000000e+00 : f32
    %283 = vector.broadcast %cst_109 : f32 to vector<2x128xf32>
    %284 = arith.addf %282, %283 : vector<2x128xf32>
    %cst_110 = arith.constant 5.000000e-01 : f32
    %285 = vector.broadcast %cst_110 : f32 to vector<2x128xf32>
    %286 = arith.mulf %285, %284 : vector<2x128xf32>
    %287 = vector.extract_strided_slice %270 {offsets = [0, 256], sizes = [2, 128], strides = [1, 1]} : vector<2x512xf32> to vector<2x128xf32>
    %288 = math.tanh %287 : vector<2x128xf32>
    %289 = vector.extract_strided_slice %270 {offsets = [0, 384], sizes = [2, 128], strides = [1, 1]} : vector<2x512xf32> to vector<2x128xf32>
    %cst_111 = arith.constant 5.000000e-01 : f32
    %290 = vector.broadcast %cst_111 : f32 to vector<2x128xf32>
    %291 = arith.mulf %290, %289 : vector<2x128xf32>
    %292 = math.tanh %291 : vector<2x128xf32>
    %cst_112 = arith.constant 1.000000e+00 : f32
    %293 = vector.broadcast %cst_112 : f32 to vector<2x128xf32>
    %294 = arith.addf %292, %293 : vector<2x128xf32>
    %cst_113 = arith.constant 5.000000e-01 : f32
    %295 = vector.broadcast %cst_113 : f32 to vector<2x128xf32>
    %296 = arith.mulf %295, %294 : vector<2x128xf32>
    %297 = arith.mulf %286, %256 : vector<2x128xf32>
    %298 = arith.mulf %278, %288 : vector<2x128xf32>
    %299 = arith.addf %297, %298 : vector<2x128xf32>
    %300 = math.tanh %299 : vector<2x128xf32>
    %301 = arith.mulf %296, %300 : vector<2x128xf32>
    %302 = arith.index_cast %c6_i32 : i32 to index
    %c0_114 = arith.constant 0 : index
    %c0_115 = arith.constant 0 : index
    %303 = vector.load %arg4[%302, %c0_114, %c0_115] : memref<8x2x128xf32, #tpu.memory_space<vmem>>, vector<1x2x128xf32>
    %304 = vector.shape_cast %303 : vector<1x2x128xf32> to vector<2x128xf32>
    %305 = vector.shape_cast %301 : vector<2x128xf32> to vector<1x2x128xf32>
    tpu.vector_store %arg4[%302, %c0_114, %c0_115], %305 {strides = array<i32>} : memref<8x2x128xf32, #tpu.memory_space<vmem>>, vector<1x2x128xf32>,
    %c7_i32 = arith.constant 7 : i32
    %306 = arith.index_cast %c7_i32 : i32 to index
    %c0_116 = arith.constant 0 : index
    %c0_117 = arith.constant 0 : index
    %307 = vector.load %arg2[%306, %c0_116, %c0_117] : memref<8x2x512xbf16, #tpu.memory_space<vmem>>, vector<1x2x512xbf16>
    %308 = vector.shape_cast %307 : vector<1x2x512xbf16> to vector<2x512xbf16>
    %309 = arith.extf %308 : vector<2x512xbf16> to vector<2x512xf32>
    %310 = arith.truncf %301 : vector<2x128xf32> to vector<2x128xbf16>
    %c0_118 = arith.constant 0 : index
    %c0_119 = arith.constant 0 : index
    %311 = vector.load %arg3[%c0_118, %c0_119] : memref<128x512xbf16, #tpu.memory_space<vmem>>, vector<128x512xbf16>
    %cst_120 = arith.constant dense<0.000000e+00> : vector<2x512xf32>
    %312 = tpu.matmul %310, %311, %cst_120 {dimension_numbers = #tpu.dot_dimension_numbers<[1], [0], [0], [1], [0, 0, 1, 1], [], []>} : vector<2x128xbf16>, vector<128x512xbf16>, vector<2x512xf32> -> vector<2x512xf32>
    %313 = arith.addf %309, %312 : vector<2x512xf32>
    %314 = vector.extract_strided_slice %313 {offsets = [0, 0], sizes = [2, 128], strides = [1, 1]} : vector<2x512xf32> to vector<2x128xf32>
    %cst_121 = arith.constant 5.000000e-01 : f32
    %315 = vector.broadcast %cst_121 : f32 to vector<2x128xf32>
    %316 = arith.mulf %315, %314 : vector<2x128xf32>
    %317 = math.tanh %316 : vector<2x128xf32>
    %cst_122 = arith.constant 1.000000e+00 : f32
    %318 = vector.broadcast %cst_122 : f32 to vector<2x128xf32>
    %319 = arith.addf %317, %318 : vector<2x128xf32>
    %cst_123 = arith.constant 5.000000e-01 : f32
    %320 = vector.broadcast %cst_123 : f32 to vector<2x128xf32>
    %321 = arith.mulf %320, %319 : vector<2x128xf32>
    %322 = vector.extract_strided_slice %313 {offsets = [0, 128], sizes = [2, 128], strides = [1, 1]} : vector<2x512xf32> to vector<2x128xf32>
    %cst_124 = arith.constant 5.000000e-01 : f32
    %323 = vector.broadcast %cst_124 : f32 to vector<2x128xf32>
    %324 = arith.mulf %323, %322 : vector<2x128xf32>
    %325 = math.tanh %324 : vector<2x128xf32>
    %cst_125 = arith.constant 1.000000e+00 : f32
    %326 = vector.broadcast %cst_125 : f32 to vector<2x128xf32>
    %327 = arith.addf %325, %326 : vector<2x128xf32>
    %cst_126 = arith.constant 5.000000e-01 : f32
    %328 = vector.broadcast %cst_126 : f32 to vector<2x128xf32>
    %329 = arith.mulf %328, %327 : vector<2x128xf32>
    %330 = vector.extract_strided_slice %313 {offsets = [0, 256], sizes = [2, 128], strides = [1, 1]} : vector<2x512xf32> to vector<2x128xf32>
    %331 = math.tanh %330 : vector<2x128xf32>
    %332 = vector.extract_strided_slice %313 {offsets = [0, 384], sizes = [2, 128], strides = [1, 1]} : vector<2x512xf32> to vector<2x128xf32>
    %cst_127 = arith.constant 5.000000e-01 : f32
    %333 = vector.broadcast %cst_127 : f32 to vector<2x128xf32>
    %334 = arith.mulf %333, %332 : vector<2x128xf32>
    %335 = math.tanh %334 : vector<2x128xf32>
    %cst_128 = arith.constant 1.000000e+00 : f32
    %336 = vector.broadcast %cst_128 : f32 to vector<2x128xf32>
    %337 = arith.addf %335, %336 : vector<2x128xf32>
    %cst_129 = arith.constant 5.000000e-01 : f32
    %338 = vector.broadcast %cst_129 : f32 to vector<2x128xf32>
    %339 = arith.mulf %338, %337 : vector<2x128xf32>
    %340 = arith.mulf %329, %299 : vector<2x128xf32>
    %341 = arith.mulf %321, %331 : vector<2x128xf32>
    %342 = arith.addf %340, %341 : vector<2x128xf32>
    %343 = math.tanh %342 : vector<2x128xf32>
    %344 = arith.mulf %339, %343 : vector<2x128xf32>
    %345 = arith.index_cast %c7_i32 : i32 to index
    %c0_130 = arith.constant 0 : index
    %c0_131 = arith.constant 0 : index
    %346 = vector.load %arg4[%345, %c0_130, %c0_131] : memref<8x2x128xf32, #tpu.memory_space<vmem>>, vector<1x2x128xf32>
    %347 = vector.shape_cast %346 : vector<1x2x128xf32> to vector<2x128xf32>
    %348 = vector.shape_cast %344 : vector<2x128xf32> to vector<1x2x128xf32>
    tpu.vector_store %arg4[%345, %c0_130, %c0_131], %348 {strides = array<i32>} : memref<8x2x128xf32, #tpu.memory_space<vmem>>, vector<1x2x128xf32>,
    %c8_i32 = arith.constant 8 : i32
    %c0_132 = arith.constant 0 : index
    %c0_133 = arith.constant 0 : index
    %349 = vector.load %arg7[%c0_132, %c0_133] : memref<2x128xf32, #tpu.memory_space<vmem>>, vector<2x128xf32>
    tpu.vector_store %arg7[%c0_132, %c0_133], %344 {strides = array<i32>} : memref<2x128xf32, #tpu.memory_space<vmem>>, vector<2x128xf32>,
    %c0_134 = arith.constant 0 : index
    %c0_135 = arith.constant 0 : index
    %350 = vector.load %arg8[%c0_134, %c0_135] : memref<2x128xf32, #tpu.memory_space<vmem>>, vector<2x128xf32>
    tpu.vector_store %arg8[%c0_134, %c0_135], %342 {strides = array<i32>} : memref<2x128xf32, #tpu.memory_space<vmem>>, vector<2x128xf32>,
    %c0_i32_136 = arith.constant 0 : i32
    %351 = arith.cmpi eq, %arg1, %c0_i32_136 : i32
    %352 = arith.extui %351 : i1 to i32
    %c0_i32_137 = arith.constant 0 : i32
    %353 = arith.cmpi ne, %352, %c0_i32_137 : i32
    scf.if %353 {
      %c0_138 = arith.constant 0 : index
      %c0_139 = arith.constant 0 : index
      %354 = vector.load %arg5[%c0_138, %c0_139] : memref<2x128xf32, #tpu.memory_space<vmem>>, vector<2x128xf32>
      tpu.vector_store %arg5[%c0_138, %c0_139], %344 {strides = array<i32>} : memref<2x128xf32, #tpu.memory_space<vmem>>, vector<2x128xf32>,
      %c0_140 = arith.constant 0 : index
      %c0_141 = arith.constant 0 : index
      %355 = vector.load %arg6[%c0_140, %c0_141] : memref<2x128xf32, #tpu.memory_space<vmem>>, vector<2x128xf32>
      tpu.vector_store %arg6[%c0_140, %c0_141], %342 {strides = array<i32>} : memref<2x128xf32, #tpu.memory_space<vmem>>, vector<2x128xf32>,
    } else {
    }
    return
  }
  func.func @transform_0(%arg0: i32, %arg1: i32) -> (i32, i32, i32) {
    %c0_i32 = arith.constant 0 : i32
    %c0_i32_0 = arith.constant 0 : i32
    return %arg1, %arg0, %c0_i32 : i32, i32, i32
  }
  func.func @transform_1(%arg0: i32, %arg1: i32) -> (i32, i32) {
    %c0_i32 = arith.constant 0 : i32
    %c0_i32_0 = arith.constant 0 : i32
    %c0_i32_1 = arith.constant 0 : i32
    return %c0_i32, %c0_i32_0 : i32, i32
  }
  func.func @transform_2(%arg0: i32, %arg1: i32) -> (i32, i32, i32) {
    %c0_i32 = arith.constant 0 : i32
    %c0_i32_0 = arith.constant 0 : i32
    return %arg1, %arg0, %c0_i32 : i32, i32, i32
  }
  func.func @transform_3(%arg0: i32, %arg1: i32) -> (i32, i32) {
    %c0_i32 = arith.constant 0 : i32
    %c0_i32_0 = arith.constant 0 : i32
    return %arg0, %c0_i32 : i32, i32
  }
  func.func @transform_4(%arg0: i32, %arg1: i32) -> (i32, i32) {
    %c0_i32 = arith.constant 0 : i32
    %c0_i32_0 = arith.constant 0 : i32
    return %arg0, %c0_i32 : i32, i32
  }
}

module attributes {stable_mosaic.version = 11 : i64} {
  func.func @_lstm_chunk_kernel(%arg0: i32, %arg1: i32, %arg2: memref<8x2x512xbf16, #tpu.memory_space<vmem>>, %arg3: memref<128x512xbf16, #tpu.memory_space<vmem>>, %arg4: memref<8x2x128xf32, #tpu.memory_space<vmem>>, %arg5: memref<2x128xf32, #tpu.memory_space<vmem>>, %arg6: memref<2x128xf32, #tpu.memory_space<vmem>>, %arg7: memref<2x128xf32, #tpu.memory_space<vmem>>, %arg8: memref<2x128xf32, #tpu.memory_space<vmem>>) attributes {dimension_semantics = [#tpu.dimension_semantics<parallel>, #tpu.dimension_semantics<arbitrary>], iteration_bounds = array<i64: 1, 1>, scalar_prefetch = 0 : i64, scratch_operands = 2 : i64, tpu.core_type = #tpu.core_type<tc>, window_params = [{transform_indices = @transform_0, window_bounds = array<i64: 8, 2, 512>}, {pipeline_mode = #tpu.pipeline_mode<synchronous>, transform_indices = @transform_1, window_bounds = array<i64: 128, 512>}, {transform_indices = @transform_2, window_bounds = array<i64: 8, 2, 128>}, {transform_indices = @transform_3, window_bounds = array<i64: 2, 128>}, {transform_indices = @transform_4, window_bounds = array<i64: 2, 128>}]} {
    %c0_i32 = arith.constant 0 : i32
    %0 = arith.cmpi eq, %arg1, %c0_i32 : i32
    %1 = arith.extui %0 : i1 to i32
    %c0_i32_0 = arith.constant 0 : i32
    %2 = arith.cmpi ne, %1, %c0_i32_0 : i32
    scf.if %2 {
      %cst_138 = arith.constant 0.000000e+00 : f32
      %354 = vector.broadcast %cst_138 : f32 to vector<2x128xf32>
      %c0_139 = arith.constant 0 : index
      %c0_140 = arith.constant 0 : index
      %355 = vector.load %arg7[%c0_139, %c0_140] : memref<2x128xf32, #tpu.memory_space<vmem>>, vector<2x128xf32>
      tpu.vector_store %arg7[%c0_139, %c0_140], %354 {strides = array<i32>} : memref<2x128xf32, #tpu.memory_space<vmem>>, vector<2x128xf32>,
      %cst_141 = arith.constant 0.000000e+00 : f32
      %356 = vector.broadcast %cst_141 : f32 to vector<2x128xf32>
      %c0_142 = arith.constant 0 : index
      %c0_143 = arith.constant 0 : index
      %357 = vector.load %arg8[%c0_142, %c0_143] : memref<2x128xf32, #tpu.memory_space<vmem>>, vector<2x128xf32>
      tpu.vector_store %arg8[%c0_142, %c0_143], %356 {strides = array<i32>} : memref<2x128xf32, #tpu.memory_space<vmem>>, vector<2x128xf32>,
    } else {
    }
    %c0 = arith.constant 0 : index
    %c0_1 = arith.constant 0 : index
    %3 = vector.load %arg7[%c0, %c0_1] : memref<2x128xf32, #tpu.memory_space<vmem>>, vector<2x128xf32>
    %c0_2 = arith.constant 0 : index
    %c0_3 = arith.constant 0 : index
    %4 = vector.load %arg8[%c0_2, %c0_3] : memref<2x128xf32, #tpu.memory_space<vmem>>, vector<2x128xf32>
    %c0_i32_4 = arith.constant 0 : i32
    %5 = arith.index_cast %c0_i32_4 : i32 to index
    %c0_5 = arith.constant 0 : index
    %c0_6 = arith.constant 0 : index
    %6 = vector.load %arg2[%5, %c0_5, %c0_6] : memref<8x2x512xbf16, #tpu.memory_space<vmem>>, vector<1x2x512xbf16>
    %7 = vector.shape_cast %6 : vector<1x2x512xbf16> to vector<2x512xbf16>
    %8 = arith.extf %7 : vector<2x512xbf16> to vector<2x512xf32>
    %9 = arith.truncf %3 : vector<2x128xf32> to vector<2x128xbf16>
    %c0_7 = arith.constant 0 : index
    %c0_8 = arith.constant 0 : index
    %10 = vector.load %arg3[%c0_7, %c0_8] : memref<128x512xbf16, #tpu.memory_space<vmem>>, vector<128x512xbf16>
    %cst = arith.constant dense<0.000000e+00> : vector<2x512xf32>
    %11 = tpu.matmul %9, %10, %cst {dimension_numbers = #tpu.dot_dimension_numbers<[1], [0], [0], [1], [0, 0, 1, 1], [], []>} : vector<2x128xbf16>, vector<128x512xbf16>, vector<2x512xf32> -> vector<2x512xf32>
    %12 = arith.addf %8, %11 : vector<2x512xf32>
    %13 = vector.extract_strided_slice %12 {offsets = [0, 0], sizes = [2, 128], strides = [1, 1]} : vector<2x512xf32> to vector<2x128xf32>
    %cst_9 = arith.constant 5.000000e-01 : f32
    %14 = vector.broadcast %cst_9 : f32 to vector<2x128xf32>
    %15 = arith.mulf %14, %13 : vector<2x128xf32>
    %16 = math.tanh %15 : vector<2x128xf32>
    %cst_10 = arith.constant 1.000000e+00 : f32
    %17 = vector.broadcast %cst_10 : f32 to vector<2x128xf32>
    %18 = arith.addf %16, %17 : vector<2x128xf32>
    %cst_11 = arith.constant 5.000000e-01 : f32
    %19 = vector.broadcast %cst_11 : f32 to vector<2x128xf32>
    %20 = arith.mulf %19, %18 : vector<2x128xf32>
    %21 = vector.extract_strided_slice %12 {offsets = [0, 128], sizes = [2, 128], strides = [1, 1]} : vector<2x512xf32> to vector<2x128xf32>
    %cst_12 = arith.constant 5.000000e-01 : f32
    %22 = vector.broadcast %cst_12 : f32 to vector<2x128xf32>
    %23 = arith.mulf %22, %21 : vector<2x128xf32>
    %24 = math.tanh %23 : vector<2x128xf32>
    %cst_13 = arith.constant 1.000000e+00 : f32
    %25 = vector.broadcast %cst_13 : f32 to vector<2x128xf32>
    %26 = arith.addf %24, %25 : vector<2x128xf32>
    %cst_14 = arith.constant 5.000000e-01 : f32
    %27 = vector.broadcast %cst_14 : f32 to vector<2x128xf32>
    %28 = arith.mulf %27, %26 : vector<2x128xf32>
    %29 = vector.extract_strided_slice %12 {offsets = [0, 256], sizes = [2, 128], strides = [1, 1]} : vector<2x512xf32> to vector<2x128xf32>
    %30 = math.tanh %29 : vector<2x128xf32>
    %31 = vector.extract_strided_slice %12 {offsets = [0, 384], sizes = [2, 128], strides = [1, 1]} : vector<2x512xf32> to vector<2x128xf32>
    %cst_15 = arith.constant 5.000000e-01 : f32
    %32 = vector.broadcast %cst_15 : f32 to vector<2x128xf32>
    %33 = arith.mulf %32, %31 : vector<2x128xf32>
    %34 = math.tanh %33 : vector<2x128xf32>
    %cst_16 = arith.constant 1.000000e+00 : f32
    %35 = vector.broadcast %cst_16 : f32 to vector<2x128xf32>
    %36 = arith.addf %34, %35 : vector<2x128xf32>
    %cst_17 = arith.constant 5.000000e-01 : f32
    %37 = vector.broadcast %cst_17 : f32 to vector<2x128xf32>
    %38 = arith.mulf %37, %36 : vector<2x128xf32>
    %39 = arith.mulf %28, %4 : vector<2x128xf32>
    %40 = arith.mulf %20, %30 : vector<2x128xf32>
    %41 = arith.addf %39, %40 : vector<2x128xf32>
    %42 = math.tanh %41 : vector<2x128xf32>
    %43 = arith.mulf %38, %42 : vector<2x128xf32>
    %44 = arith.index_cast %c0_i32_4 : i32 to index
    %c0_18 = arith.constant 0 : index
    %c0_19 = arith.constant 0 : index
    %45 = vector.load %arg4[%44, %c0_18, %c0_19] : memref<8x2x128xf32, #tpu.memory_space<vmem>>, vector<1x2x128xf32>
    %46 = vector.shape_cast %45 : vector<1x2x128xf32> to vector<2x128xf32>
    %47 = vector.shape_cast %43 : vector<2x128xf32> to vector<1x2x128xf32>
    tpu.vector_store %arg4[%44, %c0_18, %c0_19], %47 {strides = array<i32>} : memref<8x2x128xf32, #tpu.memory_space<vmem>>, vector<1x2x128xf32>,
    %c1_i32 = arith.constant 1 : i32
    %48 = arith.index_cast %c1_i32 : i32 to index
    %c0_20 = arith.constant 0 : index
    %c0_21 = arith.constant 0 : index
    %49 = vector.load %arg2[%48, %c0_20, %c0_21] : memref<8x2x512xbf16, #tpu.memory_space<vmem>>, vector<1x2x512xbf16>
    %50 = vector.shape_cast %49 : vector<1x2x512xbf16> to vector<2x512xbf16>
    %51 = arith.extf %50 : vector<2x512xbf16> to vector<2x512xf32>
    %52 = arith.truncf %43 : vector<2x128xf32> to vector<2x128xbf16>
    %c0_22 = arith.constant 0 : index
    %c0_23 = arith.constant 0 : index
    %53 = vector.load %arg3[%c0_22, %c0_23] : memref<128x512xbf16, #tpu.memory_space<vmem>>, vector<128x512xbf16>
    %cst_24 = arith.constant dense<0.000000e+00> : vector<2x512xf32>
    %54 = tpu.matmul %52, %53, %cst_24 {dimension_numbers = #tpu.dot_dimension_numbers<[1], [0], [0], [1], [0, 0, 1, 1], [], []>} : vector<2x128xbf16>, vector<128x512xbf16>, vector<2x512xf32> -> vector<2x512xf32>
    %55 = arith.addf %51, %54 : vector<2x512xf32>
    %56 = vector.extract_strided_slice %55 {offsets = [0, 0], sizes = [2, 128], strides = [1, 1]} : vector<2x512xf32> to vector<2x128xf32>
    %cst_25 = arith.constant 5.000000e-01 : f32
    %57 = vector.broadcast %cst_25 : f32 to vector<2x128xf32>
    %58 = arith.mulf %57, %56 : vector<2x128xf32>
    %59 = math.tanh %58 : vector<2x128xf32>
    %cst_26 = arith.constant 1.000000e+00 : f32
    %60 = vector.broadcast %cst_26 : f32 to vector<2x128xf32>
    %61 = arith.addf %59, %60 : vector<2x128xf32>
    %cst_27 = arith.constant 5.000000e-01 : f32
    %62 = vector.broadcast %cst_27 : f32 to vector<2x128xf32>
    %63 = arith.mulf %62, %61 : vector<2x128xf32>
    %64 = vector.extract_strided_slice %55 {offsets = [0, 128], sizes = [2, 128], strides = [1, 1]} : vector<2x512xf32> to vector<2x128xf32>
    %cst_28 = arith.constant 5.000000e-01 : f32
    %65 = vector.broadcast %cst_28 : f32 to vector<2x128xf32>
    %66 = arith.mulf %65, %64 : vector<2x128xf32>
    %67 = math.tanh %66 : vector<2x128xf32>
    %cst_29 = arith.constant 1.000000e+00 : f32
    %68 = vector.broadcast %cst_29 : f32 to vector<2x128xf32>
    %69 = arith.addf %67, %68 : vector<2x128xf32>
    %cst_30 = arith.constant 5.000000e-01 : f32
    %70 = vector.broadcast %cst_30 : f32 to vector<2x128xf32>
    %71 = arith.mulf %70, %69 : vector<2x128xf32>
    %72 = vector.extract_strided_slice %55 {offsets = [0, 256], sizes = [2, 128], strides = [1, 1]} : vector<2x512xf32> to vector<2x128xf32>
    %73 = math.tanh %72 : vector<2x128xf32>
    %74 = vector.extract_strided_slice %55 {offsets = [0, 384], sizes = [2, 128], strides = [1, 1]} : vector<2x512xf32> to vector<2x128xf32>
    %cst_31 = arith.constant 5.000000e-01 : f32
    %75 = vector.broadcast %cst_31 : f32 to vector<2x128xf32>
    %76 = arith.mulf %75, %74 : vector<2x128xf32>
    %77 = math.tanh %76 : vector<2x128xf32>
    %cst_32 = arith.constant 1.000000e+00 : f32
    %78 = vector.broadcast %cst_32 : f32 to vector<2x128xf32>
    %79 = arith.addf %77, %78 : vector<2x128xf32>
    %cst_33 = arith.constant 5.000000e-01 : f32
    %80 = vector.broadcast %cst_33 : f32 to vector<2x128xf32>
    %81 = arith.mulf %80, %79 : vector<2x128xf32>
    %82 = arith.mulf %71, %41 : vector<2x128xf32>
    %83 = arith.mulf %63, %73 : vector<2x128xf32>
    %84 = arith.addf %82, %83 : vector<2x128xf32>
    %85 = math.tanh %84 : vector<2x128xf32>
    %86 = arith.mulf %81, %85 : vector<2x128xf32>
    %87 = arith.index_cast %c1_i32 : i32 to index
    %c0_34 = arith.constant 0 : index
    %c0_35 = arith.constant 0 : index
    %88 = vector.load %arg4[%87, %c0_34, %c0_35] : memref<8x2x128xf32, #tpu.memory_space<vmem>>, vector<1x2x128xf32>
    %89 = vector.shape_cast %88 : vector<1x2x128xf32> to vector<2x128xf32>
    %90 = vector.shape_cast %86 : vector<2x128xf32> to vector<1x2x128xf32>
    tpu.vector_store %arg4[%87, %c0_34, %c0_35], %90 {strides = array<i32>} : memref<8x2x128xf32, #tpu.memory_space<vmem>>, vector<1x2x128xf32>,
    %c2_i32 = arith.constant 2 : i32
    %91 = arith.index_cast %c2_i32 : i32 to index
    %c0_36 = arith.constant 0 : index
    %c0_37 = arith.constant 0 : index
    %92 = vector.load %arg2[%91, %c0_36, %c0_37] : memref<8x2x512xbf16, #tpu.memory_space<vmem>>, vector<1x2x512xbf16>
    %93 = vector.shape_cast %92 : vector<1x2x512xbf16> to vector<2x512xbf16>
    %94 = arith.extf %93 : vector<2x512xbf16> to vector<2x512xf32>
    %95 = arith.truncf %86 : vector<2x128xf32> to vector<2x128xbf16>
    %c0_38 = arith.constant 0 : index
    %c0_39 = arith.constant 0 : index
    %96 = vector.load %arg3[%c0_38, %c0_39] : memref<128x512xbf16, #tpu.memory_space<vmem>>, vector<128x512xbf16>
    %cst_40 = arith.constant dense<0.000000e+00> : vector<2x512xf32>
    %97 = tpu.matmul %95, %96, %cst_40 {dimension_numbers = #tpu.dot_dimension_numbers<[1], [0], [0], [1], [0, 0, 1, 1], [], []>} : vector<2x128xbf16>, vector<128x512xbf16>, vector<2x512xf32> -> vector<2x512xf32>
    %98 = arith.addf %94, %97 : vector<2x512xf32>
    %99 = vector.extract_strided_slice %98 {offsets = [0, 0], sizes = [2, 128], strides = [1, 1]} : vector<2x512xf32> to vector<2x128xf32>
    %cst_41 = arith.constant 5.000000e-01 : f32
    %100 = vector.broadcast %cst_41 : f32 to vector<2x128xf32>
    %101 = arith.mulf %100, %99 : vector<2x128xf32>
    %102 = math.tanh %101 : vector<2x128xf32>
    %cst_42 = arith.constant 1.000000e+00 : f32
    %103 = vector.broadcast %cst_42 : f32 to vector<2x128xf32>
    %104 = arith.addf %102, %103 : vector<2x128xf32>
    %cst_43 = arith.constant 5.000000e-01 : f32
    %105 = vector.broadcast %cst_43 : f32 to vector<2x128xf32>
    %106 = arith.mulf %105, %104 : vector<2x128xf32>
    %107 = vector.extract_strided_slice %98 {offsets = [0, 128], sizes = [2, 128], strides = [1, 1]} : vector<2x512xf32> to vector<2x128xf32>
    %cst_44 = arith.constant 5.000000e-01 : f32
    %108 = vector.broadcast %cst_44 : f32 to vector<2x128xf32>
    %109 = arith.mulf %108, %107 : vector<2x128xf32>
    %110 = math.tanh %109 : vector<2x128xf32>
    %cst_45 = arith.constant 1.000000e+00 : f32
    %111 = vector.broadcast %cst_45 : f32 to vector<2x128xf32>
    %112 = arith.addf %110, %111 : vector<2x128xf32>
    %cst_46 = arith.constant 5.000000e-01 : f32
    %113 = vector.broadcast %cst_46 : f32 to vector<2x128xf32>
    %114 = arith.mulf %113, %112 : vector<2x128xf32>
    %115 = vector.extract_strided_slice %98 {offsets = [0, 256], sizes = [2, 128], strides = [1, 1]} : vector<2x512xf32> to vector<2x128xf32>
    %116 = math.tanh %115 : vector<2x128xf32>
    %117 = vector.extract_strided_slice %98 {offsets = [0, 384], sizes = [2, 128], strides = [1, 1]} : vector<2x512xf32> to vector<2x128xf32>
    %cst_47 = arith.constant 5.000000e-01 : f32
    %118 = vector.broadcast %cst_47 : f32 to vector<2x128xf32>
    %119 = arith.mulf %118, %117 : vector<2x128xf32>
    %120 = math.tanh %119 : vector<2x128xf32>
    %cst_48 = arith.constant 1.000000e+00 : f32
    %121 = vector.broadcast %cst_48 : f32 to vector<2x128xf32>
    %122 = arith.addf %120, %121 : vector<2x128xf32>
    %cst_49 = arith.constant 5.000000e-01 : f32
    %123 = vector.broadcast %cst_49 : f32 to vector<2x128xf32>
    %124 = arith.mulf %123, %122 : vector<2x128xf32>
    %125 = arith.mulf %114, %84 : vector<2x128xf32>
    %126 = arith.mulf %106, %116 : vector<2x128xf32>
    %127 = arith.addf %125, %126 : vector<2x128xf32>
    %128 = math.tanh %127 : vector<2x128xf32>
    %129 = arith.mulf %124, %128 : vector<2x128xf32>
    %130 = arith.index_cast %c2_i32 : i32 to index
    %c0_50 = arith.constant 0 : index
    %c0_51 = arith.constant 0 : index
    %131 = vector.load %arg4[%130, %c0_50, %c0_51] : memref<8x2x128xf32, #tpu.memory_space<vmem>>, vector<1x2x128xf32>
    %132 = vector.shape_cast %131 : vector<1x2x128xf32> to vector<2x128xf32>
    %133 = vector.shape_cast %129 : vector<2x128xf32> to vector<1x2x128xf32>
    tpu.vector_store %arg4[%130, %c0_50, %c0_51], %133 {strides = array<i32>} : memref<8x2x128xf32, #tpu.memory_space<vmem>>, vector<1x2x128xf32>,
    %c3_i32 = arith.constant 3 : i32
    %134 = arith.index_cast %c3_i32 : i32 to index
    %c0_52 = arith.constant 0 : index
    %c0_53 = arith.constant 0 : index
    %135 = vector.load %arg2[%134, %c0_52, %c0_53] : memref<8x2x512xbf16, #tpu.memory_space<vmem>>, vector<1x2x512xbf16>
    %136 = vector.shape_cast %135 : vector<1x2x512xbf16> to vector<2x512xbf16>
    %137 = arith.extf %136 : vector<2x512xbf16> to vector<2x512xf32>
    %138 = arith.truncf %129 : vector<2x128xf32> to vector<2x128xbf16>
    %c0_54 = arith.constant 0 : index
    %c0_55 = arith.constant 0 : index
    %139 = vector.load %arg3[%c0_54, %c0_55] : memref<128x512xbf16, #tpu.memory_space<vmem>>, vector<128x512xbf16>
    %cst_56 = arith.constant dense<0.000000e+00> : vector<2x512xf32>
    %140 = tpu.matmul %138, %139, %cst_56 {dimension_numbers = #tpu.dot_dimension_numbers<[1], [0], [0], [1], [0, 0, 1, 1], [], []>} : vector<2x128xbf16>, vector<128x512xbf16>, vector<2x512xf32> -> vector<2x512xf32>
    %141 = arith.addf %137, %140 : vector<2x512xf32>
    %142 = vector.extract_strided_slice %141 {offsets = [0, 0], sizes = [2, 128], strides = [1, 1]} : vector<2x512xf32> to vector<2x128xf32>
    %cst_57 = arith.constant 5.000000e-01 : f32
    %143 = vector.broadcast %cst_57 : f32 to vector<2x128xf32>
    %144 = arith.mulf %143, %142 : vector<2x128xf32>
    %145 = math.tanh %144 : vector<2x128xf32>
    %cst_58 = arith.constant 1.000000e+00 : f32
    %146 = vector.broadcast %cst_58 : f32 to vector<2x128xf32>
    %147 = arith.addf %145, %146 : vector<2x128xf32>
    %cst_59 = arith.constant 5.000000e-01 : f32
    %148 = vector.broadcast %cst_59 : f32 to vector<2x128xf32>
    %149 = arith.mulf %148, %147 : vector<2x128xf32>
    %150 = vector.extract_strided_slice %141 {offsets = [0, 128], sizes = [2, 128], strides = [1, 1]} : vector<2x512xf32> to vector<2x128xf32>
    %cst_60 = arith.constant 5.000000e-01 : f32
    %151 = vector.broadcast %cst_60 : f32 to vector<2x128xf32>
    %152 = arith.mulf %151, %150 : vector<2x128xf32>
    %153 = math.tanh %152 : vector<2x128xf32>
    %cst_61 = arith.constant 1.000000e+00 : f32
    %154 = vector.broadcast %cst_61 : f32 to vector<2x128xf32>
    %155 = arith.addf %153, %154 : vector<2x128xf32>
    %cst_62 = arith.constant 5.000000e-01 : f32
    %156 = vector.broadcast %cst_62 : f32 to vector<2x128xf32>
    %157 = arith.mulf %156, %155 : vector<2x128xf32>
    %158 = vector.extract_strided_slice %141 {offsets = [0, 256], sizes = [2, 128], strides = [1, 1]} : vector<2x512xf32> to vector<2x128xf32>
    %159 = math.tanh %158 : vector<2x128xf32>
    %160 = vector.extract_strided_slice %141 {offsets = [0, 384], sizes = [2, 128], strides = [1, 1]} : vector<2x512xf32> to vector<2x128xf32>
    %cst_63 = arith.constant 5.000000e-01 : f32
    %161 = vector.broadcast %cst_63 : f32 to vector<2x128xf32>
    %162 = arith.mulf %161, %160 : vector<2x128xf32>
    %163 = math.tanh %162 : vector<2x128xf32>
    %cst_64 = arith.constant 1.000000e+00 : f32
    %164 = vector.broadcast %cst_64 : f32 to vector<2x128xf32>
    %165 = arith.addf %163, %164 : vector<2x128xf32>
    %cst_65 = arith.constant 5.000000e-01 : f32
    %166 = vector.broadcast %cst_65 : f32 to vector<2x128xf32>
    %167 = arith.mulf %166, %165 : vector<2x128xf32>
    %168 = arith.mulf %157, %127 : vector<2x128xf32>
    %169 = arith.mulf %149, %159 : vector<2x128xf32>
    %170 = arith.addf %168, %169 : vector<2x128xf32>
    %171 = math.tanh %170 : vector<2x128xf32>
    %172 = arith.mulf %167, %171 : vector<2x128xf32>
    %173 = arith.index_cast %c3_i32 : i32 to index
    %c0_66 = arith.constant 0 : index
    %c0_67 = arith.constant 0 : index
    %174 = vector.load %arg4[%173, %c0_66, %c0_67] : memref<8x2x128xf32, #tpu.memory_space<vmem>>, vector<1x2x128xf32>
    %175 = vector.shape_cast %174 : vector<1x2x128xf32> to vector<2x128xf32>
    %176 = vector.shape_cast %172 : vector<2x128xf32> to vector<1x2x128xf32>
    tpu.vector_store %arg4[%173, %c0_66, %c0_67], %176 {strides = array<i32>} : memref<8x2x128xf32, #tpu.memory_space<vmem>>, vector<1x2x128xf32>,
    %c4_i32 = arith.constant 4 : i32
    %177 = arith.index_cast %c4_i32 : i32 to index
    %c0_68 = arith.constant 0 : index
    %c0_69 = arith.constant 0 : index
    %178 = vector.load %arg2[%177, %c0_68, %c0_69] : memref<8x2x512xbf16, #tpu.memory_space<vmem>>, vector<1x2x512xbf16>
    %179 = vector.shape_cast %178 : vector<1x2x512xbf16> to vector<2x512xbf16>
    %180 = arith.extf %179 : vector<2x512xbf16> to vector<2x512xf32>
    %181 = arith.truncf %172 : vector<2x128xf32> to vector<2x128xbf16>
    %c0_70 = arith.constant 0 : index
    %c0_71 = arith.constant 0 : index
    %182 = vector.load %arg3[%c0_70, %c0_71] : memref<128x512xbf16, #tpu.memory_space<vmem>>, vector<128x512xbf16>
    %cst_72 = arith.constant dense<0.000000e+00> : vector<2x512xf32>
    %183 = tpu.matmul %181, %182, %cst_72 {dimension_numbers = #tpu.dot_dimension_numbers<[1], [0], [0], [1], [0, 0, 1, 1], [], []>} : vector<2x128xbf16>, vector<128x512xbf16>, vector<2x512xf32> -> vector<2x512xf32>
    %184 = arith.addf %180, %183 : vector<2x512xf32>
    %185 = vector.extract_strided_slice %184 {offsets = [0, 0], sizes = [2, 128], strides = [1, 1]} : vector<2x512xf32> to vector<2x128xf32>
    %cst_73 = arith.constant 5.000000e-01 : f32
    %186 = vector.broadcast %cst_73 : f32 to vector<2x128xf32>
    %187 = arith.mulf %186, %185 : vector<2x128xf32>
    %188 = math.tanh %187 : vector<2x128xf32>
    %cst_74 = arith.constant 1.000000e+00 : f32
    %189 = vector.broadcast %cst_74 : f32 to vector<2x128xf32>
    %190 = arith.addf %188, %189 : vector<2x128xf32>
    %cst_75 = arith.constant 5.000000e-01 : f32
    %191 = vector.broadcast %cst_75 : f32 to vector<2x128xf32>
    %192 = arith.mulf %191, %190 : vector<2x128xf32>
    %193 = vector.extract_strided_slice %184 {offsets = [0, 128], sizes = [2, 128], strides = [1, 1]} : vector<2x512xf32> to vector<2x128xf32>
    %cst_76 = arith.constant 5.000000e-01 : f32
    %194 = vector.broadcast %cst_76 : f32 to vector<2x128xf32>
    %195 = arith.mulf %194, %193 : vector<2x128xf32>
    %196 = math.tanh %195 : vector<2x128xf32>
    %cst_77 = arith.constant 1.000000e+00 : f32
    %197 = vector.broadcast %cst_77 : f32 to vector<2x128xf32>
    %198 = arith.addf %196, %197 : vector<2x128xf32>
    %cst_78 = arith.constant 5.000000e-01 : f32
    %199 = vector.broadcast %cst_78 : f32 to vector<2x128xf32>
    %200 = arith.mulf %199, %198 : vector<2x128xf32>
    %201 = vector.extract_strided_slice %184 {offsets = [0, 256], sizes = [2, 128], strides = [1, 1]} : vector<2x512xf32> to vector<2x128xf32>
    %202 = math.tanh %201 : vector<2x128xf32>
    %203 = vector.extract_strided_slice %184 {offsets = [0, 384], sizes = [2, 128], strides = [1, 1]} : vector<2x512xf32> to vector<2x128xf32>
    %cst_79 = arith.constant 5.000000e-01 : f32
    %204 = vector.broadcast %cst_79 : f32 to vector<2x128xf32>
    %205 = arith.mulf %204, %203 : vector<2x128xf32>
    %206 = math.tanh %205 : vector<2x128xf32>
    %cst_80 = arith.constant 1.000000e+00 : f32
    %207 = vector.broadcast %cst_80 : f32 to vector<2x128xf32>
    %208 = arith.addf %206, %207 : vector<2x128xf32>
    %cst_81 = arith.constant 5.000000e-01 : f32
    %209 = vector.broadcast %cst_81 : f32 to vector<2x128xf32>
    %210 = arith.mulf %209, %208 : vector<2x128xf32>
    %211 = arith.mulf %200, %170 : vector<2x128xf32>
    %212 = arith.mulf %192, %202 : vector<2x128xf32>
    %213 = arith.addf %211, %212 : vector<2x128xf32>
    %214 = math.tanh %213 : vector<2x128xf32>
    %215 = arith.mulf %210, %214 : vector<2x128xf32>
    %216 = arith.index_cast %c4_i32 : i32 to index
    %c0_82 = arith.constant 0 : index
    %c0_83 = arith.constant 0 : index
    %217 = vector.load %arg4[%216, %c0_82, %c0_83] : memref<8x2x128xf32, #tpu.memory_space<vmem>>, vector<1x2x128xf32>
    %218 = vector.shape_cast %217 : vector<1x2x128xf32> to vector<2x128xf32>
    %219 = vector.shape_cast %215 : vector<2x128xf32> to vector<1x2x128xf32>
    tpu.vector_store %arg4[%216, %c0_82, %c0_83], %219 {strides = array<i32>} : memref<8x2x128xf32, #tpu.memory_space<vmem>>, vector<1x2x128xf32>,
    %c5_i32 = arith.constant 5 : i32
    %220 = arith.index_cast %c5_i32 : i32 to index
    %c0_84 = arith.constant 0 : index
    %c0_85 = arith.constant 0 : index
    %221 = vector.load %arg2[%220, %c0_84, %c0_85] : memref<8x2x512xbf16, #tpu.memory_space<vmem>>, vector<1x2x512xbf16>
    %222 = vector.shape_cast %221 : vector<1x2x512xbf16> to vector<2x512xbf16>
    %223 = arith.extf %222 : vector<2x512xbf16> to vector<2x512xf32>
    %224 = arith.truncf %215 : vector<2x128xf32> to vector<2x128xbf16>
    %c0_86 = arith.constant 0 : index
    %c0_87 = arith.constant 0 : index
    %225 = vector.load %arg3[%c0_86, %c0_87] : memref<128x512xbf16, #tpu.memory_space<vmem>>, vector<128x512xbf16>
    %cst_88 = arith.constant dense<0.000000e+00> : vector<2x512xf32>
    %226 = tpu.matmul %224, %225, %cst_88 {dimension_numbers = #tpu.dot_dimension_numbers<[1], [0], [0], [1], [0, 0, 1, 1], [], []>} : vector<2x128xbf16>, vector<128x512xbf16>, vector<2x512xf32> -> vector<2x512xf32>
    %227 = arith.addf %223, %226 : vector<2x512xf32>
    %228 = vector.extract_strided_slice %227 {offsets = [0, 0], sizes = [2, 128], strides = [1, 1]} : vector<2x512xf32> to vector<2x128xf32>
    %cst_89 = arith.constant 5.000000e-01 : f32
    %229 = vector.broadcast %cst_89 : f32 to vector<2x128xf32>
    %230 = arith.mulf %229, %228 : vector<2x128xf32>
    %231 = math.tanh %230 : vector<2x128xf32>
    %cst_90 = arith.constant 1.000000e+00 : f32
    %232 = vector.broadcast %cst_90 : f32 to vector<2x128xf32>
    %233 = arith.addf %231, %232 : vector<2x128xf32>
    %cst_91 = arith.constant 5.000000e-01 : f32
    %234 = vector.broadcast %cst_91 : f32 to vector<2x128xf32>
    %235 = arith.mulf %234, %233 : vector<2x128xf32>
    %236 = vector.extract_strided_slice %227 {offsets = [0, 128], sizes = [2, 128], strides = [1, 1]} : vector<2x512xf32> to vector<2x128xf32>
    %cst_92 = arith.constant 5.000000e-01 : f32
    %237 = vector.broadcast %cst_92 : f32 to vector<2x128xf32>
    %238 = arith.mulf %237, %236 : vector<2x128xf32>
    %239 = math.tanh %238 : vector<2x128xf32>
    %cst_93 = arith.constant 1.000000e+00 : f32
    %240 = vector.broadcast %cst_93 : f32 to vector<2x128xf32>
    %241 = arith.addf %239, %240 : vector<2x128xf32>
    %cst_94 = arith.constant 5.000000e-01 : f32
    %242 = vector.broadcast %cst_94 : f32 to vector<2x128xf32>
    %243 = arith.mulf %242, %241 : vector<2x128xf32>
    %244 = vector.extract_strided_slice %227 {offsets = [0, 256], sizes = [2, 128], strides = [1, 1]} : vector<2x512xf32> to vector<2x128xf32>
    %245 = math.tanh %244 : vector<2x128xf32>
    %246 = vector.extract_strided_slice %227 {offsets = [0, 384], sizes = [2, 128], strides = [1, 1]} : vector<2x512xf32> to vector<2x128xf32>
    %cst_95 = arith.constant 5.000000e-01 : f32
    %247 = vector.broadcast %cst_95 : f32 to vector<2x128xf32>
    %248 = arith.mulf %247, %246 : vector<2x128xf32>
    %249 = math.tanh %248 : vector<2x128xf32>
    %cst_96 = arith.constant 1.000000e+00 : f32
    %250 = vector.broadcast %cst_96 : f32 to vector<2x128xf32>
    %251 = arith.addf %249, %250 : vector<2x128xf32>
    %cst_97 = arith.constant 5.000000e-01 : f32
    %252 = vector.broadcast %cst_97 : f32 to vector<2x128xf32>
    %253 = arith.mulf %252, %251 : vector<2x128xf32>
    %254 = arith.mulf %243, %213 : vector<2x128xf32>
    %255 = arith.mulf %235, %245 : vector<2x128xf32>
    %256 = arith.addf %254, %255 : vector<2x128xf32>
    %257 = math.tanh %256 : vector<2x128xf32>
    %258 = arith.mulf %253, %257 : vector<2x128xf32>
    %259 = arith.index_cast %c5_i32 : i32 to index
    %c0_98 = arith.constant 0 : index
    %c0_99 = arith.constant 0 : index
    %260 = vector.load %arg4[%259, %c0_98, %c0_99] : memref<8x2x128xf32, #tpu.memory_space<vmem>>, vector<1x2x128xf32>
    %261 = vector.shape_cast %260 : vector<1x2x128xf32> to vector<2x128xf32>
    %262 = vector.shape_cast %258 : vector<2x128xf32> to vector<1x2x128xf32>
    tpu.vector_store %arg4[%259, %c0_98, %c0_99], %262 {strides = array<i32>} : memref<8x2x128xf32, #tpu.memory_space<vmem>>, vector<1x2x128xf32>,
    %c6_i32 = arith.constant 6 : i32
    %263 = arith.index_cast %c6_i32 : i32 to index
    %c0_100 = arith.constant 0 : index
    %c0_101 = arith.constant 0 : index
    %264 = vector.load %arg2[%263, %c0_100, %c0_101] : memref<8x2x512xbf16, #tpu.memory_space<vmem>>, vector<1x2x512xbf16>
    %265 = vector.shape_cast %264 : vector<1x2x512xbf16> to vector<2x512xbf16>
    %266 = arith.extf %265 : vector<2x512xbf16> to vector<2x512xf32>
    %267 = arith.truncf %258 : vector<2x128xf32> to vector<2x128xbf16>
    %c0_102 = arith.constant 0 : index
    %c0_103 = arith.constant 0 : index
    %268 = vector.load %arg3[%c0_102, %c0_103] : memref<128x512xbf16, #tpu.memory_space<vmem>>, vector<128x512xbf16>
    %cst_104 = arith.constant dense<0.000000e+00> : vector<2x512xf32>
    %269 = tpu.matmul %267, %268, %cst_104 {dimension_numbers = #tpu.dot_dimension_numbers<[1], [0], [0], [1], [0, 0, 1, 1], [], []>} : vector<2x128xbf16>, vector<128x512xbf16>, vector<2x512xf32> -> vector<2x512xf32>
    %270 = arith.addf %266, %269 : vector<2x512xf32>
    %271 = vector.extract_strided_slice %270 {offsets = [0, 0], sizes = [2, 128], strides = [1, 1]} : vector<2x512xf32> to vector<2x128xf32>
    %cst_105 = arith.constant 5.000000e-01 : f32
    %272 = vector.broadcast %cst_105 : f32 to vector<2x128xf32>
    %273 = arith.mulf %272, %271 : vector<2x128xf32>
    %274 = math.tanh %273 : vector<2x128xf32>
    %cst_106 = arith.constant 1.000000e+00 : f32
    %275 = vector.broadcast %cst_106 : f32 to vector<2x128xf32>
    %276 = arith.addf %274, %275 : vector<2x128xf32>
    %cst_107 = arith.constant 5.000000e-01 : f32
    %277 = vector.broadcast %cst_107 : f32 to vector<2x128xf32>
    %278 = arith.mulf %277, %276 : vector<2x128xf32>
    %279 = vector.extract_strided_slice %270 {offsets = [0, 128], sizes = [2, 128], strides = [1, 1]} : vector<2x512xf32> to vector<2x128xf32>
    %cst_108 = arith.constant 5.000000e-01 : f32
    %280 = vector.broadcast %cst_108 : f32 to vector<2x128xf32>
    %281 = arith.mulf %280, %279 : vector<2x128xf32>
    %282 = math.tanh %281 : vector<2x128xf32>
    %cst_109 = arith.constant 1.000000e+00 : f32
    %283 = vector.broadcast %cst_109 : f32 to vector<2x128xf32>
    %284 = arith.addf %282, %283 : vector<2x128xf32>
    %cst_110 = arith.constant 5.000000e-01 : f32
    %285 = vector.broadcast %cst_110 : f32 to vector<2x128xf32>
    %286 = arith.mulf %285, %284 : vector<2x128xf32>
    %287 = vector.extract_strided_slice %270 {offsets = [0, 256], sizes = [2, 128], strides = [1, 1]} : vector<2x512xf32> to vector<2x128xf32>
    %288 = math.tanh %287 : vector<2x128xf32>
    %289 = vector.extract_strided_slice %270 {offsets = [0, 384], sizes = [2, 128], strides = [1, 1]} : vector<2x512xf32> to vector<2x128xf32>
    %cst_111 = arith.constant 5.000000e-01 : f32
    %290 = vector.broadcast %cst_111 : f32 to vector<2x128xf32>
    %291 = arith.mulf %290, %289 : vector<2x128xf32>
    %292 = math.tanh %291 : vector<2x128xf32>
    %cst_112 = arith.constant 1.000000e+00 : f32
    %293 = vector.broadcast %cst_112 : f32 to vector<2x128xf32>
    %294 = arith.addf %292, %293 : vector<2x128xf32>
    %cst_113 = arith.constant 5.000000e-01 : f32
    %295 = vector.broadcast %cst_113 : f32 to vector<2x128xf32>
    %296 = arith.mulf %295, %294 : vector<2x128xf32>
    %297 = arith.mulf %286, %256 : vector<2x128xf32>
    %298 = arith.mulf %278, %288 : vector<2x128xf32>
    %299 = arith.addf %297, %298 : vector<2x128xf32>
    %300 = math.tanh %299 : vector<2x128xf32>
    %301 = arith.mulf %296, %300 : vector<2x128xf32>
    %302 = arith.index_cast %c6_i32 : i32 to index
    %c0_114 = arith.constant 0 : index
    %c0_115 = arith.constant 0 : index
    %303 = vector.load %arg4[%302, %c0_114, %c0_115] : memref<8x2x128xf32, #tpu.memory_space<vmem>>, vector<1x2x128xf32>
    %304 = vector.shape_cast %303 : vector<1x2x128xf32> to vector<2x128xf32>
    %305 = vector.shape_cast %301 : vector<2x128xf32> to vector<1x2x128xf32>
    tpu.vector_store %arg4[%302, %c0_114, %c0_115], %305 {strides = array<i32>} : memref<8x2x128xf32, #tpu.memory_space<vmem>>, vector<1x2x128xf32>,
    %c7_i32 = arith.constant 7 : i32
    %306 = arith.index_cast %c7_i32 : i32 to index
    %c0_116 = arith.constant 0 : index
    %c0_117 = arith.constant 0 : index
    %307 = vector.load %arg2[%306, %c0_116, %c0_117] : memref<8x2x512xbf16, #tpu.memory_space<vmem>>, vector<1x2x512xbf16>
    %308 = vector.shape_cast %307 : vector<1x2x512xbf16> to vector<2x512xbf16>
    %309 = arith.extf %308 : vector<2x512xbf16> to vector<2x512xf32>
    %310 = arith.truncf %301 : vector<2x128xf32> to vector<2x128xbf16>
    %c0_118 = arith.constant 0 : index
    %c0_119 = arith.constant 0 : index
    %311 = vector.load %arg3[%c0_118, %c0_119] : memref<128x512xbf16, #tpu.memory_space<vmem>>, vector<128x512xbf16>
    %cst_120 = arith.constant dense<0.000000e+00> : vector<2x512xf32>
    %312 = tpu.matmul %310, %311, %cst_120 {dimension_numbers = #tpu.dot_dimension_numbers<[1], [0], [0], [1], [0, 0, 1, 1], [], []>} : vector<2x128xbf16>, vector<128x512xbf16>, vector<2x512xf32> -> vector<2x512xf32>
    %313 = arith.addf %309, %312 : vector<2x512xf32>
    %314 = vector.extract_strided_slice %313 {offsets = [0, 0], sizes = [2, 128], strides = [1, 1]} : vector<2x512xf32> to vector<2x128xf32>
    %cst_121 = arith.constant 5.000000e-01 : f32
    %315 = vector.broadcast %cst_121 : f32 to vector<2x128xf32>
    %316 = arith.mulf %315, %314 : vector<2x128xf32>
    %317 = math.tanh %316 : vector<2x128xf32>
    %cst_122 = arith.constant 1.000000e+00 : f32
    %318 = vector.broadcast %cst_122 : f32 to vector<2x128xf32>
    %319 = arith.addf %317, %318 : vector<2x128xf32>
    %cst_123 = arith.constant 5.000000e-01 : f32
    %320 = vector.broadcast %cst_123 : f32 to vector<2x128xf32>
    %321 = arith.mulf %320, %319 : vector<2x128xf32>
    %322 = vector.extract_strided_slice %313 {offsets = [0, 128], sizes = [2, 128], strides = [1, 1]} : vector<2x512xf32> to vector<2x128xf32>
    %cst_124 = arith.constant 5.000000e-01 : f32
    %323 = vector.broadcast %cst_124 : f32 to vector<2x128xf32>
    %324 = arith.mulf %323, %322 : vector<2x128xf32>
    %325 = math.tanh %324 : vector<2x128xf32>
    %cst_125 = arith.constant 1.000000e+00 : f32
    %326 = vector.broadcast %cst_125 : f32 to vector<2x128xf32>
    %327 = arith.addf %325, %326 : vector<2x128xf32>
    %cst_126 = arith.constant 5.000000e-01 : f32
    %328 = vector.broadcast %cst_126 : f32 to vector<2x128xf32>
    %329 = arith.mulf %328, %327 : vector<2x128xf32>
    %330 = vector.extract_strided_slice %313 {offsets = [0, 256], sizes = [2, 128], strides = [1, 1]} : vector<2x512xf32> to vector<2x128xf32>
    %331 = math.tanh %330 : vector<2x128xf32>
    %332 = vector.extract_strided_slice %313 {offsets = [0, 384], sizes = [2, 128], strides = [1, 1]} : vector<2x512xf32> to vector<2x128xf32>
    %cst_127 = arith.constant 5.000000e-01 : f32
    %333 = vector.broadcast %cst_127 : f32 to vector<2x128xf32>
    %334 = arith.mulf %333, %332 : vector<2x128xf32>
    %335 = math.tanh %334 : vector<2x128xf32>
    %cst_128 = arith.constant 1.000000e+00 : f32
    %336 = vector.broadcast %cst_128 : f32 to vector<2x128xf32>
    %337 = arith.addf %335, %336 : vector<2x128xf32>
    %cst_129 = arith.constant 5.000000e-01 : f32
    %338 = vector.broadcast %cst_129 : f32 to vector<2x128xf32>
    %339 = arith.mulf %338, %337 : vector<2x128xf32>
    %340 = arith.mulf %329, %299 : vector<2x128xf32>
    %341 = arith.mulf %321, %331 : vector<2x128xf32>
    %342 = arith.addf %340, %341 : vector<2x128xf32>
    %343 = math.tanh %342 : vector<2x128xf32>
    %344 = arith.mulf %339, %343 : vector<2x128xf32>
    %345 = arith.index_cast %c7_i32 : i32 to index
    %c0_130 = arith.constant 0 : index
    %c0_131 = arith.constant 0 : index
    %346 = vector.load %arg4[%345, %c0_130, %c0_131] : memref<8x2x128xf32, #tpu.memory_space<vmem>>, vector<1x2x128xf32>
    %347 = vector.shape_cast %346 : vector<1x2x128xf32> to vector<2x128xf32>
    %348 = vector.shape_cast %344 : vector<2x128xf32> to vector<1x2x128xf32>
    tpu.vector_store %arg4[%345, %c0_130, %c0_131], %348 {strides = array<i32>} : memref<8x2x128xf32, #tpu.memory_space<vmem>>, vector<1x2x128xf32>,
    %c8_i32 = arith.constant 8 : i32
    %c0_132 = arith.constant 0 : index
    %c0_133 = arith.constant 0 : index
    %349 = vector.load %arg7[%c0_132, %c0_133] : memref<2x128xf32, #tpu.memory_space<vmem>>, vector<2x128xf32>
    tpu.vector_store %arg7[%c0_132, %c0_133], %344 {strides = array<i32>} : memref<2x128xf32, #tpu.memory_space<vmem>>, vector<2x128xf32>,
    %c0_134 = arith.constant 0 : index
    %c0_135 = arith.constant 0 : index
    %350 = vector.load %arg8[%c0_134, %c0_135] : memref<2x128xf32, #tpu.memory_space<vmem>>, vector<2x128xf32>
    tpu.vector_store %arg8[%c0_134, %c0_135], %342 {strides = array<i32>} : memref<2x128xf32, #tpu.memory_space<vmem>>, vector<2x128xf32>,
    %c0_i32_136 = arith.constant 0 : i32
    %351 = arith.cmpi eq, %arg1, %c0_i32_136 : i32
    %352 = arith.extui %351 : i1 to i32
    %c0_i32_137 = arith.constant 0 : i32
    %353 = arith.cmpi ne, %352, %c0_i32_137 : i32
    scf.if %353 {
      %c0_138 = arith.constant 0 : index
      %c0_139 = arith.constant 0 : index
      %354 = vector.load %arg5[%c0_138, %c0_139] : memref<2x128xf32, #tpu.memory_space<vmem>>, vector<2x128xf32>
      tpu.vector_store %arg5[%c0_138, %c0_139], %344 {strides = array<i32>} : memref<2x128xf32, #tpu.memory_space<vmem>>, vector<2x128xf32>,
      %c0_140 = arith.constant 0 : index
      %c0_141 = arith.constant 0 : index
      %355 = vector.load %arg6[%c0_140, %c0_141] : memref<2x128xf32, #tpu.memory_space<vmem>>, vector<2x128xf32>
      tpu.vector_store %arg6[%c0_140, %c0_141], %342 {strides = array<i32>} : memref<2x128xf32, #tpu.memory_space<vmem>>, vector<2x128xf32>,
    } else {
    }
    return
  }
  func.func @transform_0(%arg0: i32, %arg1: i32) -> (i32, i32, i32) {
    %c0_i32 = arith.constant 0 : i32
    %c0_i32_0 = arith.constant 0 : i32
    return %arg1, %arg0, %c0_i32 : i32, i32, i32
  }
  func.func @transform_1(%arg0: i32, %arg1: i32) -> (i32, i32) {
    %c0_i32 = arith.constant 0 : i32
    %c0_i32_0 = arith.constant 0 : i32
    %c0_i32_1 = arith.constant 0 : i32
    return %c0_i32, %c0_i32_0 : i32, i32
  }
  func.func @transform_2(%arg0: i32, %arg1: i32) -> (i32, i32, i32) {
    %c0_i32 = arith.constant 0 : i32
    %c0_i32_0 = arith.constant 0 : i32
    return %arg1, %arg0, %c0_i32 : i32, i32, i32
  }
  func.func @transform_3(%arg0: i32, %arg1: i32) -> (i32, i32) {
    %c0_i32 = arith.constant 0 : i32
    %c0_i32_0 = arith.constant 0 : i32
    return %arg0, %c0_i32 : i32, i32
  }
  func.func @transform_4(%arg0: i32, %arg1: i32) -> (i32, i32) {
    %c0_i32 = arith.constant 0 : i32
    %c0_i32_0 = arith.constant 0 : i32
    return %arg0, %c0_i32 : i32, i32
  }
}

</mosaic_0001>

<llo_original>
// kernel: tpu_custom_call.1
$region0: #{tpu_custom_call.1}
  #allocation0 [shape = 'u32[]', space=smem, size = 0x4, offset = 0x4, fixed_abs, tag = 'smem constant byte address 0x4 - core index']
  #allocation1 [shape = 'u32[144,128]{1,0:T(1,128)}', space=vmem, size = 0x12000, scoped, tag = 'internal scratch']
  #allocation2 [shape = 'f32[2,128]{1,0:T(2,128)}', space=vmem, size = 0x400, scoped, tag = 'scratch operand']
  #allocation3 [shape = 'f32[2,128]{1,0:T(2,128)}', space=vmem, size = 0x400, scoped, tag = 'scratch operand']
  %s0 = inlined_call_operand.hbm [shape: bf16[8,2,512], index: 0, kind: input, shape index: {}]
  %s1 = inlined_call_operand.hbm [shape: bf16[128,512], index: 1, kind: input, shape index: {}]
  %s2 = inlined_call_operand.hbm [shape: f32[8,2,128], index: 2, kind: output, shape index: {0}]
  %s3 = inlined_call_operand.hbm [shape: f32[2,128], index: 3, kind: output, shape index: {1}]
  %s4 = inlined_call_operand.hbm [shape: f32[2,128], index: 4, kind: output, shape index: {2}]
  %5 = xla_tuple %s2, %s3, %s4
  %s6 = sld [smem:[#allocation0]]
  $region50: #{tpu_custom_call.1} parent=0
    _
  %s8 = ssub.s32 1, %s6
  %s9 = scalar_select 0, %s8, %s6
  $region1: #{tpu_custom_call.1} parent=0
    #allocation4 [shape = 'u8[16384]{0}', space=vmem, size = 0x4000, scoped, tag = 'input window, operand 0, single buffered']
    #allocation5 [shape = 's32[1]{0}', space=sflag, size = 0x4, scoped, tag = 'scoped memory for tpu_custom_call.1']
    #allocation6 [shape = 's32[1]{0}', space=sflag, size = 0x4, scoped, tag = 'scoped memory for tpu_custom_call.1']
    #allocation7 [shape = 'u8[131072]{0}', space=vmem, size = 0x20000, scoped, tag = 'input window, operand 1, single buffered']
    #allocation8 [shape = 's32[1]{0}', space=sflag, size = 0x4, scoped, tag = 'scoped memory for tpu_custom_call.1']
    #allocation9 [shape = 'u8[8192]{0}', space=vmem, size = 0x2000, scoped, tag = 'output window, operand 0, single buffered']
    #allocation10 [shape = 'u8[1024]{0}', space=vmem, size = 0x400, scoped, tag = 'output window, operand 1, single buffered']
    #allocation11 [shape = 's32[1]{0}', space=sflag, size = 0x4, scoped, tag = 'scoped memory for tpu_custom_call.1']
    #allocation12 [shape = 'u8[1024]{0}', space=vmem, size = 0x400, scoped, tag = 'output window, operand 2, single buffered']
    %10 = vsyncpa [#allocation5], 0
    %11 = vsyncpa [#allocation8], 0
    %12 = vsyncpa [#allocation6], 0
    %13 = vsyncpa [#allocation11], 0
    // Predicated region
    $region2: #{tpu_custom_call.1} parent=1 // pred_check
      _
    $region3: #{tpu_custom_call.1} parent=1 // pred_check_branch
      %15 = sbr.rel (0) target = $region5
    $region4: #{tpu_custom_call.1} parent=1 // pred_region
      %s17 = ssub.s32 512, 512
      %18 = vsyncadd [#allocation5], %s17
      %s19 = sshll.u32 [#allocation4], 4
      %s20 = int_to_ptr.vmem [resolvable:$true] %s19
      %25 = dma.hbm_to_vmem [thread:$0]  %s0, 512, %s20, [#allocation5], 64, 64, 4
    $region5: #{tpu_custom_call.1} parent=1 // pred_fallthru
      _
    // Predicated region
    $region6: #{tpu_custom_call.1} parent=1 // pred_check
      _
    $region7: #{tpu_custom_call.1} parent=1 // pred_check_branch
      %27 = sbr.rel (0) target = $region9
    $region8: #{tpu_custom_call.1} parent=1 // pred_region
      %s29 = ssub.s32 4096, 4096
      %30 = vsyncadd [#allocation8], %s29
      %s31 = sshll.u32 [#allocation7], 4
      %s32 = int_to_ptr.vmem [resolvable:$true] %s31
      %37 = dma.hbm_to_vmem [thread:$0]  %s1, 4096, %s32, [#allocation8], 256, 256, 16
    $region9: #{tpu_custom_call.1} parent=1 // pred_fallthru
      _
    // Predicated region
    $region10: #{tpu_custom_call.1} parent=1 // pred_check
      _
    $region11: #{tpu_custom_call.1} parent=1 // pred_check_branch
      %39 = sbr.rel (0) target = $region13
    $region12: #{tpu_custom_call.1} parent=1 // pred_region
      %40 = dma.done [#allocation5], 512
    $region13: #{tpu_custom_call.1} parent=1 // pred_fallthru
      _
    // Predicated region
    $region14: #{tpu_custom_call.1} parent=1 // pred_check
      _
    $region15: #{tpu_custom_call.1} parent=1 // pred_check_branch
      %42 = sbr.rel (0) target = $region17
    $region16: #{tpu_custom_call.1} parent=1 // pred_region
      %43 = dma.done [#allocation8], 4096
    $region17: #{tpu_custom_call.1} parent=1 // pred_fallthru
      _
    %p45 = scmp.eq.s32.totalorder 0, 0
    // Predicated region
    $region18: #{tpu_custom_call.1} parent=1 // pred_check
      %p46 = pneg %p45
    $region19: #{tpu_custom_call.1} parent=1 // pred_check_branch
      %48 = sbr.rel (%p46) target = $region21
    $region20: #{tpu_custom_call.1} parent=1 // pred_region
      %49 = vst [vmem:[#allocation2] sm:$0x3] 0.0
      %50 = vst [vmem:[#allocation3] sm:$0x3] 0.0
    $region21: #{tpu_custom_call.1} parent=1 // pred_fallthru
      _
    %v51 = vld [vmem:[#allocation2] sm:$0x3]
    %v52 = vld [vmem:[#allocation3] sm:$0x3]
    %v53 = vld [vmem:[#allocation4] sm:$0xf]
    %v54 = vunpack.c.l.bf16 %v53
    %v55 = vpack.c.bf16 %v51, %v51
    %v56 = vld [vmem:[#allocation7] sm:$0xff]
    %v57 = vld [vmem:[#allocation7 + $0x8] sm:$0xff]
    %v58 = vld [vmem:[#allocation7 + $0x10] sm:$0xff]
    %v59 = vld [vmem:[#allocation7 + $0x18] sm:$0xff]
    %v60 = vld [vmem:[#allocation7 + $0x20] sm:$0xff]
    %v61 = vld [vmem:[#allocation7 + $0x28] sm:$0xff]
    %v62 = vld [vmem:[#allocation7 + $0x30] sm:$0xff]
    %v63 = vld [vmem:[#allocation7 + $0x38] sm:$0xff]
    %v64 = vld [vmem:[#allocation7 + $0x40] sm:$0xff]
    %v65 = vld [vmem:[#allocation7 + $0x48] sm:$0xff]
    %v66 = vld [vmem:[#allocation7 + $0x50] sm:$0xff]
    %v67 = vld [vmem:[#allocation7 + $0x58] sm:$0xff]
    %v68 = vld [vmem:[#allocation7 + $0x60] sm:$0xff]
    %v69 = vld [vmem:[#allocation7 + $0x68] sm:$0xff]
    %v70 = vld [vmem:[#allocation7 + $0x70] sm:$0xff]
    %v71 = vld [vmem:[#allocation7 + $0x78] sm:$0xff]
    %v72 = vld [vmem:[#allocation7 + $0x80] sm:$0xff]
    %v73 = vld [vmem:[#allocation7 + $0x88] sm:$0xff]
    %v74 = vld [vmem:[#allocation7 + $0x90] sm:$0xff]
    %v75 = vld [vmem:[#allocation7 + $0x98] sm:$0xff]
    %v76 = vld [vmem:[#allocation7 + $0xa0] sm:$0xff]
    %v77 = vld [vmem:[#allocation7 + $0xa8] sm:$0xff]
    %v78 = vld [vmem:[#allocation7 + $0xb0] sm:$0xff]
    %v79 = vld [vmem:[#allocation7 + $0xb8] sm:$0xff]
    %v80 = vld [vmem:[#allocation7 + $0xc0] sm:$0xff]
    %v81 = vld [vmem:[#allocation7 + $0xc8] sm:$0xff]
    %v82 = vld [vmem:[#allocation7 + $0xd0] sm:$0xff]
    %v83 = vld [vmem:[#allocation7 + $0xd8] sm:$0xff]
    %v84 = vld [vmem:[#allocation7 + $0xe0] sm:$0xff]
    %v85 = vld [vmem:[#allocation7 + $0xe8] sm:$0xff]
    %v86 = vld [vmem:[#allocation7 + $0xf0] sm:$0xff]
    %v87 = vld [vmem:[#allocation7 + $0xf8] sm:$0xff]
    %v120 = vunpack.c.l.b16 %v56
    %v121 = vunpack.c.h.b16 %v56
    %v122 = vunpack.c.l.b16 %v57
    %v123 = vunpack.c.h.b16 %v57
    %v124 = vunpack.c.l.b16 %v58
    %v125 = vunpack.c.h.b16 %v58
    %v126 = vunpack.c.l.b16 %v59
    %v127 = vunpack.c.h.b16 %v59
    %v128 = vunpack.c.l.b16 %v60
    %v129 = vunpack.c.h.b16 %v60
    %v130 = vunpack.c.l.b16 %v61
    %v131 = vunpack.c.h.b16 %v61
    %v132 = vunpack.c.l.b16 %v62
    %v133 = vunpack.c.h.b16 %v62
    %v134 = vunpack.c.l.b16 %v63
    %v135 = vunpack.c.h.b16 %v63
    %v136 = vunpack.c.l.b16 %v64
    %v137 = vunpack.c.h.b16 %v64
    %v138 = vunpack.c.l.b16 %v65
    %v139 = vunpack.c.h.b16 %v65
    %v140 = vunpack.c.l.b16 %v66
    %v141 = vunpack.c.h.b16 %v66
    %v142 = vunpack.c.l.b16 %v67
    %v143 = vunpack.c.h.b16 %v67
    %v144 = vunpack.c.l.b16 %v68
    %v145 = vunpack.c.h.b16 %v68
    %v146 = vunpack.c.l.b16 %v69
    %v147 = vunpack.c.h.b16 %v69
    %v148 = vunpack.c.l.b16 %v70
    %v149 = vunpack.c.h.b16 %v70
    %v150 = vunpack.c.l.b16 %v71
    %v151 = vunpack.c.h.b16 %v71
    %v152 = vunpack.c.l.b16 %v72
    %v153 = vunpack.c.h.b16 %v72
    %v154 = vunpack.c.l.b16 %v73
    %v155 = vunpack.c.h.b16 %v73
    %v156 = vunpack.c.l.b16 %v74
    %v157 = vunpack.c.h.b16 %v74
    %v158 = vunpack.c.l.b16 %v75
    %v159 = vunpack.c.h.b16 %v75
    %v160 = vunpack.c.l.b16 %v76
    %v161 = vunpack.c.h.b16 %v76
    %v162 = vunpack.c.l.b16 %v77
    %v163 = vunpack.c.h.b16 %v77
    %v164 = vunpack.c.l.b16 %v78
    %v165 = vunpack.c.h.b16 %v78
    %v166 = vunpack.c.l.b16 %v79
    %v167 = vunpack.c.h.b16 %v79
    %v168 = vunpack.c.l.b16 %v80
    %v169 = vunpack.c.h.b16 %v80
    %v170 = vunpack.c.l.b16 %v81
    %v171 = vunpack.c.h.b16 %v81
    %v172 = vunpack.c.l.b16 %v82
    %v173 = vunpack.c.h.b16 %v82
    %v174 = vunpack.c.l.b16 %v83
    %v175 = vunpack.c.h.b16 %v83
    %v176 = vunpack.c.l.b16 %v84
    %v177 = vunpack.c.h.b16 %v84
    %v178 = vunpack.c.l.b16 %v85
    %v179 = vunpack.c.h.b16 %v85
    %v180 = vunpack.c.l.b16 %v86
    %v181 = vunpack.c.h.b16 %v86
    %v182 = vunpack.c.l.b16 %v87
    %v183 = vunpack.c.h.b16 %v87
    %v184 = vpack.c.b16 %v124, %v120
    %v185 = vpack.c.b16 %v125, %v121
    %v186 = vpack.c.b16 %v126, %v122
    %v187 = vpack.c.b16 %v127, %v123
    %v188 = vpack.c.b16 %v132, %v128
    %v189 = vpack.c.b16 %v133, %v129
    %v190 = vpack.c.b16 %v134, %v130
    %v191 = vpack.c.b16 %v135, %v131
    %v192 = vpack.c.b16 %v140, %v136
    %v193 = vpack.c.b16 %v141, %v137
    %v194 = vpack.c.b16 %v142, %v138
    %v195 = vpack.c.b16 %v143, %v139
    %v196 = vpack.c.b16 %v148, %v144
    %v197 = vpack.c.b16 %v149, %v145
    %v198 = vpack.c.b16 %v150, %v146
    %v199 = vpack.c.b16 %v151, %v147
    %v200 = vpack.c.b16 %v156, %v152
    %v201 = vpack.c.b16 %v157, %v153
    %v202 = vpack.c.b16 %v158, %v154
    %v203 = vpack.c.b16 %v159, %v155
    %v204 = vpack.c.b16 %v164, %v160
    %v205 = vpack.c.b16 %v165, %v161
    %v206 = vpack.c.b16 %v166, %v162
    %v207 = vpack.c.b16 %v167, %v163
    %v208 = vpack.c.b16 %v172, %v168
    %v209 = vpack.c.b16 %v173, %v169
    %v210 = vpack.c.b16 %v174, %v170
    %v211 = vpack.c.b16 %v175, %v171
    %v212 = vpack.c.b16 %v180, %v176
    %v213 = vpack.c.b16 %v181, %v177
    %v214 = vpack.c.b16 %v182, %v178
    %v215 = vpack.c.b16 %v183, %v179
    %248 = vmatprep.subr.bf16.mxu0 %v185
    %249 = vmatpush1.bf16.msra.mxu0 %v184
    %250 = vmatprep.subr.bf16.mxu0 %v189
    %251 = vmatpush1.bf16.msra.mxu0 %v188
    %252 = vmatprep.subr.bf16.mxu0 %v193
    %253 = vmatpush1.bf16.msra.mxu0 %v192
    %254 = vmatprep.subr.bf16.mxu0 %v197
    %255 = vmatpush1.bf16.msra.mxu0 %v196
    %256 = vmatprep.subr.bf16.mxu0 %v201
    %257 = vmatpush1.bf16.msra.mxu0 %v200
    %258 = vmatprep.subr.bf16.mxu0 %v205
    %259 = vmatpush1.bf16.msra.mxu0 %v204
    %260 = vmatprep.subr.bf16.mxu0 %v209
    %261 = vmatpush1.bf16.msra.mxu0 %v208
    %262 = vmatprep.subr.bf16.mxu0 %v213
    %263 = vmatpush1.bf16.msra.mxu0 %v212
    %264 = vmatprep.subr.bf16.mxu0 0
    %265 = vmatpush1.bf16.msra.mxu0 0
    %266 = vmatprep.subr.bf16.mxu0 0
    %267 = vmatpush1.bf16.msra.mxu0 0
    %268 = vmatprep.subr.bf16.mxu0 0
    %269 = vmatpush1.bf16.msra.mxu0 0
    %270 = vmatprep.subr.bf16.mxu0 0
    %271 = vmatpush1.bf16.msra.mxu0 0
    %272 = vmatprep.subr.bf16.mxu0 0
    %273 = vmatpush1.bf16.msra.mxu0 0
    %274 = vmatprep.subr.bf16.mxu0 0
    %275 = vmatpush1.bf16.msra.mxu0 0
    %276 = vmatprep.subr.bf16.mxu0 0
    %277 = vmatpush1.bf16.msra.mxu0 0
    %278 = vmatprep.subr.bf16.mxu0 0
    %279 = vmatpush1.bf16.msra.mxu0 0
    %280 = vmatprep.mubr.bf16.mxu0 0
    %281 = vmatmul.mubr.bf16.gmra.mrb[0].mxu0 %v55
    %v282 = vpop.f32.mrb[0].mxu0
    %v283 = vadd.f32 0.0, %v282
    %v284 = vpop.f32.mrb[0].mxu0
    %v285 = vadd.f32 0.0, %v284
    %v286 = vpop.f32.mrb[0].mxu0
    %v287 = vpop.f32.mrb[0].mxu0
    %288 = vdwg.mxu0
    %289 = vmatprep.subr.bf16.mxu0 %v187
    %290 = vmatpush1.bf16.msra.mxu0 %v186
    %291 = vmatprep.subr.bf16.mxu0 %v191
    %292 = vmatpush1.bf16.msra.mxu0 %v190
    %293 = vmatprep.subr.bf16.mxu0 %v195
    %294 = vmatpush1.bf16.msra.mxu0 %v194
    %295 = vmatprep.subr.bf16.mxu0 %v199
    %296 = vmatpush1.bf16.msra.mxu0 %v198
    %297 = vmatprep.subr.bf16.mxu0 %v203
    %298 = vmatpush1.bf16.msra.mxu0 %v202
    %299 = vmatprep.subr.bf16.mxu0 %v207
    %300 = vmatpush1.bf16.msra.mxu0 %v206
    %301 = vmatprep.subr.bf16.mxu0 %v211
    %302 = vmatpush1.bf16.msra.mxu0 %v210
    %303 = vmatprep.subr.bf16.mxu0 %v215
    %304 = vmatpush1.bf16.msra.mxu0 %v214
    %305 = vmatprep.subr.bf16.mxu0 0
    %306 = vmatpush1.bf16.msra.mxu0 0
    %307 = vmatprep.subr.bf16.mxu0 0
    %308 = vmatpush1.bf16.msra.mxu0 0
    %309 = vmatprep.subr.bf16.mxu0 0
    %310 = vmatpush1.bf16.msra.mxu0 0
    %311 = vmatprep.subr.bf16.mxu0 0
    %312 = vmatpush1.bf16.msra.mxu0 0
    %313 = vmatprep.subr.bf16.mxu0 0
    %314 = vmatpush1.bf16.msra.mxu0 0
    %315 = vmatprep.subr.bf16.mxu0 0
    %316 = vmatpush1.bf16.msra.mxu0 0
    %317 = vmatprep.subr.bf16.mxu0 0
    %318 = vmatpush1.bf16.msra.mxu0 0
    %319 = vmatprep.subr.bf16.mxu0 0
    %320 = vmatpush1.bf16.msra.mxu0 0
    %321 = vmatprep.mubr.bf16.mxu0 0
    %322 = vmatmul.mubr.bf16.gmra.mrb[0].mxu0 %v55
    %v323 = vpop.f32.mrb[0].mxu0
    %v324 = vadd.f32 0.0, %v323
    %v325 = vpop.f32.mrb[0].mxu0
    %v326 = vadd.f32 0.0, %v325
    %v327 = vpop.f32.mrb[0].mxu0
    %v328 = vpop.f32.mrb[0].mxu0
    %329 = vdwg.mxu0
    %v334 = vcombine.low %v283, %v285
    %v335 = vcombine.low %v324, %v326
    %v337 = vunpack.c.l.s4 1983009808
    %v338 = vunpack.c.0.s8 %v337
    %v339 = vlaneseq
    %v340 = vshrl.u32 %v339, 7
    %v341 = vsub.s32 %v338, %v340
    %v342 = vrot.slane %v334, %v341
    %v344 = vunpack.c.l.s4 1983009808
    %v345 = vunpack.c.0.s8 %v344
    %v346 = vlaneseq
    %v347 = vshrl.u32 %v346, 7
    %v348 = vsub.s32 %v345, %v347
    %v349 = vrot.slane %v335, %v348
    %v350 = vcombine.low %v342, %v349
    %v352 = vadd.f32 %v54, %v350
    %v353 = vmul.f32 %v352, 0.5
    %v354 = vtanh.pop %v353
    %v355 = vadd.f32 %v354, 1.0
    %v356 = vmul.f32 %v355, 0.5
    %v358 = vrot.slane %v352, 2
    %v360 = vmul.f32 %v358, 0.5
    %v361 = vtanh.pop %v360
    %v362 = vadd.f32 %v361, 1.0
    %v363 = vmul.f32 %v362, 0.5
    %v364 = vrot.slane %v352, 4
    %v366 = vtanh.pop %v364
    %v367 = vrot.slane %v352, 6
    %v369 = vmul.f32 %v367, 0.5
    %v370 = vtanh.pop %v369
    %v371 = vadd.f32 %v370, 1.0
    %v372 = vmul.f32 %v371, 0.5
    %v373 = vmul.f32 %v363, %v52
    %v374 = vmul.f32 %v356, %v366
    %v375 = vadd.f32 %v373, %v374
    %v376 = vtanh.pop %v375
    %v377 = vmul.f32 %v372, %v376
    %378 = vst [vmem:[#allocation9] sm:$0x3] %v377
    %s379 = scalar_lea.vmem [#allocation4], 4
    %v380 = vld [vmem:[%s379] sm:$0xf]
    %v381 = vunpack.c.l.bf16 %v380
    %v382 = vpack.c.bf16 %v377, %v377
    %v383 = vld [vmem:[#allocation7] sm:$0xff]
    %v384 = vld [vmem:[#allocation7 + $0x8] sm:$0xff]
    %v385 = vld [vmem:[#allocation7 + $0x10] sm:$0xff]
    %v386 = vld [vmem:[#allocation7 + $0x18] sm:$0xff]
    %v387 = vld [vmem:[#allocation7 + $0x20] sm:$0xff]
    %v388 = vld [vmem:[#allocation7 + $0x28] sm:$0xff]
    %v389 = vld [vmem:[#allocation7 + $0x30] sm:$0xff]
    %v390 = vld [vmem:[#allocation7 + $0x38] sm:$0xff]
    %v391 = vld [vmem:[#allocation7 + $0x40] sm:$0xff]
    %v392 = vld [vmem:[#allocation7 + $0x48] sm:$0xff]
    %v393 = vld [vmem:[#allocation7 + $0x50] sm:$0xff]
    %v394 = vld [vmem:[#allocation7 + $0x58] sm:$0xff]
    %v395 = vld [vmem:[#allocation7 + $0x60] sm:$0xff]
    %v396 = vld [vmem:[#allocation7 + $0x68] sm:$0xff]
    %v397 = vld [vmem:[#allocation7 + $0x70] sm:$0xff]
    %v398 = vld [vmem:[#allocation7 + $0x78] sm:$0xff]
    %v399 = vld [vmem:[#allocation7 + $0x80] sm:$0xff]
    %v400 = vld [vmem:[#allocation7 + $0x88] sm:$0xff]
    %v401 = vld [vmem:[#allocation7 + $0x90] sm:$0xff]
    %v402 = vld [vmem:[#allocation7 + $0x98] sm:$0xff]
    %v403 = vld [vmem:[#allocation7 + $0xa0] sm:$0xff]
    %v404 = vld [vmem:[#allocation7 + $0xa8] sm:$0xff]
    %v405 = vld [vmem:[#allocation7 + $0xb0] sm:$0xff]
    %v406 = vld [vmem:[#allocation7 + $0xb8] sm:$0xff]
    %v407 = vld [vmem:[#allocation7 + $0xc0] sm:$0xff]
    %v408 = vld [vmem:[#allocation7 + $0xc8] sm:$0xff]
    %v409 = vld [vmem:[#allocation7 + $0xd0] sm:$0xff]
    %v410 = vld [vmem:[#allocation7 + $0xd8] sm:$0xff]
    %v411 = vld [vmem:[#allocation7 + $0xe0] sm:$0xff]
    %v412 = vld [vmem:[#allocation7 + $0xe8] sm:$0xff]
    %v413 = vld [vmem:[#allocation7 + $0xf0] sm:$0xff]
    %v414 = vld [vmem:[#allocation7 + $0xf8] sm:$0xff]
    %v447 = vunpack.c.l.b16 %v383
    %v448 = vunpack.c.h.b16 %v383
    %v449 = vunpack.c.l.b16 %v384
    %v450 = vunpack.c.h.b16 %v384
    %v451 = vunpack.c.l.b16 %v385
    %v452 = vunpack.c.h.b16 %v385
    %v453 = vunpack.c.l.b16 %v386
    %v454 = vunpack.c.h.b16 %v386
    %v455 = vunpack.c.l.b16 %v387
    %v456 = vunpack.c.h.b16 %v387
    %v457 = vunpack.c.l.b16 %v388
    %v458 = vunpack.c.h.b16 %v388
    %v459 = vunpack.c.l.b16 %v389
    %v460 = vunpack.c.h.b16 %v389
    %v461 = vunpack.c.l.b16 %v390
    %v462 = vunpack.c.h.b16 %v390
    %v463 = vunpack.c.l.b16 %v391
    %v464 = vunpack.c.h.b16 %v391
    %v465 = vunpack.c.l.b16 %v392
    %v466 = vunpack.c.h.b16 %v392
    %v467 = vunpack.c.l.b16 %v393
    %v468 = vunpack.c.h.b16 %v393
    %v469 = vunpack.c.l.b16 %v394
    %v470 = vunpack.c.h.b16 %v394
    %v471 = vunpack.c.l.b16 %v395
    %v472 = vunpack.c.h.b16 %v395
    %v473 = vunpack.c.l.b16 %v396
    %v474 = vunpack.c.h.b16 %v396
    %v475 = vunpack.c.l.b16 %v397
    %v476 = vunpack.c.h.b16 %v397
    %v477 = vunpack.c.l.b16 %v398
    %v478 = vunpack.c.h.b16 %v398
    %v479 = vunpack.c.l.b16 %v399
    %v480 = vunpack.c.h.b16 %v399
    %v481 = vunpack.c.l.b16 %v400
    %v482 = vunpack.c.h.b16 %v400
    %v483 = vunpack.c.l.b16 %v401
    %v484 = vunpack.c.h.b16 %v401
    %v485 = vunpack.c.l.b16 %v402
    %v486 = vunpack.c.h.b16 %v402
    %v487 = vunpack.c.l.b16 %v403
    %v488 = vunpack.c.h.b16 %v403
    %v489 = vunpack.c.l.b16 %v404
    %v490 = vunpack.c.h.b16 %v404
    %v491 = vunpack.c.l.b16 %v405
    %v492 = vunpack.c.h.b16 %v405
    %v493 = vunpack.c.l.b16 %v406
    %v494 = vunpack.c.h.b16 %v406
    %v495 = vunpack.c.l.b16 %v407
    %v496 = vunpack.c.h.b16 %v407
    %v497 = vunpack.c.l.b16 %v408
    %v498 = vunpack.c.h.b16 %v408
    %v499 = vunpack.c.l.b16 %v409
    %v500 = vunpack.c.h.b16 %v409
    %v501 = vunpack.c.l.b16 %v410
    %v502 = vunpack.c.h.b16 %v410
    %v503 = vunpack.c.l.b16 %v411
    %v504 = vunpack.c.h.b16 %v411
    %v505 = vunpack.c.l.b16 %v412
    %v506 = vunpack.c.h.b16 %v412
    %v507 = vunpack.c.l.b16 %v413
    %v508 = vunpack.c.h.b16 %v413
    %v509 = vunpack.c.l.b16 %v414
    %v510 = vunpack.c.h.b16 %v414
    %v511 = vpack.c.b16 %v451, %v447
    %v512 = vpack.c.b16 %v452, %v448
    %v513 = vpack.c.b16 %v453, %v449
    %v514 = vpack.c.b16 %v454, %v450
    %v515 = vpack.c.b16 %v459, %v455
    %v516 = vpack.c.b16 %v460, %v456
    %v517 = vpack.c.b16 %v461, %v457
    %v518 = vpack.c.b16 %v462, %v458
    %v519 = vpack.c.b16 %v467, %v463
    %v520 = vpack.c.b16 %v468, %v464
    %v521 = vpack.c.b16 %v469, %v465
    %v522 = vpack.c.b16 %v470, %v466
    %v523 = vpack.c.b16 %v475, %v471
    %v524 = vpack.c.b16 %v476, %v472
    %v525 = vpack.c.b16 %v477, %v473
    %v526 = vpack.c.b16 %v478, %v474
    %v527 = vpack.c.b16 %v483, %v479
    %v528 = vpack.c.b16 %v484, %v480
    %v529 = vpack.c.b16 %v485, %v481
    %v530 = vpack.c.b16 %v486, %v482
    %v531 = vpack.c.b16 %v491, %v487
    %v532 = vpack.c.b16 %v492, %v488
    %v533 = vpack.c.b16 %v493, %v489
    %v534 = vpack.c.b16 %v494, %v490
    %v535 = vpack.c.b16 %v499, %v495
    %v536 = vpack.c.b16 %v500, %v496
    %v537 = vpack.c.b16 %v501, %v497
    %v538 = vpack.c.b16 %v502, %v498
    %v539 = vpack.c.b16 %v507, %v503
    %v540 = vpack.c.b16 %v508, %v504
    %v541 = vpack.c.b16 %v509, %v505
    %v542 = vpack.c.b16 %v510, %v506
    %575 = vmatprep.subr.bf16.mxu0 %v512
    %576 = vmatpush1.bf16.msra.mxu0 %v511
    %577 = vmatprep.subr.bf16.mxu0 %v516
    %578 = vmatpush1.bf16.msra.mxu0 %v515
    %579 = vmatprep.subr.bf16.mxu0 %v520
    %580 = vmatpush1.bf16.msra.mxu0 %v519
    %581 = vmatprep.subr.bf16.mxu0 %v524
    %582 = vmatpush1.bf16.msra.mxu0 %v523
    %583 = vmatprep.subr.bf16.mxu0 %v528
    %584 = vmatpush1.bf16.msra.mxu0 %v527
    %585 = vmatprep.subr.bf16.mxu0 %v532
    %586 = vmatpush1.bf16.msra.mxu0 %v531
    %587 = vmatprep.subr.bf16.mxu0 %v536
    %588 = vmatpush1.bf16.msra.mxu0 %v535
    %589 = vmatprep.subr.bf16.mxu0 %v540
    %590 = vmatpush1.bf16.msra.mxu0 %v539
    %591 = vmatprep.subr.bf16.mxu0 0
    %592 = vmatpush1.bf16.msra.mxu0 0
    %593 = vmatprep.subr.bf16.mxu0 0
    %594 = vmatpush1.bf16.msra.mxu0 0
    %595 = vmatprep.subr.bf16.mxu0 0
    %596 = vmatpush1.bf16.msra.mxu0 0
    %597 = vmatprep.subr.bf16.mxu0 0
    %598 = vmatpush1.bf16.msra.mxu0 0
    %599 = vmatprep.subr.bf16.mxu0 0
    %600 = vmatpush1.bf16.msra.mxu0 0
    %601 = vmatprep.subr.bf16.mxu0 0
    %602 = vmatpush1.bf16.msra.mxu0 0
    %603 = vmatprep.subr.bf16.mxu0 0
    %604 = vmatpush1.bf16.msra.mxu0 0
    %605 = vmatprep.subr.bf16.mxu0 0
    %606 = vmatpush1.bf16.msra.mxu0 0
    %607 = vmatprep.mubr.bf16.mxu0 0
    %608 = vmatmul.mubr.bf16.gmra.mrb[0].mxu0 %v382
    %v609 = vpop.f32.mrb[0].mxu0
    %v610 = vadd.f32 0.0, %v609
    %v611 = vpop.f32.mrb[0].mxu0
    %v612 = vadd.f32 0.0, %v611
    %v613 = vpop.f32.mrb[0].mxu0
    %v614 = vpop.f32.mrb[0].mxu0
    %615 = vdwg.mxu0
    %616 = vmatprep.subr.bf16.mxu0 %v514
    %617 = vmatpush1.bf16.msra.mxu0 %v513
    %618 = vmatprep.subr.bf16.mxu0 %v518
    %619 = vmatpush1.bf16.msra.mxu0 %v517
    %620 = vmatprep.subr.bf16.mxu0 %v522
    %621 = vmatpush1.bf16.msra.mxu0 %v521
    %622 = vmatprep.subr.bf16.mxu0 %v526
    %623 = vmatpush1.bf16.msra.mxu0 %v525
    %624 = vmatprep.subr.bf16.mxu0 %v530
    %625 = vmatpush1.bf16.msra.mxu0 %v529
    %626 = vmatprep.subr.bf16.mxu0 %v534
    %627 = vmatpush1.bf16.msra.mxu0 %v533
    %628 = vmatprep.subr.bf16.mxu0 %v538
    %629 = vmatpush1.bf16.msra.mxu0 %v537
    %630 = vmatprep.subr.bf16.mxu0 %v542
    %631 = vmatpush1.bf16.msra.mxu0 %v541
    %632 = vmatprep.subr.bf16.mxu0 0
    %633 = vmatpush1.bf16.msra.mxu0 0
    %634 = vmatprep.subr.bf16.mxu0 0
    %635 = vmatpush1.bf16.msra.mxu0 0
    %636 = vmatprep.subr.bf16.mxu0 0
    %637 = vmatpush1.bf16.msra.mxu0 0
    %638 = vmatprep.subr.bf16.mxu0 0
    %639 = vmatpush1.bf16.msra.mxu0 0
    %640 = vmatprep.subr.bf16.mxu0 0
    %641 = vmatpush1.bf16.msra.mxu0 0
    %642 = vmatprep.subr.bf16.mxu0 0
    %643 = vmatpush1.bf16.msra.mxu0 0
    %644 = vmatprep.subr.bf16.mxu0 0
    %645 = vmatpush1.bf16.msra.mxu0 0
    %646 = vmatprep.subr.bf16.mxu0 0
    %647 = vmatpush1.bf16.msra.mxu0 0
    %648 = vmatprep.mubr.bf16.mxu0 0
    %649 = vmatmul.mubr.bf16.gmra.mrb[0].mxu0 %v382
    %v650 = vpop.f32.mrb[0].mxu0
    %v651 = vadd.f32 0.0, %v650
    %v652 = vpop.f32.mrb[0].mxu0
    %v653 = vadd.f32 0.0, %v652
    %v654 = vpop.f32.mrb[0].mxu0
    %v655 = vpop.f32.mrb[0].mxu0
    %656 = vdwg.mxu0
    %v661 = vcombine.low %v610, %v612
    %v662 = vcombine.low %v651, %v653
    %v664 = vunpack.c.l.s4 1983009808
    %v665 = vunpack.c.0.s8 %v664
    %v666 = vlaneseq
    %v667 = vshrl.u32 %v666, 7
    %v668 = vsub.s32 %v665, %v667
    %v669 = vrot.slane %v661, %v668
    %v671 = vunpack.c.l.s4 1983009808
    %v672 = vunpack.c.0.s8 %v671
    %v673 = vlaneseq
    %v674 = vshrl.u32 %v673, 7
    %v675 = vsub.s32 %v672, %v674
    %v676 = vrot.slane %v662, %v675
    %v677 = vcombine.low %v669, %v676
    %v679 = vadd.f32 %v381, %v677
    %v680 = vmul.f32 %v679, 0.5
    %v681 = vtanh.pop %v680
    %v682 = vadd.f32 %v681, 1.0
    %v683 = vmul.f32 %v682, 0.5
    %v685 = vrot.slane %v679, 2
    %v687 = vmul.f32 %v685, 0.5
    %v688 = vtanh.pop %v687
    %v689 = vadd.f32 %v688, 1.0
    %v690 = vmul.f32 %v689, 0.5
    %v691 = vrot.slane %v679, 4
    %v693 = vtanh.pop %v691
    %v694 = vrot.slane %v679, 6
    %v696 = vmul.f32 %v694, 0.5
    %v697 = vtanh.pop %v696
    %v698 = vadd.f32 %v697, 1.0
    %v699 = vmul.f32 %v698, 0.5
    %v700 = vmul.f32 %v690, %v375
    %v701 = vmul.f32 %v683, %v693
    %v702 = vadd.f32 %v700, %v701
    %v703 = vtanh.pop %v702
    %v704 = vmul.f32 %v699, %v703
    %s705 = scalar_lea.vmem [#allocation9], 2
    %706 = vst [vmem:[%s705] sm:$0x3] %v704
    %s707 = scalar_lea.vmem [#allocation4], 8
    %v708 = vld [vmem:[%s707] sm:$0xf]
    %v709 = vunpack.c.l.bf16 %v708
    %v710 = vpack.c.bf16 %v704, %v704
    %v711 = vld [vmem:[#allocation7] sm:$0xff]
    %v712 = vld [vmem:[#allocation7 + $0x8] sm:$0xff]
    %v713 = vld [vmem:[#allocation7 + $0x10] sm:$0xff]
    %v714 = vld [vmem:[#allocation7 + $0x18] sm:$0xff]
    %v715 = vld [vmem:[#allocation7 + $0x20] sm:$0xff]
    %v716 = vld [vmem:[#allocation7 + $0x28] sm:$0xff]
    %v717 = vld [vmem:[#allocation7 + $0x30] sm:$0xff]
    %v718 = vld [vmem:[#allocation7 + $0x38] sm:$0xff]
    %v719 = vld [vmem:[#allocation7 + $0x40] sm:$0xff]
    %v720 = vld [vmem:[#allocation7 + $0x48] sm:$0xff]
    %v721 = vld [vmem:[#allocation7 + $0x50] sm:$0xff]
    %v722 = vld [vmem:[#allocation7 + $0x58] sm:$0xff]
    %v723 = vld [vmem:[#allocation7 + $0x60] sm:$0xff]
    %v724 = vld [vmem:[#allocation7 + $0x68] sm:$0xff]
    %v725 = vld [vmem:[#allocation7 + $0x70] sm:$0xff]
    %v726 = vld [vmem:[#allocation7 + $0x78] sm:$0xff]
    %v727 = vld [vmem:[#allocation7 + $0x80] sm:$0xff]
    %v728 = vld [vmem:[#allocation7 + $0x88] sm:$0xff]
    %v729 = vld [vmem:[#allocation7 + $0x90] sm:$0xff]
    %v730 = vld [vmem:[#allocation7 + $0x98] sm:$0xff]
    %v731 = vld [vmem:[#allocation7 + $0xa0] sm:$0xff]
    %v732 = vld [vmem:[#allocation7 + $0xa8] sm:$0xff]
    %v733 = vld [vmem:[#allocation7 + $0xb0] sm:$0xff]
    %v734 = vld [vmem:[#allocation7 + $0xb8] sm:$0xff]
    %v735 = vld [vmem:[#allocation7 + $0xc0] sm:$0xff]
    %v736 = vld [vmem:[#allocation7 + $0xc8] sm:$0xff]
    %v737 = vld [vmem:[#allocation7 + $0xd0] sm:$0xff]
    %v738 = vld [vmem:[#allocation7 + $0xd8] sm:$0xff]
    %v739 = vld [vmem:[#allocation7 + $0xe0] sm:$0xff]
    %v740 = vld [vmem:[#allocation7 + $0xe8] sm:$0xff]
    %v741 = vld [vmem:[#allocation7 + $0xf0] sm:$0xff]
    %v742 = vld [vmem:[#allocation7 + $0xf8] sm:$0xff]
    %v775 = vunpack.c.l.b16 %v711
    %v776 = vunpack.c.h.b16 %v711
    %v777 = vunpack.c.l.b16 %v712
    %v778 = vunpack.c.h.b16 %v712
    %v779 = vunpack.c.l.b16 %v713
    %v780 = vunpack.c.h.b16 %v713
    %v781 = vunpack.c.l.b16 %v714
    %v782 = vunpack.c.h.b16 %v714
    %v783 = vunpack.c.l.b16 %v715
    %v784 = vunpack.c.h.b16 %v715
    %v785 = vunpack.c.l.b16 %v716
    %v786 = vunpack.c.h.b16 %v716
    %v787 = vunpack.c.l.b16 %v717
    %v788 = vunpack.c.h.b16 %v717
    %v789 = vunpack.c.l.b16 %v718
    %v790 = vunpack.c.h.b16 %v718
    %v791 = vunpack.c.l.b16 %v719
    %v792 = vunpack.c.h.b16 %v719
    %v793 = vunpack.c.l.b16 %v720
    %v794 = vunpack.c.h.b16 %v720
    %v795 = vunpack.c.l.b16 %v721
    %v796 = vunpack.c.h.b16 %v721
    %v797 = vunpack.c.l.b16 %v722
    %v798 = vunpack.c.h.b16 %v722
    %v799 = vunpack.c.l.b16 %v723
    %v800 = vunpack.c.h.b16 %v723
    %v801 = vunpack.c.l.b16 %v724
    %v802 = vunpack.c.h.b16 %v724
    %v803 = vunpack.c.l.b16 %v725
    %v804 = vunpack.c.h.b16 %v725
    %v805 = vunpack.c.l.b16 %v726
    %v806 = vunpack.c.h.b16 %v726
    %v807 = vunpack.c.l.b16 %v727
    %v808 = vunpack.c.h.b16 %v727
    %v809 = vunpack.c.l.b16 %v728
    %v810 = vunpack.c.h.b16 %v728
    %v811 = vunpack.c.l.b16 %v729
    %v812 = vunpack.c.h.b16 %v729
    %v813 = vunpack.c.l.b16 %v730
    %v814 = vunpack.c.h.b16 %v730
    %v815 = vunpack.c.l.b16 %v731
    %v816 = vunpack.c.h.b16 %v731
    %v817 = vunpack.c.l.b16 %v732
    %v818 = vunpack.c.h.b16 %v732
    %v819 = vunpack.c.l.b16 %v733
    %v820 = vunpack.c.h.b16 %v733
    %v821 = vunpack.c.l.b16 %v734
    %v822 = vunpack.c.h.b16 %v734
    %v823 = vunpack.c.l.b16 %v735
    %v824 = vunpack.c.h.b16 %v735
    %v825 = vunpack.c.l.b16 %v736
    %v826 = vunpack.c.h.b16 %v736
    %v827 = vunpack.c.l.b16 %v737
    %v828 = vunpack.c.h.b16 %v737
    %v829 = vunpack.c.l.b16 %v738
    %v830 = vunpack.c.h.b16 %v738
    %v831 = vunpack.c.l.b16 %v739
    %v832 = vunpack.c.h.b16 %v739
    %v833 = vunpack.c.l.b16 %v740
    %v834 = vunpack.c.h.b16 %v740
    %v835 = vunpack.c.l.b16 %v741
    %v836 = vunpack.c.h.b16 %v741
    %v837 = vunpack.c.l.b16 %v742
    %v838 = vunpack.c.h.b16 %v742
    %v839 = vpack.c.b16 %v779, %v775
    %v840 = vpack.c.b16 %v780, %v776
    %v841 = vpack.c.b16 %v781, %v777
    %v842 = vpack.c.b16 %v782, %v778
    %v843 = vpack.c.b16 %v787, %v783
    %v844 = vpack.c.b16 %v788, %v784
    %v845 = vpack.c.b16 %v789, %v785
    %v846 = vpack.c.b16 %v790, %v786
    %v847 = vpack.c.b16 %v795, %v791
    %v848 = vpack.c.b16 %v796, %v792
    %v849 = vpack.c.b16 %v797, %v793
    %v850 = vpack.c.b16 %v798, %v794
    %v851 = vpack.c.b16 %v803, %v799
    %v852 = vpack.c.b16 %v804, %v800
    %v853 = vpack.c.b16 %v805, %v801
    %v854 = vpack.c.b16 %v806, %v802
    %v855 = vpack.c.b16 %v811, %v807
    %v856 = vpack.c.b16 %v812, %v808
    %v857 = vpack.c.b16 %v813, %v809
    %v858 = vpack.c.b16 %v814, %v810
    %v859 = vpack.c.b16 %v819, %v815
    %v860 = vpack.c.b16 %v820, %v816
    %v861 = vpack.c.b16 %v821, %v817
    %v862 = vpack.c.b16 %v822, %v818
    %v863 = vpack.c.b16 %v827, %v823
    %v864 = vpack.c.b16 %v828, %v824
    %v865 = vpack.c.b16 %v829, %v825
    %v866 = vpack.c.b16 %v830, %v826
    %v867 = vpack.c.b16 %v835, %v831
    %v868 = vpack.c.b16 %v836, %v832
    %v869 = vpack.c.b16 %v837, %v833
    %v870 = vpack.c.b16 %v838, %v834
    %903 = vmatprep.subr.bf16.mxu0 %v840
    %904 = vmatpush1.bf16.msra.mxu0 %v839
    %905 = vmatprep.subr.bf16.mxu0 %v844
    %906 = vmatpush1.bf16.msra.mxu0 %v843
    %907 = vmatprep.subr.bf16.mxu0 %v848
    %908 = vmatpush1.bf16.msra.mxu0 %v847
    %909 = vmatprep.subr.bf16.mxu0 %v852
    %910 = vmatpush1.bf16.msra.mxu0 %v851
    %911 = vmatprep.subr.bf16.mxu0 %v856
    %912 = vmatpush1.bf16.msra.mxu0 %v855
    %913 = vmatprep.subr.bf16.mxu0 %v860
    %914 = vmatpush1.bf16.msra.mxu0 %v859
    %915 = vmatprep.subr.bf16.mxu0 %v864
    %916 = vmatpush1.bf16.msra.mxu0 %v863
    %917 = vmatprep.subr.bf16.mxu0 %v868
    %918 = vmatpush1.bf16.msra.mxu0 %v867
    %919 = vmatprep.subr.bf16.mxu0 0
    %920 = vmatpush1.bf16.msra.mxu0 0
    %921 = vmatprep.subr.bf16.mxu0 0
    %922 = vmatpush1.bf16.msra.mxu0 0
    %923 = vmatprep.subr.bf16.mxu0 0
    %924 = vmatpush1.bf16.msra.mxu0 0
    %925 = vmatprep.subr.bf16.mxu0 0
    %926 = vmatpush1.bf16.msra.mxu0 0
    %927 = vmatprep.subr.bf16.mxu0 0
    %928 = vmatpush1.bf16.msra.mxu0 0
    %929 = vmatprep.subr.bf16.mxu0 0
    %930 = vmatpush1.bf16.msra.mxu0 0
    %931 = vmatprep.subr.bf16.mxu0 0
    %932 = vmatpush1.bf16.msra.mxu0 0
    %933 = vmatprep.subr.bf16.mxu0 0
    %934 = vmatpush1.bf16.msra.mxu0 0
    %935 = vmatprep.mubr.bf16.mxu0 0
    %936 = vmatmul.mubr.bf16.gmra.mrb[0].mxu0 %v710
    %v937 = vpop.f32.mrb[0].mxu0
    %v938 = vadd.f32 0.0, %v937
    %v939 = vpop.f32.mrb[0].mxu0
    %v940 = vadd.f32 0.0, %v939
    %v941 = vpop.f32.mrb[0].mxu0
    %v942 = vpop.f32.mrb[0].mxu0
    %943 = vdwg.mxu0
    %944 = vmatprep.subr.bf16.mxu0 %v842
    %945 = vmatpush1.bf16.msra.mxu0 %v841
    %946 = vmatprep.subr.bf16.mxu0 %v846
    %947 = vmatpush1.bf16.msra.mxu0 %v845
    %948 = vmatprep.subr.bf16.mxu0 %v850
    %949 = vmatpush1.bf16.msra.mxu0 %v849
    %950 = vmatprep.subr.bf16.mxu0 %v854
    %951 = vmatpush1.bf16.msra.mxu0 %v853
    %952 = vmatprep.subr.bf16.mxu0 %v858
    %953 = vmatpush1.bf16.msra.mxu0 %v857
    %954 = vmatprep.subr.bf16.mxu0 %v862
    %955 = vmatpush1.bf16.msra.mxu0 %v861
    %956 = vmatprep.subr.bf16.mxu0 %v866
    %957 = vmatpush1.bf16.msra.mxu0 %v865
    %958 = vmatprep.subr.bf16.mxu0 %v870
    %959 = vmatpush1.bf16.msra.mxu0 %v869
    %960 = vmatprep.subr.bf16.mxu0 0
    %961 = vmatpush1.bf16.msra.mxu0 0
    %962 = vmatprep.subr.bf16.mxu0 0
    %963 = vmatpush1.bf16.msra.mxu0 0
    %964 = vmatprep.subr.bf16.mxu0 0
    %965 = vmatpush1.bf16.msra.mxu0 0
    %966 = vmatprep.subr.bf16.mxu0 0
    %967 = vmatpush1.bf16.msra.mxu0 0
    %968 = vmatprep.subr.bf16.mxu0 0
    %969 = vmatpush1.bf16.msra.mxu0 0
    %970 = vmatprep.subr.bf16.mxu0 0
    %971 = vmatpush1.bf16.msra.mxu0 0
    %972 = vmatprep.subr.bf16.mxu0 0
    %973 = vmatpush1.bf16.msra.mxu0 0
    %974 = vmatprep.subr.bf16.mxu0 0
    %975 = vmatpush1.bf16.msra.mxu0 0
    %976 = vmatprep.mubr.bf16.mxu0 0
    %977 = vmatmul.mubr.bf16.gmra.mrb[0].mxu0 %v710
    %v978 = vpop.f32.mrb[0].mxu0
    %v979 = vadd.f32 0.0, %v978
    %v980 = vpop.f32.mrb[0].mxu0
    %v981 = vadd.f32 0.0, %v980
    %v982 = vpop.f32.mrb[0].mxu0
    %v983 = vpop.f32.mrb[0].mxu0
    %984 = vdwg.mxu0
    %v989 = vcombine.low %v938, %v940
    %v990 = vcombine.low %v979, %v981
    %v992 = vunpack.c.l.s4 1983009808
    %v993 = vunpack.c.0.s8 %v992
    %v994 = vlaneseq
    %v995 = vshrl.u32 %v994, 7
    %v996 = vsub.s32 %v993, %v995
    %v997 = vrot.slane %v989, %v996
    %v999 = vunpack.c.l.s4 1983009808
    %v1000 = vunpack.c.0.s8 %v999
    %v1001 = vlaneseq
    %v1002 = vshrl.u32 %v1001, 7
    %v1003 = vsub.s32 %v1000, %v1002
    %v1004 = vrot.slane %v990, %v1003
    %v1005 = vcombine.low %v997, %v1004
    %v1007 = vadd.f32 %v709, %v1005
    %v1008 = vmul.f32 %v1007, 0.5
    %v1009 = vtanh.pop %v1008
    %v1010 = vadd.f32 %v1009, 1.0
    %v1011 = vmul.f32 %v1010, 0.5
    %v1013 = vrot.slane %v1007, 2
    %v1015 = vmul.f32 %v1013, 0.5
    %v1016 = vtanh.pop %v1015
    %v1017 = vadd.f32 %v1016, 1.0
    %v1018 = vmul.f32 %v1017, 0.5
    %v1019 = vrot.slane %v1007, 4
    %v1021 = vtanh.pop %v1019
    %v1022 = vrot.slane %v1007, 6
    %v1024 = vmul.f32 %v1022, 0.5
    %v1025 = vtanh.pop %v1024
    %v1026 = vadd.f32 %v1025, 1.0
    %v1027 = vmul.f32 %v1026, 0.5
    %v1028 = vmul.f32 %v1018, %v702
    %v1029 = vmul.f32 %v1011, %v1021
    %v1030 = vadd.f32 %v1028, %v1029
    %v1031 = vtanh.pop %v1030
    %v1032 = vmul.f32 %v1027, %v1031
    %s1033 = scalar_lea.vmem [#allocation9], 4
    %1034 = vst [vmem:[%s1033] sm:$0x3] %v1032
    %s1035 = scalar_lea.vmem [#allocation4], 12
    %v1036 = vld [vmem:[%s1035] sm:$0xf]
    %v1037 = vunpack.c.l.bf16 %v1036
    %v1038 = vpack.c.bf16 %v1032, %v1032
    %v1039 = vld [vmem:[#allocation7] sm:$0xff]
    %v1040 = vld [vmem:[#allocation7 + $0x8] sm:$0xff]
    %v1041 = vld [vmem:[#allocation7 + $0x10] sm:$0xff]
    %v1042 = vld [vmem:[#allocation7 + $0x18] sm:$0xff]
    %v1043 = vld [vmem:[#allocation7 + $0x20] sm:$0xff]
    %v1044 = vld [vmem:[#allocation7 + $0x28] sm:$0xff]
    %v1045 = vld [vmem:[#allocation7 + $0x30] sm:$0xff]
    %v1046 = vld [vmem:[#allocation7 + $0x38] sm:$0xff]
    %v1047 = vld [vmem:[#allocation7 + $0x40] sm:$0xff]
    %v1048 = vld [vmem:[#allocation7 + $0x48] sm:$0xff]
    %v1049 = vld [vmem:[#allocation7 + $0x50] sm:$0xff]
    %v1050 = vld [vmem:[#allocation7 + $0x58] sm:$0xff]
    %v1051 = vld [vmem:[#allocation7 + $0x60] sm:$0xff]
    %v1052 = vld [vmem:[#allocation7 + $0x68] sm:$0xff]
    %v1053 = vld [vmem:[#allocation7 + $0x70] sm:$0xff]
    %v1054 = vld [vmem:[#allocation7 + $0x78] sm:$0xff]
    %v1055 = vld [vmem:[#allocation7 + $0x80] sm:$0xff]
    %v1056 = vld [vmem:[#allocation7 + $0x88] sm:$0xff]
    %v1057 = vld [vmem:[#allocation7 + $0x90] sm:$0xff]
    %v1058 = vld [vmem:[#allocation7 + $0x98] sm:$0xff]
    %v1059 = vld [vmem:[#allocation7 + $0xa0] sm:$0xff]
    %v1060 = vld [vmem:[#allocation7 + $0xa8] sm:$0xff]
    %v1061 = vld [vmem:[#allocation7 + $0xb0] sm:$0xff]
    %v1062 = vld [vmem:[#allocation7 + $0xb8] sm:$0xff]
    %v1063 = vld [vmem:[#allocation7 + $0xc0] sm:$0xff]
    %v1064 = vld [vmem:[#allocation7 + $0xc8] sm:$0xff]
    %v1065 = vld [vmem:[#allocation7 + $0xd0] sm:$0xff]
    %v1066 = vld [vmem:[#allocation7 + $0xd8] sm:$0xff]
    %v1067 = vld [vmem:[#allocation7 + $0xe0] sm:$0xff]
    %v1068 = vld [vmem:[#allocation7 + $0xe8] sm:$0xff]
    %v1069 = vld [vmem:[#allocation7 + $0xf0] sm:$0xff]
    %v1070 = vld [vmem:[#allocation7 + $0xf8] sm:$0xff]
    %v1103 = vunpack.c.l.b16 %v1039
    %v1104 = vunpack.c.h.b16 %v1039
    %v1105 = vunpack.c.l.b16 %v1040
    %v1106 = vunpack.c.h.b16 %v1040
    %v1107 = vunpack.c.l.b16 %v1041
    %v1108 = vunpack.c.h.b16 %v1041
    %v1109 = vunpack.c.l.b16 %v1042
    %v1110 = vunpack.c.h.b16 %v1042
    %v1111 = vunpack.c.l.b16 %v1043
    %v1112 = vunpack.c.h.b16 %v1043
    %v1113 = vunpack.c.l.b16 %v1044
    %v1114 = vunpack.c.h.b16 %v1044
    %v1115 = vunpack.c.l.b16 %v1045
    %v1116 = vunpack.c.h.b16 %v1045
    %v1117 = vunpack.c.l.b16 %v1046
    %v1118 = vunpack.c.h.b16 %v1046
    %v1119 = vunpack.c.l.b16 %v1047
    %v1120 = vunpack.c.h.b16 %v1047
    %v1121 = vunpack.c.l.b16 %v1048
    %v1122 = vunpack.c.h.b16 %v1048
    %v1123 = vunpack.c.l.b16 %v1049
    %v1124 = vunpack.c.h.b16 %v1049
    %v1125 = vunpack.c.l.b16 %v1050
    %v1126 = vunpack.c.h.b16 %v1050
    %v1127 = vunpack.c.l.b16 %v1051
    %v1128 = vunpack.c.h.b16 %v1051
    %v1129 = vunpack.c.l.b16 %v1052
    %v1130 = vunpack.c.h.b16 %v1052
    %v1131 = vunpack.c.l.b16 %v1053
    %v1132 = vunpack.c.h.b16 %v1053
    %v1133 = vunpack.c.l.b16 %v1054
    %v1134 = vunpack.c.h.b16 %v1054
    %v1135 = vunpack.c.l.b16 %v1055
    %v1136 = vunpack.c.h.b16 %v1055
    %v1137 = vunpack.c.l.b16 %v1056
    %v1138 = vunpack.c.h.b16 %v1056
    %v1139 = vunpack.c.l.b16 %v1057
    %v1140 = vunpack.c.h.b16 %v1057
    %v1141 = vunpack.c.l.b16 %v1058
    %v1142 = vunpack.c.h.b16 %v1058
    %v1143 = vunpack.c.l.b16 %v1059
    %v1144 = vunpack.c.h.b16 %v1059
    %v1145 = vunpack.c.l.b16 %v1060
    %v1146 = vunpack.c.h.b16 %v1060
    %v1147 = vunpack.c.l.b16 %v1061
    %v1148 = vunpack.c.h.b16 %v1061
    %v1149 = vunpack.c.l.b16 %v1062
    %v1150 = vunpack.c.h.b16 %v1062
    %v1151 = vunpack.c.l.b16 %v1063
    %v1152 = vunpack.c.h.b16 %v1063
    %v1153 = vunpack.c.l.b16 %v1064
    %v1154 = vunpack.c.h.b16 %v1064
    %v1155 = vunpack.c.l.b16 %v1065
    %v1156 = vunpack.c.h.b16 %v1065
    %v1157 = vunpack.c.l.b16 %v1066
    %v1158 = vunpack.c.h.b16 %v1066
    %v1159 = vunpack.c.l.b16 %v1067
    %v1160 = vunpack.c.h.b16 %v1067
    %v1161 = vunpack.c.l.b16 %v1068
    %v1162 = vunpack.c.h.b16 %v1068
    %v1163 = vunpack.c.l.b16 %v1069
    %v1164 = vunpack.c.h.b16 %v1069
    %v1165 = vunpack.c.l.b16 %v1070
    %v1166 = vunpack.c.h.b16 %v1070
    %v1167 = vpack.c.b16 %v1107, %v1103
    %v1168 = vpack.c.b16 %v1108, %v1104
    %v1169 = vpack.c.b16 %v1109, %v1105
    %v1170 = vpack.c.b16 %v1110, %v1106
    %v1171 = vpack.c.b16 %v1115, %v1111
    %v1172 = vpack.c.b16 %v1116, %v1112
    %v1173 = vpack.c.b16 %v1117, %v1113
    %v1174 = vpack.c.b16 %v1118, %v1114
    %v1175 = vpack.c.b16 %v1123, %v1119
    %v1176 = vpack.c.b16 %v1124, %v1120
    %v1177 = vpack.c.b16 %v1125, %v1121
    %v1178 = vpack.c.b16 %v1126, %v1122
    %v1179 = vpack.c.b16 %v1131, %v1127
    %v1180 = vpack.c.b16 %v1132, %v1128
    %v1181 = vpack.c.b16 %v1133, %v1129
    %v1182 = vpack.c.b16 %v1134, %v1130
    %v1183 = vpack.c.b16 %v1139, %v1135
    %v1184 = vpack.c.b16 %v1140, %v1136
    %v1185 = vpack.c.b16 %v1141, %v1137
    %v1186 = vpack.c.b16 %v1142, %v1138
    %v1187 = vpack.c.b16 %v1147, %v1143
    %v1188 = vpack.c.b16 %v1148, %v1144
    %v1189 = vpack.c.b16 %v1149, %v1145
    %v1190 = vpack.c.b16 %v1150, %v1146
    %v1191 = vpack.c.b16 %v1155, %v1151
    %v1192 = vpack.c.b16 %v1156, %v1152
    %v1193 = vpack.c.b16 %v1157, %v1153
    %v1194 = vpack.c.b16 %v1158, %v1154
    %v1195 = vpack.c.b16 %v1163, %v1159
    %v1196 = vpack.c.b16 %v1164, %v1160
    %v1197 = vpack.c.b16 %v1165, %v1161
    %v1198 = vpack.c.b16 %v1166, %v1162
    %1231 = vmatprep.subr.bf16.mxu0 %v1168
    %1232 = vmatpush1.bf16.msra.mxu0 %v1167
    %1233 = vmatprep.subr.bf16.mxu0 %v1172
    %1234 = vmatpush1.bf16.msra.mxu0 %v1171
    %1235 = vmatprep.subr.bf16.mxu0 %v1176
    %1236 = vmatpush1.bf16.msra.mxu0 %v1175
    %1237 = vmatprep.subr.bf16.mxu0 %v1180
    %1238 = vmatpush1.bf16.msra.mxu0 %v1179
    %1239 = vmatprep.subr.bf16.mxu0 %v1184
    %1240 = vmatpush1.bf16.msra.mxu0 %v1183
    %1241 = vmatprep.subr.bf16.mxu0 %v1188
    %1242 = vmatpush1.bf16.msra.mxu0 %v1187
    %1243 = vmatprep.subr.bf16.mxu0 %v1192
    %1244 = vmatpush1.bf16.msra.mxu0 %v1191
    %1245 = vmatprep.subr.bf16.mxu0 %v1196
    %1246 = vmatpush1.bf16.msra.mxu0 %v1195
    %1247 = vmatprep.subr.bf16.mxu0 0
    %1248 = vmatpush1.bf16.msra.mxu0 0
    %1249 = vmatprep.subr.bf16.mxu0 0
    %1250 = vmatpush1.bf16.msra.mxu0 0
    %1251 = vmatprep.subr.bf16.mxu0 0
    %1252 = vmatpush1.bf16.msra.mxu0 0
    %1253 = vmatprep.subr.bf16.mxu0 0
    %1254 = vmatpush1.bf16.msra.mxu0 0
    %1255 = vmatprep.subr.bf16.mxu0 0
    %1256 = vmatpush1.bf16.msra.mxu0 0
    %1257 = vmatprep.subr.bf16.mxu0 0
    %1258 = vmatpush1.bf16.msra.mxu0 0
    %1259 = vmatprep.subr.bf16.mxu0 0
    %1260 = vmatpush1.bf16.msra.mxu0 0
    %1261 = vmatprep.subr.bf16.mxu0 0
    %1262 = vmatpush1.bf16.msra.mxu0 0
    %1263 = vmatprep.mubr.bf16.mxu0 0
    %1264 = vmatmul.mubr.bf16.gmra.mrb[0].mxu0 %v1038
    %v1265 = vpop.f32.mrb[0].mxu0
    %v1266 = vadd.f32 0.0, %v1265
    %v1267 = vpop.f32.mrb[0].mxu0
    %v1268 = vadd.f32 0.0, %v1267
    %v1269 = vpop.f32.mrb[0].mxu0
    %v1270 = vpop.f32.mrb[0].mxu0
    %1271 = vdwg.mxu0
    %1272 = vmatprep.subr.bf16.mxu0 %v1170
    %1273 = vmatpush1.bf16.msra.mxu0 %v1169
    %1274 = vmatprep.subr.bf16.mxu0 %v1174
    %1275 = vmatpush1.bf16.msra.mxu0 %v1173
    %1276 = vmatprep.subr.bf16.mxu0 %v1178
    %1277 = vmatpush1.bf16.msra.mxu0 %v1177
    %1278 = vmatprep.subr.bf16.mxu0 %v1182
    %1279 = vmatpush1.bf16.msra.mxu0 %v1181
    %1280 = vmatprep.subr.bf16.mxu0 %v1186
    %1281 = vmatpush1.bf16.msra.mxu0 %v1185
    %1282 = vmatprep.subr.bf16.mxu0 %v1190
    %1283 = vmatpush1.bf16.msra.mxu0 %v1189
    %1284 = vmatprep.subr.bf16.mxu0 %v1194
    %1285 = vmatpush1.bf16.msra.mxu0 %v1193
    %1286 = vmatprep.subr.bf16.mxu0 %v1198
    %1287 = vmatpush1.bf16.msra.mxu0 %v1197
    %1288 = vmatprep.subr.bf16.mxu0 0
    %1289 = vmatpush1.bf16.msra.mxu0 0
    %1290 = vmatprep.subr.bf16.mxu0 0
    %1291 = vmatpush1.bf16.msra.mxu0 0
    %1292 = vmatprep.subr.bf16.mxu0 0
    %1293 = vmatpush1.bf16.msra.mxu0 0
    %1294 = vmatprep.subr.bf16.mxu0 0
    %1295 = vmatpush1.bf16.msra.mxu0 0
    %1296 = vmatprep.subr.bf16.mxu0 0
    %1297 = vmatpush1.bf16.msra.mxu0 0
    %1298 = vmatprep.subr.bf16.mxu0 0
    %1299 = vmatpush1.bf16.msra.mxu0 0
    %1300 = vmatprep.subr.bf16.mxu0 0
    %1301 = vmatpush1.bf16.msra.mxu0 0
    %1302 = vmatprep.subr.bf16.mxu0 0
    %1303 = vmatpush1.bf16.msra.mxu0 0
    %1304 = vmatprep.mubr.bf16.mxu0 0
    %1305 = vmatmul.mubr.bf16.gmra.mrb[0].mxu0 %v1038
    %v1306 = vpop.f32.mrb[0].mxu0
    %v1307 = vadd.f32 0.0, %v1306
    %v1308 = vpop.f32.mrb[0].mxu0
    %v1309 = vadd.f32 0.0, %v1308
    %v1310 = vpop.f32.mrb[0].mxu0
    %v1311 = vpop.f32.mrb[0].mxu0
    %1312 = vdwg.mxu0
    %v1317 = vcombine.low %v1266, %v1268
    %v1318 = vcombine.low %v1307, %v1309
    %v1320 = vunpack.c.l.s4 1983009808
    %v1321 = vunpack.c.0.s8 %v1320
    %v1322 = vlaneseq
    %v1323 = vshrl.u32 %v1322, 7
    %v1324 = vsub.s32 %v1321, %v1323
    %v1325 = vrot.slane %v1317, %v1324
    %v1327 = vunpack.c.l.s4 1983009808
    %v1328 = vunpack.c.0.s8 %v1327
    %v1329 = vlaneseq
    %v1330 = vshrl.u32 %v1329, 7
    %v1331 = vsub.s32 %v1328, %v1330
    %v1332 = vrot.slane %v1318, %v1331
    %v1333 = vcombine.low %v1325, %v1332
    %v1335 = vadd.f32 %v1037, %v1333
    %v1336 = vmul.f32 %v1335, 0.5
    %v1337 = vtanh.pop %v1336
    %v1338 = vadd.f32 %v1337, 1.0
    %v1339 = vmul.f32 %v1338, 0.5
    %v1341 = vrot.slane %v1335, 2
    %v1343 = vmul.f32 %v1341, 0.5
    %v1344 = vtanh.pop %v1343
    %v1345 = vadd.f32 %v1344, 1.0
    %v1346 = vmul.f32 %v1345, 0.5
    %v1347 = vrot.slane %v1335, 4
    %v1349 = vtanh.pop %v1347
    %v1350 = vrot.slane %v1335, 6
    %v1352 = vmul.f32 %v1350, 0.5
    %v1353 = vtanh.pop %v1352
    %v1354 = vadd.f32 %v1353, 1.0
    %v1355 = vmul.f32 %v1354, 0.5
    %v1356 = vmul.f32 %v1346, %v1030
    %v1357 = vmul.f32 %v1339, %v1349
    %v1358 = vadd.f32 %v1356, %v1357
    %v1359 = vtanh.pop %v1358
    %v1360 = vmul.f32 %v1355, %v1359
    %s1361 = scalar_lea.vmem [#allocation9], 6
    %1362 = vst [vmem:[%s1361] sm:$0x3] %v1360
    %s1363 = scalar_lea.vmem [#allocation4], 16
    %v1364 = vld [vmem:[%s1363] sm:$0xf]
    %v1365 = vunpack.c.l.bf16 %v1364
    %v1366 = vpack.c.bf16 %v1360, %v1360
    %v1367 = vld [vmem:[#allocation7] sm:$0xff]
    %v1368 = vld [vmem:[#allocation7 + $0x8] sm:$0xff]
    %v1369 = vld [vmem:[#allocation7 + $0x10] sm:$0xff]
    %v1370 = vld [vmem:[#allocation7 + $0x18] sm:$0xff]
    %v1371 = vld [vmem:[#allocation7 + $0x20] sm:$0xff]
    %v1372 = vld [vmem:[#allocation7 + $0x28] sm:$0xff]
    %v1373 = vld [vmem:[#allocation7 + $0x30] sm:$0xff]
    %v1374 = vld [vmem:[#allocation7 + $0x38] sm:$0xff]
    %v1375 = vld [vmem:[#allocation7 + $0x40] sm:$0xff]
    %v1376 = vld [vmem:[#allocation7 + $0x48] sm:$0xff]
    %v1377 = vld [vmem:[#allocation7 + $0x50] sm:$0xff]
    %v1378 = vld [vmem:[#allocation7 + $0x58] sm:$0xff]
    %v1379 = vld [vmem:[#allocation7 + $0x60] sm:$0xff]
    %v1380 = vld [vmem:[#allocation7 + $0x68] sm:$0xff]
    %v1381 = vld [vmem:[#allocation7 + $0x70] sm:$0xff]
    %v1382 = vld [vmem:[#allocation7 + $0x78] sm:$0xff]
    %v1383 = vld [vmem:[#allocation7 + $0x80] sm:$0xff]
    %v1384 = vld [vmem:[#allocation7 + $0x88] sm:$0xff]
    %v1385 = vld [vmem:[#allocation7 + $0x90] sm:$0xff]
    %v1386 = vld [vmem:[#allocation7 + $0x98] sm:$0xff]
    %v1387 = vld [vmem:[#allocation7 + $0xa0] sm:$0xff]
    %v1388 = vld [vmem:[#allocation7 + $0xa8] sm:$0xff]
    %v1389 = vld [vmem:[#allocation7 + $0xb0] sm:$0xff]
    %v1390 = vld [vmem:[#allocation7 + $0xb8] sm:$0xff]
    %v1391 = vld [vmem:[#allocation7 + $0xc0] sm:$0xff]
    %v1392 = vld [vmem:[#allocation7 + $0xc8] sm:$0xff]
    %v1393 = vld [vmem:[#allocation7 + $0xd0] sm:$0xff]
    %v1394 = vld [vmem:[#allocation7 + $0xd8] sm:$0xff]
    %v1395 = vld [vmem:[#allocation7 + $0xe0] sm:$0xff]
    %v1396 = vld [vmem:[#allocation7 + $0xe8] sm:$0xff]
    %v1397 = vld [vmem:[#allocation7 + $0xf0] sm:$0xff]
    %v1398 = vld [vmem:[#allocation7 + $0xf8] sm:$0xff]
    %v1431 = vunpack.c.l.b16 %v1367
    %v1432 = vunpack.c.h.b16 %v1367
    %v1433 = vunpack.c.l.b16 %v1368
    %v1434 = vunpack.c.h.b16 %v1368
    %v1435 = vunpack.c.l.b16 %v1369
    %v1436 = vunpack.c.h.b16 %v1369
    %v1437 = vunpack.c.l.b16 %v1370
    %v1438 = vunpack.c.h.b16 %v1370
    %v1439 = vunpack.c.l.b16 %v1371
    %v1440 = vunpack.c.h.b16 %v1371
    %v1441 = vunpack.c.l.b16 %v1372
    %v1442 = vunpack.c.h.b16 %v1372
    %v1443 = vunpack.c.l.b16 %v1373
    %v1444 = vunpack.c.h.b16 %v1373
    %v1445 = vunpack.c.l.b16 %v1374
    %v1446 = vunpack.c.h.b16 %v1374
    %v1447 = vunpack.c.l.b16 %v1375
    %v1448 = vunpack.c.h.b16 %v1375
    %v1449 = vunpack.c.l.b16 %v1376
    %v1450 = vunpack.c.h.b16 %v1376
    %v1451 = vunpack.c.l.b16 %v1377
    %v1452 = vunpack.c.h.b16 %v1377
    %v1453 = vunpack.c.l.b16 %v1378
    %v1454 = vunpack.c.h.b16 %v1378
    %v1455 = vunpack.c.l.b16 %v1379
    %v1456 = vunpack.c.h.b16 %v1379
    %v1457 = vunpack.c.l.b16 %v1380
    %v1458 = vunpack.c.h.b16 %v1380
    %v1459 = vunpack.c.l.b16 %v1381
    %v1460 = vunpack.c.h.b16 %v1381
    %v1461 = vunpack.c.l.b16 %v1382
    %v1462 = vunpack.c.h.b16 %v1382
    %v1463 = vunpack.c.l.b16 %v1383
    %v1464 = vunpack.c.h.b16 %v1383
    %v1465 = vunpack.c.l.b16 %v1384
    %v1466 = vunpack.c.h.b16 %v1384
    %v1467 = vunpack.c.l.b16 %v1385
    %v1468 = vunpack.c.h.b16 %v1385
    %v1469 = vunpack.c.l.b16 %v1386
    %v1470 = vunpack.c.h.b16 %v1386
    %v1471 = vunpack.c.l.b16 %v1387
    %v1472 = vunpack.c.h.b16 %v1387
    %v1473 = vunpack.c.l.b16 %v1388
    %v1474 = vunpack.c.h.b16 %v1388
    %v1475 = vunpack.c.l.b16 %v1389
    %v1476 = vunpack.c.h.b16 %v1389
    %v1477 = vunpack.c.l.b16 %v1390
    %v1478 = vunpack.c.h.b16 %v1390
    %v1479 = vunpack.c.l.b16 %v1391
    %v1480 = vunpack.c.h.b16 %v1391
    %v1481 = vunpack.c.l.b16 %v1392
    %v1482 = vunpack.c.h.b16 %v1392
    %v1483 = vunpack.c.l.b16 %v1393
    %v1484 = vunpack.c.h.b16 %v1393
    %v1485 = vunpack.c.l.b16 %v1394
    %v1486 = vunpack.c.h.b16 %v1394
    %v1487 = vunpack.c.l.b16 %v1395
    %v1488 = vunpack.c.h.b16 %v1395
    %v1489 = vunpack.c.l.b16 %v1396
    %v1490 = vunpack.c.h.b16 %v1396
    %v1491 = vunpack.c.l.b16 %v1397
    %v1492 = vunpack.c.h.b16 %v1397
    %v1493 = vunpack.c.l.b16 %v1398
    %v1494 = vunpack.c.h.b16 %v1398
    %v1495 = vpack.c.b16 %v1435, %v1431
    %v1496 = vpack.c.b16 %v1436, %v1432
    %v1497 = vpack.c.b16 %v1437, %v1433
    %v1498 = vpack.c.b16 %v1438, %v1434
    %v1499 = vpack.c.b16 %v1443, %v1439
    %v1500 = vpack.c.b16 %v1444, %v1440
    %v1501 = vpack.c.b16 %v1445, %v1441
    %v1502 = vpack.c.b16 %v1446, %v1442
    %v1503 = vpack.c.b16 %v1451, %v1447
    %v1504 = vpack.c.b16 %v1452, %v1448
    %v1505 = vpack.c.b16 %v1453, %v1449
    %v1506 = vpack.c.b16 %v1454, %v1450
    %v1507 = vpack.c.b16 %v1459, %v1455
    %v1508 = vpack.c.b16 %v1460, %v1456
    %v1509 = vpack.c.b16 %v1461, %v1457
    %v1510 = vpack.c.b16 %v1462, %v1458
    %v1511 = vpack.c.b16 %v1467, %v1463
    %v1512 = vpack.c.b16 %v1468, %v1464
    %v1513 = vpack.c.b16 %v1469, %v1465
    %v1514 = vpack.c.b16 %v1470, %v1466
    %v1515 = vpack.c.b16 %v1475, %v1471
    %v1516 = vpack.c.b16 %v1476, %v1472
    %v1517 = vpack.c.b16 %v1477, %v1473
    %v1518 = vpack.c.b16 %v1478, %v1474
    %v1519 = vpack.c.b16 %v1483, %v1479
    %v1520 = vpack.c.b16 %v1484, %v1480
    %v1521 = vpack.c.b16 %v1485, %v1481
    %v1522 = vpack.c.b16 %v1486, %v1482
    %v1523 = vpack.c.b16 %v1491, %v1487
    %v1524 = vpack.c.b16 %v1492, %v1488
    %v1525 = vpack.c.b16 %v1493, %v1489
    %v1526 = vpack.c.b16 %v1494, %v1490
    %1559 = vmatprep.subr.bf16.mxu0 %v1496
    %1560 = vmatpush1.bf16.msra.mxu0 %v1495
    %1561 = vmatprep.subr.bf16.mxu0 %v1500
    %1562 = vmatpush1.bf16.msra.mxu0 %v1499
    %1563 = vmatprep.subr.bf16.mxu0 %v1504
    %1564 = vmatpush1.bf16.msra.mxu0 %v1503
    %1565 = vmatprep.subr.bf16.mxu0 %v1508
    %1566 = vmatpush1.bf16.msra.mxu0 %v1507
    %1567 = vmatprep.subr.bf16.mxu0 %v1512
    %1568 = vmatpush1.bf16.msra.mxu0 %v1511
    %1569 = vmatprep.subr.bf16.mxu0 %v1516
    %1570 = vmatpush1.bf16.msra.mxu0 %v1515
    %1571 = vmatprep.subr.bf16.mxu0 %v1520
    %1572 = vmatpush1.bf16.msra.mxu0 %v1519
    %1573 = vmatprep.subr.bf16.mxu0 %v1524
    %1574 = vmatpush1.bf16.msra.mxu0 %v1523
    %1575 = vmatprep.subr.bf16.mxu0 0
    %1576 = vmatpush1.bf16.msra.mxu0 0
    %1577 = vmatprep.subr.bf16.mxu0 0
    %1578 = vmatpush1.bf16.msra.mxu0 0
    %1579 = vmatprep.subr.bf16.mxu0 0
    %1580 = vmatpush1.bf16.msra.mxu0 0
    %1581 = vmatprep.subr.bf16.mxu0 0
    %1582 = vmatpush1.bf16.msra.mxu0 0
    %1583 = vmatprep.subr.bf16.mxu0 0
    %1584 = vmatpush1.bf16.msra.mxu0 0
    %1585 = vmatprep.subr.bf16.mxu0 0
    %1586 = vmatpush1.bf16.msra.mxu0 0
    %1587 = vmatprep.subr.bf16.mxu0 0
    %1588 = vmatpush1.bf16.msra.mxu0 0
    %1589 = vmatprep.subr.bf16.mxu0 0
    %1590 = vmatpush1.bf16.msra.mxu0 0
    %1591 = vmatprep.mubr.bf16.mxu0 0
    %1592 = vmatmul.mubr.bf16.gmra.mrb[0].mxu0 %v1366
    %v1593 = vpop.f32.mrb[0].mxu0
    %v1594 = vadd.f32 0.0, %v1593
    %v1595 = vpop.f32.mrb[0].mxu0
    %v1596 = vadd.f32 0.0, %v1595
    %v1597 = vpop.f32.mrb[0].mxu0
    %v1598 = vpop.f32.mrb[0].mxu0
    %1599 = vdwg.mxu0
    %1600 = vmatprep.subr.bf16.mxu0 %v1498
    %1601 = vmatpush1.bf16.msra.mxu0 %v1497
    %1602 = vmatprep.subr.bf16.mxu0 %v1502
    %1603 = vmatpush1.bf16.msra.mxu0 %v1501
    %1604 = vmatprep.subr.bf16.mxu0 %v1506
    %1605 = vmatpush1.bf16.msra.mxu0 %v1505
    %1606 = vmatprep.subr.bf16.mxu0 %v1510
    %1607 = vmatpush1.bf16.msra.mxu0 %v1509
    %1608 = vmatprep.subr.bf16.mxu0 %v1514
    %1609 = vmatpush1.bf16.msra.mxu0 %v1513
    %1610 = vmatprep.subr.bf16.mxu0 %v1518
    %1611 = vmatpush1.bf16.msra.mxu0 %v1517
    %1612 = vmatprep.subr.bf16.mxu0 %v1522
    %1613 = vmatpush1.bf16.msra.mxu0 %v1521
    %1614 = vmatprep.subr.bf16.mxu0 %v1526
    %1615 = vmatpush1.bf16.msra.mxu0 %v1525
    %1616 = vmatprep.subr.bf16.mxu0 0
    %1617 = vmatpush1.bf16.msra.mxu0 0
    %1618 = vmatprep.subr.bf16.mxu0 0
    %1619 = vmatpush1.bf16.msra.mxu0 0
    %1620 = vmatprep.subr.bf16.mxu0 0
    %1621 = vmatpush1.bf16.msra.mxu0 0
    %1622 = vmatprep.subr.bf16.mxu0 0
    %1623 = vmatpush1.bf16.msra.mxu0 0
    %1624 = vmatprep.subr.bf16.mxu0 0
    %1625 = vmatpush1.bf16.msra.mxu0 0
    %1626 = vmatprep.subr.bf16.mxu0 0
    %1627 = vmatpush1.bf16.msra.mxu0 0
    %1628 = vmatprep.subr.bf16.mxu0 0
    %1629 = vmatpush1.bf16.msra.mxu0 0
    %1630 = vmatprep.subr.bf16.mxu0 0
    %1631 = vmatpush1.bf16.msra.mxu0 0
    %1632 = vmatprep.mubr.bf16.mxu0 0
    %1633 = vmatmul.mubr.bf16.gmra.mrb[0].mxu0 %v1366
    %v1634 = vpop.f32.mrb[0].mxu0
    %v1635 = vadd.f32 0.0, %v1634
    %v1636 = vpop.f32.mrb[0].mxu0
    %v1637 = vadd.f32 0.0, %v1636
    %v1638 = vpop.f32.mrb[0].mxu0
    %v1639 = vpop.f32.mrb[0].mxu0
    %1640 = vdwg.mxu0
    %v1645 = vcombine.low %v1594, %v1596
    %v1646 = vcombine.low %v1635, %v1637
    %v1648 = vunpack.c.l.s4 1983009808
    %v1649 = vunpack.c.0.s8 %v1648
    %v1650 = vlaneseq
    %v1651 = vshrl.u32 %v1650, 7
    %v1652 = vsub.s32 %v1649, %v1651
    %v1653 = vrot.slane %v1645, %v1652
    %v1655 = vunpack.c.l.s4 1983009808
    %v1656 = vunpack.c.0.s8 %v1655
    %v1657 = vlaneseq
    %v1658 = vshrl.u32 %v1657, 7
    %v1659 = vsub.s32 %v1656, %v1658
    %v1660 = vrot.slane %v1646, %v1659
    %v1661 = vcombine.low %v1653, %v1660
    %v1663 = vadd.f32 %v1365, %v1661
    %v1664 = vmul.f32 %v1663, 0.5
    %v1665 = vtanh.pop %v1664
    %v1666 = vadd.f32 %v1665, 1.0
    %v1667 = vmul.f32 %v1666, 0.5
    %v1669 = vrot.slane %v1663, 2
    %v1671 = vmul.f32 %v1669, 0.5
    %v1672 = vtanh.pop %v1671
    %v1673 = vadd.f32 %v1672, 1.0
    %v1674 = vmul.f32 %v1673, 0.5
    %v1675 = vrot.slane %v1663, 4
    %v1677 = vtanh.pop %v1675
    %v1678 = vrot.slane %v1663, 6
    %v1680 = vmul.f32 %v1678, 0.5
    %v1681 = vtanh.pop %v1680
    %v1682 = vadd.f32 %v1681, 1.0
    %v1683 = vmul.f32 %v1682, 0.5
    %v1684 = vmul.f32 %v1674, %v1358
    %v1685 = vmul.f32 %v1667, %v1677
    %v1686 = vadd.f32 %v1684, %v1685
    %v1687 = vtanh.pop %v1686
    %v1688 = vmul.f32 %v1683, %v1687
    %s1689 = scalar_lea.vmem [#allocation9], 8
    %1690 = vst [vmem:[%s1689] sm:$0x3] %v1688
    %s1691 = scalar_lea.vmem [#allocation4], 20
    %v1692 = vld [vmem:[%s1691] sm:$0xf]
    %v1693 = vunpack.c.l.bf16 %v1692
    %v1694 = vpack.c.bf16 %v1688, %v1688
    %v1695 = vld [vmem:[#allocation7] sm:$0xff]
    %v1696 = vld [vmem:[#allocation7 + $0x8] sm:$0xff]
    %v1697 = vld [vmem:[#allocation7 + $0x10] sm:$0xff]
    %v1698 = vld [vmem:[#allocation7 + $0x18] sm:$0xff]
    %v1699 = vld [vmem:[#allocation7 + $0x20] sm:$0xff]
    %v1700 = vld [vmem:[#allocation7 + $0x28] sm:$0xff]
    %v1701 = vld [vmem:[#allocation7 + $0x30] sm:$0xff]
    %v1702 = vld [vmem:[#allocation7 + $0x38] sm:$0xff]
    %v1703 = vld [vmem:[#allocation7 + $0x40] sm:$0xff]
    %v1704 = vld [vmem:[#allocation7 + $0x48] sm:$0xff]
    %v1705 = vld [vmem:[#allocation7 + $0x50] sm:$0xff]
    %v1706 = vld [vmem:[#allocation7 + $0x58] sm:$0xff]
    %v1707 = vld [vmem:[#allocation7 + $0x60] sm:$0xff]
    %v1708 = vld [vmem:[#allocation7 + $0x68] sm:$0xff]
    %v1709 = vld [vmem:[#allocation7 + $0x70] sm:$0xff]
    %v1710 = vld [vmem:[#allocation7 + $0x78] sm:$0xff]
    %v1711 = vld [vmem:[#allocation7 + $0x80] sm:$0xff]
    %v1712 = vld [vmem:[#allocation7 + $0x88] sm:$0xff]
    %v1713 = vld [vmem:[#allocation7 + $0x90] sm:$0xff]
    %v1714 = vld [vmem:[#allocation7 + $0x98] sm:$0xff]
    %v1715 = vld [vmem:[#allocation7 + $0xa0] sm:$0xff]
    %v1716 = vld [vmem:[#allocation7 + $0xa8] sm:$0xff]
    %v1717 = vld [vmem:[#allocation7 + $0xb0] sm:$0xff]
    %v1718 = vld [vmem:[#allocation7 + $0xb8] sm:$0xff]
    %v1719 = vld [vmem:[#allocation7 + $0xc0] sm:$0xff]
    %v1720 = vld [vmem:[#allocation7 + $0xc8] sm:$0xff]
    %v1721 = vld [vmem:[#allocation7 + $0xd0] sm:$0xff]
    %v1722 = vld [vmem:[#allocation7 + $0xd8] sm:$0xff]
    %v1723 = vld [vmem:[#allocation7 + $0xe0] sm:$0xff]
    %v1724 = vld [vmem:[#allocation7 + $0xe8] sm:$0xff]
    %v1725 = vld [vmem:[#allocation7 + $0xf0] sm:$0xff]
    %v1726 = vld [vmem:[#allocation7 + $0xf8] sm:$0xff]
    %v1759 = vunpack.c.l.b16 %v1695
    %v1760 = vunpack.c.h.b16 %v1695
    %v1761 = vunpack.c.l.b16 %v1696
    %v1762 = vunpack.c.h.b16 %v1696
    %v1763 = vunpack.c.l.b16 %v1697
    %v1764 = vunpack.c.h.b16 %v1697
    %v1765 = vunpack.c.l.b16 %v1698
    %v1766 = vunpack.c.h.b16 %v1698
    %v1767 = vunpack.c.l.b16 %v1699
    %v1768 = vunpack.c.h.b16 %v1699
    %v1769 = vunpack.c.l.b16 %v1700
    %v1770 = vunpack.c.h.b16 %v1700
    %v1771 = vunpack.c.l.b16 %v1701
    %v1772 = vunpack.c.h.b16 %v1701
    %v1773 = vunpack.c.l.b16 %v1702
    %v1774 = vunpack.c.h.b16 %v1702
    %v1775 = vunpack.c.l.b16 %v1703
    %v1776 = vunpack.c.h.b16 %v1703
    %v1777 = vunpack.c.l.b16 %v1704
    %v1778 = vunpack.c.h.b16 %v1704
    %v1779 = vunpack.c.l.b16 %v1705
    %v1780 = vunpack.c.h.b16 %v1705
    %v1781 = vunpack.c.l.b16 %v1706
    %v1782 = vunpack.c.h.b16 %v1706
    %v1783 = vunpack.c.l.b16 %v1707
    %v1784 = vunpack.c.h.b16 %v1707
    %v1785 = vunpack.c.l.b16 %v1708
    %v1786 = vunpack.c.h.b16 %v1708
    %v1787 = vunpack.c.l.b16 %v1709
    %v1788 = vunpack.c.h.b16 %v1709
    %v1789 = vunpack.c.l.b16 %v1710
    %v1790 = vunpack.c.h.b16 %v1710
    %v1791 = vunpack.c.l.b16 %v1711
    %v1792 = vunpack.c.h.b16 %v1711
    %v1793 = vunpack.c.l.b16 %v1712
    %v1794 = vunpack.c.h.b16 %v1712
    %v1795 = vunpack.c.l.b16 %v1713
    %v1796 = vunpack.c.h.b16 %v1713
    %v1797 = vunpack.c.l.b16 %v1714
    %v1798 = vunpack.c.h.b16 %v1714
    %v1799 = vunpack.c.l.b16 %v1715
    %v1800 = vunpack.c.h.b16 %v1715
    %v1801 = vunpack.c.l.b16 %v1716
    %v1802 = vunpack.c.h.b16 %v1716
    %v1803 = vunpack.c.l.b16 %v1717
    %v1804 = vunpack.c.h.b16 %v1717
    %v1805 = vunpack.c.l.b16 %v1718
    %v1806 = vunpack.c.h.b16 %v1718
    %v1807 = vunpack.c.l.b16 %v1719
    %v1808 = vunpack.c.h.b16 %v1719
    %v1809 = vunpack.c.l.b16 %v1720
    %v1810 = vunpack.c.h.b16 %v1720
    %v1811 = vunpack.c.l.b16 %v1721
    %v1812 = vunpack.c.h.b16 %v1721
    %v1813 = vunpack.c.l.b16 %v1722
    %v1814 = vunpack.c.h.b16 %v1722
    %v1815 = vunpack.c.l.b16 %v1723
    %v1816 = vunpack.c.h.b16 %v1723
    %v1817 = vunpack.c.l.b16 %v1724
    %v1818 = vunpack.c.h.b16 %v1724
    %v1819 = vunpack.c.l.b16 %v1725
    %v1820 = vunpack.c.h.b16 %v1725
    %v1821 = vunpack.c.l.b16 %v1726
    %v1822 = vunpack.c.h.b16 %v1726
    %v1823 = vpack.c.b16 %v1763, %v1759
    %v1824 = vpack.c.b16 %v1764, %v1760
    %v1825 = vpack.c.b16 %v1765, %v1761
    %v1826 = vpack.c.b16 %v1766, %v1762
    %v1827 = vpack.c.b16 %v1771, %v1767
    %v1828 = vpack.c.b16 %v1772, %v1768
    %v1829 = vpack.c.b16 %v1773, %v1769
    %v1830 = vpack.c.b16 %v1774, %v1770
    %v1831 = vpack.c.b16 %v1779, %v1775
    %v1832 = vpack.c.b16 %v1780, %v1776
    %v1833 = vpack.c.b16 %v1781, %v1777
    %v1834 = vpack.c.b16 %v1782, %v1778
    %v1835 = vpack.c.b16 %v1787, %v1783
    %v1836 = vpack.c.b16 %v1788, %v1784
    %v1837 = vpack.c.b16 %v1789, %v1785
    %v1838 = vpack.c.b16 %v1790, %v1786
    %v1839 = vpack.c.b16 %v1795, %v1791
    %v1840 = vpack.c.b16 %v1796, %v1792
    %v1841 = vpack.c.b16 %v1797, %v1793
    %v1842 = vpack.c.b16 %v1798, %v1794
    %v1843 = vpack.c.b16 %v1803, %v1799
    %v1844 = vpack.c.b16 %v1804, %v1800
    %v1845 = vpack.c.b16 %v1805, %v1801
    %v1846 = vpack.c.b16 %v1806, %v1802
    %v1847 = vpack.c.b16 %v1811, %v1807
    %v1848 = vpack.c.b16 %v1812, %v1808
    %v1849 = vpack.c.b16 %v1813, %v1809
    %v1850 = vpack.c.b16 %v1814, %v1810
    %v1851 = vpack.c.b16 %v1819, %v1815
    %v1852 = vpack.c.b16 %v1820, %v1816
    %v1853 = vpack.c.b16 %v1821, %v1817
    %v1854 = vpack.c.b16 %v1822, %v1818
    %1887 = vmatprep.subr.bf16.mxu0 %v1824
    %1888 = vmatpush1.bf16.msra.mxu0 %v1823
    %1889 = vmatprep.subr.bf16.mxu0 %v1828
    %1890 = vmatpush1.bf16.msra.mxu0 %v1827
    %1891 = vmatprep.subr.bf16.mxu0 %v1832
    %1892 = vmatpush1.bf16.msra.mxu0 %v1831
    %1893 = vmatprep.subr.bf16.mxu0 %v1836
    %1894 = vmatpush1.bf16.msra.mxu0 %v1835
    %1895 = vmatprep.subr.bf16.mxu0 %v1840
    %1896 = vmatpush1.bf16.msra.mxu0 %v1839
    %1897 = vmatprep.subr.bf16.mxu0 %v1844
    %1898 = vmatpush1.bf16.msra.mxu0 %v1843
    %1899 = vmatprep.subr.bf16.mxu0 %v1848
    %1900 = vmatpush1.bf16.msra.mxu0 %v1847
    %1901 = vmatprep.subr.bf16.mxu0 %v1852
    %1902 = vmatpush1.bf16.msra.mxu0 %v1851
    %1903 = vmatprep.subr.bf16.mxu0 0
    %1904 = vmatpush1.bf16.msra.mxu0 0
    %1905 = vmatprep.subr.bf16.mxu0 0
    %1906 = vmatpush1.bf16.msra.mxu0 0
    %1907 = vmatprep.subr.bf16.mxu0 0
    %1908 = vmatpush1.bf16.msra.mxu0 0
    %1909 = vmatprep.subr.bf16.mxu0 0
    %1910 = vmatpush1.bf16.msra.mxu0 0
    %1911 = vmatprep.subr.bf16.mxu0 0
    %1912 = vmatpush1.bf16.msra.mxu0 0
    %1913 = vmatprep.subr.bf16.mxu0 0
    %1914 = vmatpush1.bf16.msra.mxu0 0
    %1915 = vmatprep.subr.bf16.mxu0 0
    %1916 = vmatpush1.bf16.msra.mxu0 0
    %1917 = vmatprep.subr.bf16.mxu0 0
    %1918 = vmatpush1.bf16.msra.mxu0 0
    %1919 = vmatprep.mubr.bf16.mxu0 0
    %1920 = vmatmul.mubr.bf16.gmra.mrb[0].mxu0 %v1694
    %v1921 = vpop.f32.mrb[0].mxu0
    %v1922 = vadd.f32 0.0, %v1921
    %v1923 = vpop.f32.mrb[0].mxu0
    %v1924 = vadd.f32 0.0, %v1923
    %v1925 = vpop.f32.mrb[0].mxu0
    %v1926 = vpop.f32.mrb[0].mxu0
    %1927 = vdwg.mxu0
    %1928 = vmatprep.subr.bf16.mxu0 %v1826
    %1929 = vmatpush1.bf16.msra.mxu0 %v1825
    %1930 = vmatprep.subr.bf16.mxu0 %v1830
    %1931 = vmatpush1.bf16.msra.mxu0 %v1829
    %1932 = vmatprep.subr.bf16.mxu0 %v1834
    %1933 = vmatpush1.bf16.msra.mxu0 %v1833
    %1934 = vmatprep.subr.bf16.mxu0 %v1838
    %1935 = vmatpush1.bf16.msra.mxu0 %v1837
    %1936 = vmatprep.subr.bf16.mxu0 %v1842
    %1937 = vmatpush1.bf16.msra.mxu0 %v1841
    %1938 = vmatprep.subr.bf16.mxu0 %v1846
    %1939 = vmatpush1.bf16.msra.mxu0 %v1845
    %1940 = vmatprep.subr.bf16.mxu0 %v1850
    %1941 = vmatpush1.bf16.msra.mxu0 %v1849
    %1942 = vmatprep.subr.bf16.mxu0 %v1854
    %1943 = vmatpush1.bf16.msra.mxu0 %v1853
    %1944 = vmatprep.subr.bf16.mxu0 0
    %1945 = vmatpush1.bf16.msra.mxu0 0
    %1946 = vmatprep.subr.bf16.mxu0 0
    %1947 = vmatpush1.bf16.msra.mxu0 0
    %1948 = vmatprep.subr.bf16.mxu0 0
    %1949 = vmatpush1.bf16.msra.mxu0 0
    %1950 = vmatprep.subr.bf16.mxu0 0
    %1951 = vmatpush1.bf16.msra.mxu0 0
    %1952 = vmatprep.subr.bf16.mxu0 0
    %1953 = vmatpush1.bf16.msra.mxu0 0
    %1954 = vmatprep.subr.bf16.mxu0 0
    %1955 = vmatpush1.bf16.msra.mxu0 0
    %1956 = vmatprep.subr.bf16.mxu0 0
    %1957 = vmatpush1.bf16.msra.mxu0 0
    %1958 = vmatprep.subr.bf16.mxu0 0
    %1959 = vmatpush1.bf16.msra.mxu0 0
    %1960 = vmatprep.mubr.bf16.mxu0 0
    %1961 = vmatmul.mubr.bf16.gmra.mrb[0].mxu0 %v1694
    %v1962 = vpop.f32.mrb[0].mxu0
    %v1963 = vadd.f32 0.0, %v1962
    %v1964 = vpop.f32.mrb[0].mxu0
    %v1965 = vadd.f32 0.0, %v1964
    %v1966 = vpop.f32.mrb[0].mxu0
    %v1967 = vpop.f32.mrb[0].mxu0
    %1968 = vdwg.mxu0
    %v1973 = vcombine.low %v1922, %v1924
    %v1974 = vcombine.low %v1963, %v1965
    %v1976 = vunpack.c.l.s4 1983009808
    %v1977 = vunpack.c.0.s8 %v1976
    %v1978 = vlaneseq
    %v1979 = vshrl.u32 %v1978, 7
    %v1980 = vsub.s32 %v1977, %v1979
    %v1981 = vrot.slane %v1973, %v1980
    %v1983 = vunpack.c.l.s4 1983009808
    %v1984 = vunpack.c.0.s8 %v1983
    %v1985 = vlaneseq
    %v1986 = vshrl.u32 %v1985, 7
    %v1987 = vsub.s32 %v1984, %v1986
    %v1988 = vrot.slane %v1974, %v1987
    %v1989 = vcombine.low %v1981, %v1988
    %v1991 = vadd.f32 %v1693, %v1989
    %v1992 = vmul.f32 %v1991, 0.5
    %v1993 = vtanh.pop %v1992
    %v1994 = vadd.f32 %v1993, 1.0
    %v1995 = vmul.f32 %v1994, 0.5
    %v1997 = vrot.slane %v1991, 2
    %v1999 = vmul.f32 %v1997, 0.5
    %v2000 = vtanh.pop %v1999
    %v2001 = vadd.f32 %v2000, 1.0
    %v2002 = vmul.f32 %v2001, 0.5
    %v2003 = vrot.slane %v1991, 4
    %v2005 = vtanh.pop %v2003
    %v2006 = vrot.slane %v1991, 6
    %v2008 = vmul.f32 %v2006, 0.5
    %v2009 = vtanh.pop %v2008
    %v2010 = vadd.f32 %v2009, 1.0
    %v2011 = vmul.f32 %v2010, 0.5
    %v2012 = vmul.f32 %v2002, %v1686
    %v2013 = vmul.f32 %v1995, %v2005
    %v2014 = vadd.f32 %v2012, %v2013
    %v2015 = vtanh.pop %v2014
    %v2016 = vmul.f32 %v2011, %v2015
    %s2017 = scalar_lea.vmem [#allocation9], 10
    %2018 = vst [vmem:[%s2017] sm:$0x3] %v2016
    %s2019 = scalar_lea.vmem [#allocation4], 24
    %v2020 = vld [vmem:[%s2019] sm:$0xf]
    %v2021 = vunpack.c.l.bf16 %v2020
    %v2022 = vpack.c.bf16 %v2016, %v2016
    %v2023 = vld [vmem:[#allocation7] sm:$0xff]
    %v2024 = vld [vmem:[#allocation7 + $0x8] sm:$0xff]
    %v2025 = vld [vmem:[#allocation7 + $0x10] sm:$0xff]
    %v2026 = vld [vmem:[#allocation7 + $0x18] sm:$0xff]
    %v2027 = vld [vmem:[#allocation7 + $0x20] sm:$0xff]
    %v2028 = vld [vmem:[#allocation7 + $0x28] sm:$0xff]
    %v2029 = vld [vmem:[#allocation7 + $0x30] sm:$0xff]
    %v2030 = vld [vmem:[#allocation7 + $0x38] sm:$0xff]
    %v2031 = vld [vmem:[#allocation7 + $0x40] sm:$0xff]
    %v2032 = vld [vmem:[#allocation7 + $0x48] sm:$0xff]
    %v2033 = vld [vmem:[#allocation7 + $0x50] sm:$0xff]
    %v2034 = vld [vmem:[#allocation7 + $0x58] sm:$0xff]
    %v2035 = vld [vmem:[#allocation7 + $0x60] sm:$0xff]
    %v2036 = vld [vmem:[#allocation7 + $0x68] sm:$0xff]
    %v2037 = vld [vmem:[#allocation7 + $0x70] sm:$0xff]
    %v2038 = vld [vmem:[#allocation7 + $0x78] sm:$0xff]
    %v2039 = vld [vmem:[#allocation7 + $0x80] sm:$0xff]
    %v2040 = vld [vmem:[#allocation7 + $0x88] sm:$0xff]
    %v2041 = vld [vmem:[#allocation7 + $0x90] sm:$0xff]
    %v2042 = vld [vmem:[#allocation7 + $0x98] sm:$0xff]
    %v2043 = vld [vmem:[#allocation7 + $0xa0] sm:$0xff]
    %v2044 = vld [vmem:[#allocation7 + $0xa8] sm:$0xff]
    %v2045 = vld [vmem:[#allocation7 + $0xb0] sm:$0xff]
    %v2046 = vld [vmem:[#allocation7 + $0xb8] sm:$0xff]
    %v2047 = vld [vmem:[#allocation7 + $0xc0] sm:$0xff]
    %v2048 = vld [vmem:[#allocation7 + $0xc8] sm:$0xff]
    %v2049 = vld [vmem:[#allocation7 + $0xd0] sm:$0xff]
    %v2050 = vld [vmem:[#allocation7 + $0xd8] sm:$0xff]
    %v2051 = vld [vmem:[#allocation7 + $0xe0] sm:$0xff]
    %v2052 = vld [vmem:[#allocation7 + $0xe8] sm:$0xff]
    %v2053 = vld [vmem:[#allocation7 + $0xf0] sm:$0xff]
    %v2054 = vld [vmem:[#allocation7 + $0xf8] sm:$0xff]
    %v2087 = vunpack.c.l.b16 %v2023
    %v2088 = vunpack.c.h.b16 %v2023
    %v2089 = vunpack.c.l.b16 %v2024
    %v2090 = vunpack.c.h.b16 %v2024
    %v2091 = vunpack.c.l.b16 %v2025
    %v2092 = vunpack.c.h.b16 %v2025
    %v2093 = vunpack.c.l.b16 %v2026
    %v2094 = vunpack.c.h.b16 %v2026
    %v2095 = vunpack.c.l.b16 %v2027
    %v2096 = vunpack.c.h.b16 %v2027
    %v2097 = vunpack.c.l.b16 %v2028
    %v2098 = vunpack.c.h.b16 %v2028
    %v2099 = vunpack.c.l.b16 %v2029
    %v2100 = vunpack.c.h.b16 %v2029
    %v2101 = vunpack.c.l.b16 %v2030
    %v2102 = vunpack.c.h.b16 %v2030
    %v2103 = vunpack.c.l.b16 %v2031
    %v2104 = vunpack.c.h.b16 %v2031
    %v2105 = vunpack.c.l.b16 %v2032
    %v2106 = vunpack.c.h.b16 %v2032
    %v2107 = vunpack.c.l.b16 %v2033
    %v2108 = vunpack.c.h.b16 %v2033
    %v2109 = vunpack.c.l.b16 %v2034
    %v2110 = vunpack.c.h.b16 %v2034
    %v2111 = vunpack.c.l.b16 %v2035
    %v2112 = vunpack.c.h.b16 %v2035
    %v2113 = vunpack.c.l.b16 %v2036
    %v2114 = vunpack.c.h.b16 %v2036
    %v2115 = vunpack.c.l.b16 %v2037
    %v2116 = vunpack.c.h.b16 %v2037
    %v2117 = vunpack.c.l.b16 %v2038
    %v2118 = vunpack.c.h.b16 %v2038
    %v2119 = vunpack.c.l.b16 %v2039
    %v2120 = vunpack.c.h.b16 %v2039
    %v2121 = vunpack.c.l.b16 %v2040
    %v2122 = vunpack.c.h.b16 %v2040
    %v2123 = vunpack.c.l.b16 %v2041
    %v2124 = vunpack.c.h.b16 %v2041
    %v2125 = vunpack.c.l.b16 %v2042
    %v2126 = vunpack.c.h.b16 %v2042
    %v2127 = vunpack.c.l.b16 %v2043
    %v2128 = vunpack.c.h.b16 %v2043
    %v2129 = vunpack.c.l.b16 %v2044
    %v2130 = vunpack.c.h.b16 %v2044
    %v2131 = vunpack.c.l.b16 %v2045
    %v2132 = vunpack.c.h.b16 %v2045
    %v2133 = vunpack.c.l.b16 %v2046
    %v2134 = vunpack.c.h.b16 %v2046
    %v2135 = vunpack.c.l.b16 %v2047
    %v2136 = vunpack.c.h.b16 %v2047
    %v2137 = vunpack.c.l.b16 %v2048
    %v2138 = vunpack.c.h.b16 %v2048
    %v2139 = vunpack.c.l.b16 %v2049
    %v2140 = vunpack.c.h.b16 %v2049
    %v2141 = vunpack.c.l.b16 %v2050
    %v2142 = vunpack.c.h.b16 %v2050
    %v2143 = vunpack.c.l.b16 %v2051
    %v2144 = vunpack.c.h.b16 %v2051
    %v2145 = vunpack.c.l.b16 %v2052
    %v2146 = vunpack.c.h.b16 %v2052
    %v2147 = vunpack.c.l.b16 %v2053
    %v2148 = vunpack.c.h.b16 %v2053
    %v2149 = vunpack.c.l.b16 %v2054
    %v2150 = vunpack.c.h.b16 %v2054
    %v2151 = vpack.c.b16 %v2091, %v2087
    %v2152 = vpack.c.b16 %v2092, %v2088
    %v2153 = vpack.c.b16 %v2093, %v2089
    %v2154 = vpack.c.b16 %v2094, %v2090
    %v2155 = vpack.c.b16 %v2099, %v2095
    %v2156 = vpack.c.b16 %v2100, %v2096
    %v2157 = vpack.c.b16 %v2101, %v2097
    %v2158 = vpack.c.b16 %v2102, %v2098
    %v2159 = vpack.c.b16 %v2107, %v2103
    %v2160 = vpack.c.b16 %v2108, %v2104
    %v2161 = vpack.c.b16 %v2109, %v2105
    %v2162 = vpack.c.b16 %v2110, %v2106
    %v2163 = vpack.c.b16 %v2115, %v2111
    %v2164 = vpack.c.b16 %v2116, %v2112
    %v2165 = vpack.c.b16 %v2117, %v2113
    %v2166 = vpack.c.b16 %v2118, %v2114
    %v2167 = vpack.c.b16 %v2123, %v2119
    %v2168 = vpack.c.b16 %v2124, %v2120
    %v2169 = vpack.c.b16 %v2125, %v2121
    %v2170 = vpack.c.b16 %v2126, %v2122
    %v2171 = vpack.c.b16 %v2131, %v2127
    %v2172 = vpack.c.b16 %v2132, %v2128
    %v2173 = vpack.c.b16 %v2133, %v2129
    %v2174 = vpack.c.b16 %v2134, %v2130
    %v2175 = vpack.c.b16 %v2139, %v2135
    %v2176 = vpack.c.b16 %v2140, %v2136
    %v2177 = vpack.c.b16 %v2141, %v2137
    %v2178 = vpack.c.b16 %v2142, %v2138
    %v2179 = vpack.c.b16 %v2147, %v2143
    %v2180 = vpack.c.b16 %v2148, %v2144
    %v2181 = vpack.c.b16 %v2149, %v2145
    %v2182 = vpack.c.b16 %v2150, %v2146
    %2215 = vmatprep.subr.bf16.mxu0 %v2152
    %2216 = vmatpush1.bf16.msra.mxu0 %v2151
    %2217 = vmatprep.subr.bf16.mxu0 %v2156
    %2218 = vmatpush1.bf16.msra.mxu0 %v2155
    %2219 = vmatprep.subr.bf16.mxu0 %v2160
    %2220 = vmatpush1.bf16.msra.mxu0 %v2159
    %2221 = vmatprep.subr.bf16.mxu0 %v2164
    %2222 = vmatpush1.bf16.msra.mxu0 %v2163
    %2223 = vmatprep.subr.bf16.mxu0 %v2168
    %2224 = vmatpush1.bf16.msra.mxu0 %v2167
    %2225 = vmatprep.subr.bf16.mxu0 %v2172
    %2226 = vmatpush1.bf16.msra.mxu0 %v2171
    %2227 = vmatprep.subr.bf16.mxu0 %v2176
    %2228 = vmatpush1.bf16.msra.mxu0 %v2175
    %2229 = vmatprep.subr.bf16.mxu0 %v2180
    %2230 = vmatpush1.bf16.msra.mxu0 %v2179
    %2231 = vmatprep.subr.bf16.mxu0 0
    %2232 = vmatpush1.bf16.msra.mxu0 0
    %2233 = vmatprep.subr.bf16.mxu0 0
    %2234 = vmatpush1.bf16.msra.mxu0 0
    %2235 = vmatprep.subr.bf16.mxu0 0
    %2236 = vmatpush1.bf16.msra.mxu0 0
    %2237 = vmatprep.subr.bf16.mxu0 0
    %2238 = vmatpush1.bf16.msra.mxu0 0
    %2239 = vmatprep.subr.bf16.mxu0 0
    %2240 = vmatpush1.bf16.msra.mxu0 0
    %2241 = vmatprep.subr.bf16.mxu0 0
    %2242 = vmatpush1.bf16.msra.mxu0 0
    %2243 = vmatprep.subr.bf16.mxu0 0
    %2244 = vmatpush1.bf16.msra.mxu0 0
    %2245 = vmatprep.subr.bf16.mxu0 0
    %2246 = vmatpush1.bf16.msra.mxu0 0
    %2247 = vmatprep.mubr.bf16.mxu0 0
    %2248 = vmatmul.mubr.bf16.gmra.mrb[0].mxu0 %v2022
    %v2249 = vpop.f32.mrb[0].mxu0
    %v2250 = vadd.f32 0.0, %v2249
    %v2251 = vpop.f32.mrb[0].mxu0
    %v2252 = vadd.f32 0.0, %v2251
    %v2253 = vpop.f32.mrb[0].mxu0
    %v2254 = vpop.f32.mrb[0].mxu0
    %2255 = vdwg.mxu0
    %2256 = vmatprep.subr.bf16.mxu0 %v2154
    %2257 = vmatpush1.bf16.msra.mxu0 %v2153
    %2258 = vmatprep.subr.bf16.mxu0 %v2158
    %2259 = vmatpush1.bf16.msra.mxu0 %v2157
    %2260 = vmatprep.subr.bf16.mxu0 %v2162
    %2261 = vmatpush1.bf16.msra.mxu0 %v2161
    %2262 = vmatprep.subr.bf16.mxu0 %v2166
    %2263 = vmatpush1.bf16.msra.mxu0 %v2165
    %2264 = vmatprep.subr.bf16.mxu0 %v2170
    %2265 = vmatpush1.bf16.msra.mxu0 %v2169
    %2266 = vmatprep.subr.bf16.mxu0 %v2174
    %2267 = vmatpush1.bf16.msra.mxu0 %v2173
    %2268 = vmatprep.subr.bf16.mxu0 %v2178
    %2269 = vmatpush1.bf16.msra.mxu0 %v2177
    %2270 = vmatprep.subr.bf16.mxu0 %v2182
    %2271 = vmatpush1.bf16.msra.mxu0 %v2181
    %2272 = vmatprep.subr.bf16.mxu0 0
    %2273 = vmatpush1.bf16.msra.mxu0 0
    %2274 = vmatprep.subr.bf16.mxu0 0
    %2275 = vmatpush1.bf16.msra.mxu0 0
    %2276 = vmatprep.subr.bf16.mxu0 0
    %2277 = vmatpush1.bf16.msra.mxu0 0
    %2278 = vmatprep.subr.bf16.mxu0 0
    %2279 = vmatpush1.bf16.msra.mxu0 0
    %2280 = vmatprep.subr.bf16.mxu0 0
    %2281 = vmatpush1.bf16.msra.mxu0 0
    %2282 = vmatprep.subr.bf16.mxu0 0
    %2283 = vmatpush1.bf16.msra.mxu0 0
    %2284 = vmatprep.subr.bf16.mxu0 0
    %2285 = vmatpush1.bf16.msra.mxu0 0
    %2286 = vmatprep.subr.bf16.mxu0 0
    %2287 = vmatpush1.bf16.msra.mxu0 0
    %2288 = vmatprep.mubr.bf16.mxu0 0
    %2289 = vmatmul.mubr.bf16.gmra.mrb[0].mxu0 %v2022
    %v2290 = vpop.f32.mrb[0].mxu0
    %v2291 = vadd.f32 0.0, %v2290
    %v2292 = vpop.f32.mrb[0].mxu0
    %v2293 = vadd.f32 0.0, %v2292
    %v2294 = vpop.f32.mrb[0].mxu0
    %v2295 = vpop.f32.mrb[0].mxu0
    %2296 = vdwg.mxu0
    %v2301 = vcombine.low %v2250, %v2252
    %v2302 = vcombine.low %v2291, %v2293
    %v2304 = vunpack.c.l.s4 1983009808
    %v2305 = vunpack.c.0.s8 %v2304
    %v2306 = vlaneseq
    %v2307 = vshrl.u32 %v2306, 7
    %v2308 = vsub.s32 %v2305, %v2307
    %v2309 = vrot.slane %v2301, %v2308
    %v2311 = vunpack.c.l.s4 1983009808
    %v2312 = vunpack.c.0.s8 %v2311
    %v2313 = vlaneseq
    %v2314 = vshrl.u32 %v2313, 7
    %v2315 = vsub.s32 %v2312, %v2314
    %v2316 = vrot.slane %v2302, %v2315
    %v2317 = vcombine.low %v2309, %v2316
    %v2319 = vadd.f32 %v2021, %v2317
    %v2320 = vmul.f32 %v2319, 0.5
    %v2321 = vtanh.pop %v2320
    %v2322 = vadd.f32 %v2321, 1.0
    %v2323 = vmul.f32 %v2322, 0.5
    %v2325 = vrot.slane %v2319, 2
    %v2327 = vmul.f32 %v2325, 0.5
    %v2328 = vtanh.pop %v2327
    %v2329 = vadd.f32 %v2328, 1.0
    %v2330 = vmul.f32 %v2329, 0.5
    %v2331 = vrot.slane %v2319, 4
    %v2333 = vtanh.pop %v2331
    %v2334 = vrot.slane %v2319, 6
    %v2336 = vmul.f32 %v2334, 0.5
    %v2337 = vtanh.pop %v2336
    %v2338 = vadd.f32 %v2337, 1.0
    %v2339 = vmul.f32 %v2338, 0.5
    %v2340 = vmul.f32 %v2330, %v2014
    %v2341 = vmul.f32 %v2323, %v2333
    %v2342 = vadd.f32 %v2340, %v2341
    %v2343 = vtanh.pop %v2342
    %v2344 = vmul.f32 %v2339, %v2343
    %s2345 = scalar_lea.vmem [#allocation9], 12
    %2346 = vst [vmem:[%s2345] sm:$0x3] %v2344
    %s2347 = scalar_lea.vmem [#allocation4], 28
    %v2348 = vld [vmem:[%s2347] sm:$0xf]
    %v2349 = vunpack.c.l.bf16 %v2348
    %v2350 = vpack.c.bf16 %v2344, %v2344
    %v2351 = vld [vmem:[#allocation7] sm:$0xff]
    %v2352 = vld [vmem:[#allocation7 + $0x8] sm:$0xff]
    %v2353 = vld [vmem:[#allocation7 + $0x10] sm:$0xff]
    %v2354 = vld [vmem:[#allocation7 + $0x18] sm:$0xff]
    %v2355 = vld [vmem:[#allocation7 + $0x20] sm:$0xff]
    %v2356 = vld [vmem:[#allocation7 + $0x28] sm:$0xff]
    %v2357 = vld [vmem:[#allocation7 + $0x30] sm:$0xff]
    %v2358 = vld [vmem:[#allocation7 + $0x38] sm:$0xff]
    %v2359 = vld [vmem:[#allocation7 + $0x40] sm:$0xff]
    %v2360 = vld [vmem:[#allocation7 + $0x48] sm:$0xff]
    %v2361 = vld [vmem:[#allocation7 + $0x50] sm:$0xff]
    %v2362 = vld [vmem:[#allocation7 + $0x58] sm:$0xff]
    %v2363 = vld [vmem:[#allocation7 + $0x60] sm:$0xff]
    %v2364 = vld [vmem:[#allocation7 + $0x68] sm:$0xff]
    %v2365 = vld [vmem:[#allocation7 + $0x70] sm:$0xff]
    %v2366 = vld [vmem:[#allocation7 + $0x78] sm:$0xff]
    %v2367 = vld [vmem:[#allocation7 + $0x80] sm:$0xff]
    %v2368 = vld [vmem:[#allocation7 + $0x88] sm:$0xff]
    %v2369 = vld [vmem:[#allocation7 + $0x90] sm:$0xff]
    %v2370 = vld [vmem:[#allocation7 + $0x98] sm:$0xff]
    %v2371 = vld [vmem:[#allocation7 + $0xa0] sm:$0xff]
    %v2372 = vld [vmem:[#allocation7 + $0xa8] sm:$0xff]
    %v2373 = vld [vmem:[#allocation7 + $0xb0] sm:$0xff]
    %v2374 = vld [vmem:[#allocation7 + $0xb8] sm:$0xff]
    %v2375 = vld [vmem:[#allocation7 + $0xc0] sm:$0xff]
    %v2376 = vld [vmem:[#allocation7 + $0xc8] sm:$0xff]
    %v2377 = vld [vmem:[#allocation7 + $0xd0] sm:$0xff]
    %v2378 = vld [vmem:[#allocation7 + $0xd8] sm:$0xff]
    %v2379 = vld [vmem:[#allocation7 + $0xe0] sm:$0xff]
    %v2380 = vld [vmem:[#allocation7 + $0xe8] sm:$0xff]
    %v2381 = vld [vmem:[#allocation7 + $0xf0] sm:$0xff]
    %v2382 = vld [vmem:[#allocation7 + $0xf8] sm:$0xff]
    %v2415 = vunpack.c.l.b16 %v2351
    %v2416 = vunpack.c.h.b16 %v2351
    %v2417 = vunpack.c.l.b16 %v2352
    %v2418 = vunpack.c.h.b16 %v2352
    %v2419 = vunpack.c.l.b16 %v2353
    %v2420 = vunpack.c.h.b16 %v2353
    %v2421 = vunpack.c.l.b16 %v2354
    %v2422 = vunpack.c.h.b16 %v2354
    %v2423 = vunpack.c.l.b16 %v2355
    %v2424 = vunpack.c.h.b16 %v2355
    %v2425 = vunpack.c.l.b16 %v2356
    %v2426 = vunpack.c.h.b16 %v2356
    %v2427 = vunpack.c.l.b16 %v2357
    %v2428 = vunpack.c.h.b16 %v2357
    %v2429 = vunpack.c.l.b16 %v2358
    %v2430 = vunpack.c.h.b16 %v2358
    %v2431 = vunpack.c.l.b16 %v2359
    %v2432 = vunpack.c.h.b16 %v2359
    %v2433 = vunpack.c.l.b16 %v2360
    %v2434 = vunpack.c.h.b16 %v2360
    %v2435 = vunpack.c.l.b16 %v2361
    %v2436 = vunpack.c.h.b16 %v2361
    %v2437 = vunpack.c.l.b16 %v2362
    %v2438 = vunpack.c.h.b16 %v2362
    %v2439 = vunpack.c.l.b16 %v2363
    %v2440 = vunpack.c.h.b16 %v2363
    %v2441 = vunpack.c.l.b16 %v2364
    %v2442 = vunpack.c.h.b16 %v2364
    %v2443 = vunpack.c.l.b16 %v2365
    %v2444 = vunpack.c.h.b16 %v2365
    %v2445 = vunpack.c.l.b16 %v2366
    %v2446 = vunpack.c.h.b16 %v2366
    %v2447 = vunpack.c.l.b16 %v2367
    %v2448 = vunpack.c.h.b16 %v2367
    %v2449 = vunpack.c.l.b16 %v2368
    %v2450 = vunpack.c.h.b16 %v2368
    %v2451 = vunpack.c.l.b16 %v2369
    %v2452 = vunpack.c.h.b16 %v2369
    %v2453 = vunpack.c.l.b16 %v2370
    %v2454 = vunpack.c.h.b16 %v2370
    %v2455 = vunpack.c.l.b16 %v2371
    %v2456 = vunpack.c.h.b16 %v2371
    %v2457 = vunpack.c.l.b16 %v2372
    %v2458 = vunpack.c.h.b16 %v2372
    %v2459 = vunpack.c.l.b16 %v2373
    %v2460 = vunpack.c.h.b16 %v2373
    %v2461 = vunpack.c.l.b16 %v2374
    %v2462 = vunpack.c.h.b16 %v2374
    %v2463 = vunpack.c.l.b16 %v2375
    %v2464 = vunpack.c.h.b16 %v2375
    %v2465 = vunpack.c.l.b16 %v2376
    %v2466 = vunpack.c.h.b16 %v2376
    %v2467 = vunpack.c.l.b16 %v2377
    %v2468 = vunpack.c.h.b16 %v2377
    %v2469 = vunpack.c.l.b16 %v2378
    %v2470 = vunpack.c.h.b16 %v2378
    %v2471 = vunpack.c.l.b16 %v2379
    %v2472 = vunpack.c.h.b16 %v2379
    %v2473 = vunpack.c.l.b16 %v2380
    %v2474 = vunpack.c.h.b16 %v2380
    %v2475 = vunpack.c.l.b16 %v2381
    %v2476 = vunpack.c.h.b16 %v2381
    %v2477 = vunpack.c.l.b16 %v2382
    %v2478 = vunpack.c.h.b16 %v2382
    %v2479 = vpack.c.b16 %v2419, %v2415
    %v2480 = vpack.c.b16 %v2420, %v2416
    %v2481 = vpack.c.b16 %v2421, %v2417
    %v2482 = vpack.c.b16 %v2422, %v2418
    %v2483 = vpack.c.b16 %v2427, %v2423
    %v2484 = vpack.c.b16 %v2428, %v2424
    %v2485 = vpack.c.b16 %v2429, %v2425
    %v2486 = vpack.c.b16 %v2430, %v2426
    %v2487 = vpack.c.b16 %v2435, %v2431
    %v2488 = vpack.c.b16 %v2436, %v2432
    %v2489 = vpack.c.b16 %v2437, %v2433
    %v2490 = vpack.c.b16 %v2438, %v2434
    %v2491 = vpack.c.b16 %v2443, %v2439
    %v2492 = vpack.c.b16 %v2444, %v2440
    %v2493 = vpack.c.b16 %v2445, %v2441
    %v2494 = vpack.c.b16 %v2446, %v2442
    %v2495 = vpack.c.b16 %v2451, %v2447
    %v2496 = vpack.c.b16 %v2452, %v2448
    %v2497 = vpack.c.b16 %v2453, %v2449
    %v2498 = vpack.c.b16 %v2454, %v2450
    %v2499 = vpack.c.b16 %v2459, %v2455
    %v2500 = vpack.c.b16 %v2460, %v2456
    %v2501 = vpack.c.b16 %v2461, %v2457
    %v2502 = vpack.c.b16 %v2462, %v2458
    %v2503 = vpack.c.b16 %v2467, %v2463
    %v2504 = vpack.c.b16 %v2468, %v2464
    %v2505 = vpack.c.b16 %v2469, %v2465
    %v2506 = vpack.c.b16 %v2470, %v2466
    %v2507 = vpack.c.b16 %v2475, %v2471
    %v2508 = vpack.c.b16 %v2476, %v2472
    %v2509 = vpack.c.b16 %v2477, %v2473
    %v2510 = vpack.c.b16 %v2478, %v2474
    %2543 = vmatprep.subr.bf16.mxu0 %v2480
    %2544 = vmatpush1.bf16.msra.mxu0 %v2479
    %2545 = vmatprep.subr.bf16.mxu0 %v2484
    %2546 = vmatpush1.bf16.msra.mxu0 %v2483
    %2547 = vmatprep.subr.bf16.mxu0 %v2488
    %2548 = vmatpush1.bf16.msra.mxu0 %v2487
    %2549 = vmatprep.subr.bf16.mxu0 %v2492
    %2550 = vmatpush1.bf16.msra.mxu0 %v2491
    %2551 = vmatprep.subr.bf16.mxu0 %v2496
    %2552 = vmatpush1.bf16.msra.mxu0 %v2495
    %2553 = vmatprep.subr.bf16.mxu0 %v2500
    %2554 = vmatpush1.bf16.msra.mxu0 %v2499
    %2555 = vmatprep.subr.bf16.mxu0 %v2504
    %2556 = vmatpush1.bf16.msra.mxu0 %v2503
    %2557 = vmatprep.subr.bf16.mxu0 %v2508
    %2558 = vmatpush1.bf16.msra.mxu0 %v2507
    %2559 = vmatprep.subr.bf16.mxu0 0
    %2560 = vmatpush1.bf16.msra.mxu0 0
    %2561 = vmatprep.subr.bf16.mxu0 0
    %2562 = vmatpush1.bf16.msra.mxu0 0
    %2563 = vmatprep.subr.bf16.mxu0 0
    %2564 = vmatpush1.bf16.msra.mxu0 0
    %2565 = vmatprep.subr.bf16.mxu0 0
    %2566 = vmatpush1.bf16.msra.mxu0 0
    %2567 = vmatprep.subr.bf16.mxu0 0
    %2568 = vmatpush1.bf16.msra.mxu0 0
    %2569 = vmatprep.subr.bf16.mxu0 0
    %2570 = vmatpush1.bf16.msra.mxu0 0
    %2571 = vmatprep.subr.bf16.mxu0 0
    %2572 = vmatpush1.bf16.msra.mxu0 0
    %2573 = vmatprep.subr.bf16.mxu0 0
    %2574 = vmatpush1.bf16.msra.mxu0 0
    %2575 = vmatprep.mubr.bf16.mxu0 0
    %2576 = vmatmul.mubr.bf16.gmra.mrb[0].mxu0 %v2350
    %v2577 = vpop.f32.mrb[0].mxu0
    %v2578 = vadd.f32 0.0, %v2577
    %v2579 = vpop.f32.mrb[0].mxu0
    %v2580 = vadd.f32 0.0, %v2579
    %v2581 = vpop.f32.mrb[0].mxu0
    %v2582 = vpop.f32.mrb[0].mxu0
    %2583 = vdwg.mxu0
    %2584 = vmatprep.subr.bf16.mxu0 %v2482
    %2585 = vmatpush1.bf16.msra.mxu0 %v2481
    %2586 = vmatprep.subr.bf16.mxu0 %v2486
    %2587 = vmatpush1.bf16.msra.mxu0 %v2485
    %2588 = vmatprep.subr.bf16.mxu0 %v2490
    %2589 = vmatpush1.bf16.msra.mxu0 %v2489
    %2590 = vmatprep.subr.bf16.mxu0 %v2494
    %2591 = vmatpush1.bf16.msra.mxu0 %v2493
    %2592 = vmatprep.subr.bf16.mxu0 %v2498
    %2593 = vmatpush1.bf16.msra.mxu0 %v2497
    %2594 = vmatprep.subr.bf16.mxu0 %v2502
    %2595 = vmatpush1.bf16.msra.mxu0 %v2501
    %2596 = vmatprep.subr.bf16.mxu0 %v2506
    %2597 = vmatpush1.bf16.msra.mxu0 %v2505
    %2598 = vmatprep.subr.bf16.mxu0 %v2510
    %2599 = vmatpush1.bf16.msra.mxu0 %v2509
    %2600 = vmatprep.subr.bf16.mxu0 0
    %2601 = vmatpush1.bf16.msra.mxu0 0
    %2602 = vmatprep.subr.bf16.mxu0 0
    %2603 = vmatpush1.bf16.msra.mxu0 0
    %2604 = vmatprep.subr.bf16.mxu0 0
    %2605 = vmatpush1.bf16.msra.mxu0 0
    %2606 = vmatprep.subr.bf16.mxu0 0
    %2607 = vmatpush1.bf16.msra.mxu0 0
    %2608 = vmatprep.subr.bf16.mxu0 0
    %2609 = vmatpush1.bf16.msra.mxu0 0
    %2610 = vmatprep.subr.bf16.mxu0 0
    %2611 = vmatpush1.bf16.msra.mxu0 0
    %2612 = vmatprep.subr.bf16.mxu0 0
    %2613 = vmatpush1.bf16.msra.mxu0 0
    %2614 = vmatprep.subr.bf16.mxu0 0
    %2615 = vmatpush1.bf16.msra.mxu0 0
    %2616 = vmatprep.mubr.bf16.mxu0 0
    %2617 = vmatmul.mubr.bf16.gmra.mrb[0].mxu0 %v2350
    %v2618 = vpop.f32.mrb[0].mxu0
    %v2619 = vadd.f32 0.0, %v2618
    %v2620 = vpop.f32.mrb[0].mxu0
    %v2621 = vadd.f32 0.0, %v2620
    %v2622 = vpop.f32.mrb[0].mxu0
    %v2623 = vpop.f32.mrb[0].mxu0
    %2624 = vdwg.mxu0
    %v2629 = vcombine.low %v2578, %v2580
    %v2630 = vcombine.low %v2619, %v2621
    %v2632 = vunpack.c.l.s4 1983009808
    %v2633 = vunpack.c.0.s8 %v2632
    %v2634 = vlaneseq
    %v2635 = vshrl.u32 %v2634, 7
    %v2636 = vsub.s32 %v2633, %v2635
    %v2637 = vrot.slane %v2629, %v2636
    %v2639 = vunpack.c.l.s4 1983009808
    %v2640 = vunpack.c.0.s8 %v2639
    %v2641 = vlaneseq
    %v2642 = vshrl.u32 %v2641, 7
    %v2643 = vsub.s32 %v2640, %v2642
    %v2644 = vrot.slane %v2630, %v2643
    %v2645 = vcombine.low %v2637, %v2644
    %v2647 = vadd.f32 %v2349, %v2645
    %v2648 = vmul.f32 %v2647, 0.5
    %v2649 = vtanh.pop %v2648
    %v2650 = vadd.f32 %v2649, 1.0
    %v2651 = vmul.f32 %v2650, 0.5
    %v2653 = vrot.slane %v2647, 2
    %v2655 = vmul.f32 %v2653, 0.5
    %v2656 = vtanh.pop %v2655
    %v2657 = vadd.f32 %v2656, 1.0
    %v2658 = vmul.f32 %v2657, 0.5
    %v2659 = vrot.slane %v2647, 4
    %v2661 = vtanh.pop %v2659
    %v2662 = vrot.slane %v2647, 6
    %v2664 = vmul.f32 %v2662, 0.5
    %v2665 = vtanh.pop %v2664
    %v2666 = vadd.f32 %v2665, 1.0
    %v2667 = vmul.f32 %v2666, 0.5
    %v2668 = vmul.f32 %v2658, %v2342
    %v2669 = vmul.f32 %v2651, %v2661
    %v2670 = vadd.f32 %v2668, %v2669
    %v2671 = vtanh.pop %v2670
    %v2672 = vmul.f32 %v2667, %v2671
    %s2673 = scalar_lea.vmem [#allocation9], 14
    %2674 = vst [vmem:[%s2673] sm:$0x3] %v2672
    %2675 = vst [vmem:[#allocation2] sm:$0x3] %v2672
    %2676 = vst [vmem:[#allocation3] sm:$0x3] %v2670
    // Predicated region
    $region22: #{tpu_custom_call.1} parent=1 // pred_check
      %p2677 = pneg %p45
    $region23: #{tpu_custom_call.1} parent=1 // pred_check_branch
      %2679 = sbr.rel (%p2677) target = $region25
    $region24: #{tpu_custom_call.1} parent=1 // pred_region
      %2680 = vst [vmem:[#allocation10] sm:$0x3] %v2672
      %2681 = vst [vmem:[#allocation12] sm:$0x3] %v2670
    $region25: #{tpu_custom_call.1} parent=1 // pred_fallthru
      _
    // Predicated region
    $region26: #{tpu_custom_call.1} parent=1 // pred_check
      _
    $region27: #{tpu_custom_call.1} parent=1 // pred_check_branch
      %2683 = sbr.rel (0) target = $region29
    $region28: #{tpu_custom_call.1} parent=1 // pred_region
      %s2685 = ssub.s32 256, 256
      %2686 = vsyncadd [#allocation6], %s2685
      %s2687 = sshll.u32 [#allocation9], 4
      %s2688 = int_to_ptr.vmem [resolvable:$true] %s2687
      %2693 = dma.vmem_to_hbm [thread:$0]  %s2688, 256, %s2, [#allocation6], 32, 32, 2
    $region29: #{tpu_custom_call.1} parent=1 // pred_fallthru
      _
    // Predicated region
    $region30: #{tpu_custom_call.1} parent=1 // pred_check
      _
    $region31: #{tpu_custom_call.1} parent=1 // pred_check_branch
      %2695 = sbr.rel (0) target = $region33
    $region32: #{tpu_custom_call.1} parent=1 // pred_region
      %s2697 = ssub.s32 32, 32
      %2698 = vsyncadd [#allocation11], %s2697
      %s2700 = sshll.u32 [#allocation10], 4
      %s2701 = int_to_ptr.vmem [resolvable:$true] %s2700
      %2703 = dma.vmem_to_hbm [thread:$0]  %s2701, 32, %s3, [#allocation11]
    $region33: #{tpu_custom_call.1} parent=1 // pred_fallthru
      _
    // Predicated region
    $region34: #{tpu_custom_call.1} parent=1 // pred_check
      _
    $region35: #{tpu_custom_call.1} parent=1 // pred_check_branch
      %2705 = sbr.rel (0) target = $region37
    $region36: #{tpu_custom_call.1} parent=1 // pred_region
      %s2707 = ssub.s32 32, 32
      %2708 = vsyncadd [#allocation11], %s2707
      %s2710 = sshll.u32 [#allocation12], 4
      %s2711 = int_to_ptr.vmem [resolvable:$true] %s2710
      %2713 = dma.vmem_to_hbm [thread:$0]  %s2711, 32, %s4, [#allocation11]
    $region37: #{tpu_custom_call.1} parent=1 // pred_fallthru
      _
    // Predicated region
    $region38: #{tpu_custom_call.1} parent=1 // pred_check
      _
    $region39: #{tpu_custom_call.1} parent=1 // pred_check_branch
      %2715 = sbr.rel (0) target = $region41
    $region40: #{tpu_custom_call.1} parent=1 // pred_region
      %2716 = dma.done [#allocation6], 256
    $region41: #{tpu_custom_call.1} parent=1 // pred_fallthru
      _
    // Predicated region
    $region42: #{tpu_custom_call.1} parent=1 // pred_check
      _
    $region43: #{tpu_custom_call.1} parent=1 // pred_check_branch
      %2718 = sbr.rel (0) target = $region45
    $region44: #{tpu_custom_call.1} parent=1 // pred_region
      %2719 = dma.done [#allocation11], 32
    $region45: #{tpu_custom_call.1} parent=1 // pred_fallthru
      _
    // Predicated region
    $region46: #{tpu_custom_call.1} parent=1 // pred_check
      _
    $region47: #{tpu_custom_call.1} parent=1 // pred_check_branch
      %2721 = sbr.rel (0) target = $region49
    $region48: #{tpu_custom_call.1} parent=1 // pred_region
      %2722 = dma.done [#allocation11], 32
    $region49: #{tpu_custom_call.1} parent=1 // pred_fallthru
      _
    %2723 = vsyncpa [#allocation5], 1
    %2724 = vsyncpa [#allocation8], 1
    %2725 = vsyncpa [#allocation6], 1
    %2726 = vsyncpa [#allocation11], 1

// kernel: tpu_custom_call.1
$region0: #{tpu_custom_call.1}
  #allocation0 [shape = 'u32[]', space=smem, size = 0x4, offset = 0x4, fixed_abs, tag = 'smem constant byte address 0x4 - core index']
  #allocation1 [shape = 'u32[144,128]{1,0:T(1,128)}', space=vmem, size = 0x12000, scoped, tag = 'internal scratch']
  #allocation2 [shape = 'f32[2,128]{1,0:T(2,128)}', space=vmem, size = 0x400, scoped, tag = 'scratch operand']
  #allocation3 [shape = 'f32[2,128]{1,0:T(2,128)}', space=vmem, size = 0x400, scoped, tag = 'scratch operand']
  %s0 = inlined_call_operand.hbm [shape: bf16[8,2,512], index: 0, kind: input, shape index: {}]
  %s1 = inlined_call_operand.hbm [shape: bf16[128,512], index: 1, kind: input, shape index: {}]
  %s2 = inlined_call_operand.hbm [shape: f32[8,2,128], index: 2, kind: output, shape index: {0}]
  %s3 = inlined_call_operand.hbm [shape: f32[2,128], index: 3, kind: output, shape index: {1}]
  %s4 = inlined_call_operand.hbm [shape: f32[2,128], index: 4, kind: output, shape index: {2}]
  %5 = xla_tuple %s2, %s3, %s4
  %s6 = sld [smem:[#allocation0]]
  $region50: #{tpu_custom_call.1} parent=0
    _
  %s8 = ssub.s32 1, %s6
  %s9 = scalar_select 0, %s8, %s6
  $region1: #{tpu_custom_call.1} parent=0
    #allocation4 [shape = 'u8[16384]{0}', space=vmem, size = 0x4000, scoped, tag = 'input window, operand 0, single buffered']
    #allocation5 [shape = 's32[1]{0}', space=sflag, size = 0x4, scoped, tag = 'scoped memory for tpu_custom_call.1']
    #allocation6 [shape = 's32[1]{0}', space=sflag, size = 0x4, scoped, tag = 'scoped memory for tpu_custom_call.1']
    #allocation7 [shape = 'u8[131072]{0}', space=vmem, size = 0x20000, scoped, tag = 'input window, operand 1, single buffered']
    #allocation8 [shape = 's32[1]{0}', space=sflag, size = 0x4, scoped, tag = 'scoped memory for tpu_custom_call.1']
    #allocation9 [shape = 'u8[8192]{0}', space=vmem, size = 0x2000, scoped, tag = 'output window, operand 0, single buffered']
    #allocation10 [shape = 'u8[1024]{0}', space=vmem, size = 0x400, scoped, tag = 'output window, operand 1, single buffered']
    #allocation11 [shape = 's32[1]{0}', space=sflag, size = 0x4, scoped, tag = 'scoped memory for tpu_custom_call.1']
    #allocation12 [shape = 'u8[1024]{0}', space=vmem, size = 0x400, scoped, tag = 'output window, operand 2, single buffered']
    %10 = vsyncpa [#allocation5], 0
    %11 = vsyncpa [#allocation8], 0
    %12 = vsyncpa [#allocation6], 0
    %13 = vsyncpa [#allocation11], 0
    // Predicated region
    $region2: #{tpu_custom_call.1} parent=1 // pred_check
      _
    $region3: #{tpu_custom_call.1} parent=1 // pred_check_branch
      %15 = sbr.rel (0) target = $region5
    $region4: #{tpu_custom_call.1} parent=1 // pred_region
      %s17 = ssub.s32 512, 512
      %18 = vsyncadd [#allocation5], %s17
      %s19 = sshll.u32 [#allocation4], 4
      %s20 = int_to_ptr.vmem [resolvable:$true] %s19
      %25 = dma.hbm_to_vmem [thread:$0]  %s0, 512, %s20, [#allocation5], 64, 64, 4
    $region5: #{tpu_custom_call.1} parent=1 // pred_fallthru
      _
    // Predicated region
    $region6: #{tpu_custom_call.1} parent=1 // pred_check
      _
    $region7: #{tpu_custom_call.1} parent=1 // pred_check_branch
      %27 = sbr.rel (0) target = $region9
    $region8: #{tpu_custom_call.1} parent=1 // pred_region
      %s29 = ssub.s32 4096, 4096
      %30 = vsyncadd [#allocation8], %s29
      %s31 = sshll.u32 [#allocation7], 4
      %s32 = int_to_ptr.vmem [resolvable:$true] %s31
      %37 = dma.hbm_to_vmem [thread:$0]  %s1, 4096, %s32, [#allocation8], 256, 256, 16
    $region9: #{tpu_custom_call.1} parent=1 // pred_fallthru
      _
    // Predicated region
    $region10: #{tpu_custom_call.1} parent=1 // pred_check
      _
    $region11: #{tpu_custom_call.1} parent=1 // pred_check_branch
      %39 = sbr.rel (0) target = $region13
    $region12: #{tpu_custom_call.1} parent=1 // pred_region
      %40 = dma.done [#allocation5], 512
    $region13: #{tpu_custom_call.1} parent=1 // pred_fallthru
      _
    // Predicated region
    $region14: #{tpu_custom_call.1} parent=1 // pred_check
      _
    $region15: #{tpu_custom_call.1} parent=1 // pred_check_branch
      %42 = sbr.rel (0) target = $region17
    $region16: #{tpu_custom_call.1} parent=1 // pred_region
      %43 = dma.done [#allocation8], 4096
    $region17: #{tpu_custom_call.1} parent=1 // pred_fallthru
      _
    %p45 = scmp.eq.s32.totalorder 0, 0
    // Predicated region
    $region18: #{tpu_custom_call.1} parent=1 // pred_check
      %p46 = pneg %p45
    $region19: #{tpu_custom_call.1} parent=1 // pred_check_branch
      %48 = sbr.rel (%p46) target = $region21
    $region20: #{tpu_custom_call.1} parent=1 // pred_region
      %49 = vst [vmem:[#allocation2] sm:$0x3] 0.0
      %50 = vst [vmem:[#allocation3] sm:$0x3] 0.0
    $region21: #{tpu_custom_call.1} parent=1 // pred_fallthru
      _
    %v51 = vld [vmem:[#allocation2] sm:$0x3]
    %v52 = vld [vmem:[#allocation3] sm:$0x3]
    %v53 = vld [vmem:[#allocation4] sm:$0xf]
    %v54 = vunpack.c.l.bf16 %v53
    %v55 = vpack.c.bf16 %v51, %v51
    %v56 = vld [vmem:[#allocation7] sm:$0xff]
    %v57 = vld [vmem:[#allocation7 + $0x8] sm:$0xff]
    %v58 = vld [vmem:[#allocation7 + $0x10] sm:$0xff]
    %v59 = vld [vmem:[#allocation7 + $0x18] sm:$0xff]
    %v60 = vld [vmem:[#allocation7 + $0x20] sm:$0xff]
    %v61 = vld [vmem:[#allocation7 + $0x28] sm:$0xff]
    %v62 = vld [vmem:[#allocation7 + $0x30] sm:$0xff]
    %v63 = vld [vmem:[#allocation7 + $0x38] sm:$0xff]
    %v64 = vld [vmem:[#allocation7 + $0x40] sm:$0xff]
    %v65 = vld [vmem:[#allocation7 + $0x48] sm:$0xff]
    %v66 = vld [vmem:[#allocation7 + $0x50] sm:$0xff]
    %v67 = vld [vmem:[#allocation7 + $0x58] sm:$0xff]
    %v68 = vld [vmem:[#allocation7 + $0x60] sm:$0xff]
    %v69 = vld [vmem:[#allocation7 + $0x68] sm:$0xff]
    %v70 = vld [vmem:[#allocation7 + $0x70] sm:$0xff]
    %v71 = vld [vmem:[#allocation7 + $0x78] sm:$0xff]
    %v72 = vld [vmem:[#allocation7 + $0x80] sm:$0xff]
    %v73 = vld [vmem:[#allocation7 + $0x88] sm:$0xff]
    %v74 = vld [vmem:[#allocation7 + $0x90] sm:$0xff]
    %v75 = vld [vmem:[#allocation7 + $0x98] sm:$0xff]
    %v76 = vld [vmem:[#allocation7 + $0xa0] sm:$0xff]
    %v77 = vld [vmem:[#allocation7 + $0xa8] sm:$0xff]
    %v78 = vld [vmem:[#allocation7 + $0xb0] sm:$0xff]
    %v79 = vld [vmem:[#allocation7 + $0xb8] sm:$0xff]
    %v80 = vld [vmem:[#allocation7 + $0xc0] sm:$0xff]
    %v81 = vld [vmem:[#allocation7 + $0xc8] sm:$0xff]
    %v82 = vld [vmem:[#allocation7 + $0xd0] sm:$0xff]
    %v83 = vld [vmem:[#allocation7 + $0xd8] sm:$0xff]
    %v84 = vld [vmem:[#allocation7 + $0xe0] sm:$0xff]
    %v85 = vld [vmem:[#allocation7 + $0xe8] sm:$0xff]
    %v86 = vld [vmem:[#allocation7 + $0xf0] sm:$0xff]
    %v87 = vld [vmem:[#allocation7 + $0xf8] sm:$0xff]
    %v120 = vunpack.c.l.b16 %v56
    %v121 = vunpack.c.h.b16 %v56
    %v122 = vunpack.c.l.b16 %v57
    %v123 = vunpack.c.h.b16 %v57
    %v124 = vunpack.c.l.b16 %v58
    %v125 = vunpack.c.h.b16 %v58
    %v126 = vunpack.c.l.b16 %v59
    %v127 = vunpack.c.h.b16 %v59
    %v128 = vunpack.c.l.b16 %v60
    %v129 = vunpack.c.h.b16 %v60
    %v130 = vunpack.c.l.b16 %v61
    %v131 = vunpack.c.h.b16 %v61
    %v132 = vunpack.c.l.b16 %v62
    %v133 = vunpack.c.h.b16 %v62
    %v134 = vunpack.c.l.b16 %v63
    %v135 = vunpack.c.h.b16 %v63
    %v136 = vunpack.c.l.b16 %v64
    %v137 = vunpack.c.h.b16 %v64
    %v138 = vunpack.c.l.b16 %v65
    %v139 = vunpack.c.h.b16 %v65
    %v140 = vunpack.c.l.b16 %v66
    %v141 = vunpack.c.h.b16 %v66
    %v142 = vunpack.c.l.b16 %v67
    %v143 = vunpack.c.h.b16 %v67
    %v144 = vunpack.c.l.b16 %v68
    %v145 = vunpack.c.h.b16 %v68
    %v146 = vunpack.c.l.b16 %v69
    %v147 = vunpack.c.h.b16 %v69
    %v148 = vunpack.c.l.b16 %v70
    %v149 = vunpack.c.h.b16 %v70
    %v150 = vunpack.c.l.b16 %v71
    %v151 = vunpack.c.h.b16 %v71
    %v152 = vunpack.c.l.b16 %v72
    %v153 = vunpack.c.h.b16 %v72
    %v154 = vunpack.c.l.b16 %v73
    %v155 = vunpack.c.h.b16 %v73
    %v156 = vunpack.c.l.b16 %v74
    %v157 = vunpack.c.h.b16 %v74
    %v158 = vunpack.c.l.b16 %v75
    %v159 = vunpack.c.h.b16 %v75
    %v160 = vunpack.c.l.b16 %v76
    %v161 = vunpack.c.h.b16 %v76
    %v162 = vunpack.c.l.b16 %v77
    %v163 = vunpack.c.h.b16 %v77
    %v164 = vunpack.c.l.b16 %v78
    %v165 = vunpack.c.h.b16 %v78
    %v166 = vunpack.c.l.b16 %v79
    %v167 = vunpack.c.h.b16 %v79
    %v168 = vunpack.c.l.b16 %v80
    %v169 = vunpack.c.h.b16 %v80
    %v170 = vunpack.c.l.b16 %v81
    %v171 = vunpack.c.h.b16 %v81
    %v172 = vunpack.c.l.b16 %v82
    %v173 = vunpack.c.h.b16 %v82
    %v174 = vunpack.c.l.b16 %v83
    %v175 = vunpack.c.h.b16 %v83
    %v176 = vunpack.c.l.b16 %v84
    %v177 = vunpack.c.h.b16 %v84
    %v178 = vunpack.c.l.b16 %v85
    %v179 = vunpack.c.h.b16 %v85
    %v180 = vunpack.c.l.b16 %v86
    %v181 = vunpack.c.h.b16 %v86
    %v182 = vunpack.c.l.b16 %v87
    %v183 = vunpack.c.h.b16 %v87
    %v184 = vpack.c.b16 %v124, %v120
    %v185 = vpack.c.b16 %v125, %v121
    %v186 = vpack.c.b16 %v126, %v122
    %v187 = vpack.c.b16 %v127, %v123
    %v188 = vpack.c.b16 %v132, %v128
    %v189 = vpack.c.b16 %v133, %v129
    %v190 = vpack.c.b16 %v134, %v130
    %v191 = vpack.c.b16 %v135, %v131
    %v192 = vpack.c.b16 %v140, %v136
    %v193 = vpack.c.b16 %v141, %v137
    %v194 = vpack.c.b16 %v142, %v138
    %v195 = vpack.c.b16 %v143, %v139
    %v196 = vpack.c.b16 %v148, %v144
    %v197 = vpack.c.b16 %v149, %v145
    %v198 = vpack.c.b16 %v150, %v146
    %v199 = vpack.c.b16 %v151, %v147
    %v200 = vpack.c.b16 %v156, %v152
    %v201 = vpack.c.b16 %v157, %v153
    %v202 = vpack.c.b16 %v158, %v154
    %v203 = vpack.c.b16 %v159, %v155
    %v204 = vpack.c.b16 %v164, %v160
    %v205 = vpack.c.b16 %v165, %v161
    %v206 = vpack.c.b16 %v166, %v162
    %v207 = vpack.c.b16 %v167, %v163
    %v208 = vpack.c.b16 %v172, %v168
    %v209 = vpack.c.b16 %v173, %v169
    %v210 = vpack.c.b16 %v174, %v170
    %v211 = vpack.c.b16 %v175, %v171
    %v212 = vpack.c.b16 %v180, %v176
    %v213 = vpack.c.b16 %v181, %v177
    %v214 = vpack.c.b16 %v182, %v178
    %v215 = vpack.c.b16 %v183, %v179
    %248 = vmatprep.subr.bf16.mxu0 %v185
    %249 = vmatpush1.bf16.msra.mxu0 %v184
    %250 = vmatprep.subr.bf16.mxu0 %v189
    %251 = vmatpush1.bf16.msra.mxu0 %v188
    %252 = vmatprep.subr.bf16.mxu0 %v193
    %253 = vmatpush1.bf16.msra.mxu0 %v192
    %254 = vmatprep.subr.bf16.mxu0 %v197
    %255 = vmatpush1.bf16.msra.mxu0 %v196
    %256 = vmatprep.subr.bf16.mxu0 %v201
    %257 = vmatpush1.bf16.msra.mxu0 %v200
    %258 = vmatprep.subr.bf16.mxu0 %v205
    %259 = vmatpush1.bf16.msra.mxu0 %v204
    %260 = vmatprep.subr.bf16.mxu0 %v209
    %261 = vmatpush1.bf16.msra.mxu0 %v208
    %262 = vmatprep.subr.bf16.mxu0 %v213
    %263 = vmatpush1.bf16.msra.mxu0 %v212
    %264 = vmatprep.subr.bf16.mxu0 0
    %265 = vmatpush1.bf16.msra.mxu0 0
    %266 = vmatprep.subr.bf16.mxu0 0
    %267 = vmatpush1.bf16.msra.mxu0 0
    %268 = vmatprep.subr.bf16.mxu0 0
    %269 = vmatpush1.bf16.msra.mxu0 0
    %270 = vmatprep.subr.bf16.mxu0 0
    %271 = vmatpush1.bf16.msra.mxu0 0
    %272 = vmatprep.subr.bf16.mxu0 0
    %273 = vmatpush1.bf16.msra.mxu0 0
    %274 = vmatprep.subr.bf16.mxu0 0
    %275 = vmatpush1.bf16.msra.mxu0 0
    %276 = vmatprep.subr.bf16.mxu0 0
    %277 = vmatpush1.bf16.msra.mxu0 0
    %278 = vmatprep.subr.bf16.mxu0 0
    %279 = vmatpush1.bf16.msra.mxu0 0
    %280 = vmatprep.mubr.bf16.mxu0 0
    %281 = vmatmul.mubr.bf16.gmra.mrb[0].mxu0 %v55
    %v282 = vpop.f32.mrb[0].mxu0
    %v283 = vadd.f32 0.0, %v282
    %v284 = vpop.f32.mrb[0].mxu0
    %v285 = vadd.f32 0.0, %v284
    %v286 = vpop.f32.mrb[0].mxu0
    %v287 = vpop.f32.mrb[0].mxu0
    %288 = vdwg.mxu0
    %289 = vmatprep.subr.bf16.mxu0 %v187
    %290 = vmatpush1.bf16.msra.mxu0 %v186
    %291 = vmatprep.subr.bf16.mxu0 %v191
    %292 = vmatpush1.bf16.msra.mxu0 %v190
    %293 = vmatprep.subr.bf16.mxu0 %v195
    %294 = vmatpush1.bf16.msra.mxu0 %v194
    %295 = vmatprep.subr.bf16.mxu0 %v199
    %296 = vmatpush1.bf16.msra.mxu0 %v198
    %297 = vmatprep.subr.bf16.mxu0 %v203
    %298 = vmatpush1.bf16.msra.mxu0 %v202
    %299 = vmatprep.subr.bf16.mxu0 %v207
    %300 = vmatpush1.bf16.msra.mxu0 %v206
    %301 = vmatprep.subr.bf16.mxu0 %v211
    %302 = vmatpush1.bf16.msra.mxu0 %v210
    %303 = vmatprep.subr.bf16.mxu0 %v215
    %304 = vmatpush1.bf16.msra.mxu0 %v214
    %305 = vmatprep.subr.bf16.mxu0 0
    %306 = vmatpush1.bf16.msra.mxu0 0
    %307 = vmatprep.subr.bf16.mxu0 0
    %308 = vmatpush1.bf16.msra.mxu0 0
    %309 = vmatprep.subr.bf16.mxu0 0
    %310 = vmatpush1.bf16.msra.mxu0 0
    %311 = vmatprep.subr.bf16.mxu0 0
    %312 = vmatpush1.bf16.msra.mxu0 0
    %313 = vmatprep.subr.bf16.mxu0 0
    %314 = vmatpush1.bf16.msra.mxu0 0
    %315 = vmatprep.subr.bf16.mxu0 0
    %316 = vmatpush1.bf16.msra.mxu0 0
    %317 = vmatprep.subr.bf16.mxu0 0
    %318 = vmatpush1.bf16.msra.mxu0 0
    %319 = vmatprep.subr.bf16.mxu0 0
    %320 = vmatpush1.bf16.msra.mxu0 0
    %321 = vmatprep.mubr.bf16.mxu0 0
    %322 = vmatmul.mubr.bf16.gmra.mrb[0].mxu0 %v55
    %v323 = vpop.f32.mrb[0].mxu0
    %v324 = vadd.f32 0.0, %v323
    %v325 = vpop.f32.mrb[0].mxu0
    %v326 = vadd.f32 0.0, %v325
    %v327 = vpop.f32.mrb[0].mxu0
    %v328 = vpop.f32.mrb[0].mxu0
    %329 = vdwg.mxu0
    %v334 = vcombine.low %v283, %v285
    %v335 = vcombine.low %v324, %v326
    %v337 = vunpack.c.l.s4 1983009808
    %v338 = vunpack.c.0.s8 %v337
    %v339 = vlaneseq
    %v340 = vshrl.u32 %v339, 7
    %v341 = vsub.s32 %v338, %v340
    %v342 = vrot.slane %v334, %v341
    %v344 = vunpack.c.l.s4 1983009808
    %v345 = vunpack.c.0.s8 %v344
    %v346 = vlaneseq
    %v347 = vshrl.u32 %v346, 7
    %v348 = vsub.s32 %v345, %v347
    %v349 = vrot.slane %v335, %v348
    %v350 = vcombine.low %v342, %v349
    %v352 = vadd.f32 %v54, %v350
    %v353 = vmul.f32 %v352, 0.5
    %v354 = vtanh.pop %v353
    %v355 = vadd.f32 %v354, 1.0
    %v356 = vmul.f32 %v355, 0.5
    %v358 = vrot.slane %v352, 2
    %v360 = vmul.f32 %v358, 0.5
    %v361 = vtanh.pop %v360
    %v362 = vadd.f32 %v361, 1.0
    %v363 = vmul.f32 %v362, 0.5
    %v364 = vrot.slane %v352, 4
    %v366 = vtanh.pop %v364
    %v367 = vrot.slane %v352, 6
    %v369 = vmul.f32 %v367, 0.5
    %v370 = vtanh.pop %v369
    %v371 = vadd.f32 %v370, 1.0
    %v372 = vmul.f32 %v371, 0.5
    %v373 = vmul.f32 %v363, %v52
    %v374 = vmul.f32 %v356, %v366
    %v375 = vadd.f32 %v373, %v374
    %v376 = vtanh.pop %v375
    %v377 = vmul.f32 %v372, %v376
    %378 = vst [vmem:[#allocation9] sm:$0x3] %v377
    %s379 = scalar_lea.vmem [#allocation4], 4
    %v380 = vld [vmem:[%s379] sm:$0xf]
    %v381 = vunpack.c.l.bf16 %v380
    %v382 = vpack.c.bf16 %v377, %v377
    %v383 = vld [vmem:[#allocation7] sm:$0xff]
    %v384 = vld [vmem:[#allocation7 + $0x8] sm:$0xff]
    %v385 = vld [vmem:[#allocation7 + $0x10] sm:$0xff]
    %v386 = vld [vmem:[#allocation7 + $0x18] sm:$0xff]
    %v387 = vld [vmem:[#allocation7 + $0x20] sm:$0xff]
    %v388 = vld [vmem:[#allocation7 + $0x28] sm:$0xff]
    %v389 = vld [vmem:[#allocation7 + $0x30] sm:$0xff]
    %v390 = vld [vmem:[#allocation7 + $0x38] sm:$0xff]
    %v391 = vld [vmem:[#allocation7 + $0x40] sm:$0xff]
    %v392 = vld [vmem:[#allocation7 + $0x48] sm:$0xff]
    %v393 = vld [vmem:[#allocation7 + $0x50] sm:$0xff]
    %v394 = vld [vmem:[#allocation7 + $0x58] sm:$0xff]
    %v395 = vld [vmem:[#allocation7 + $0x60] sm:$0xff]
    %v396 = vld [vmem:[#allocation7 + $0x68] sm:$0xff]
    %v397 = vld [vmem:[#allocation7 + $0x70] sm:$0xff]
    %v398 = vld [vmem:[#allocation7 + $0x78] sm:$0xff]
    %v399 = vld [vmem:[#allocation7 + $0x80] sm:$0xff]
    %v400 = vld [vmem:[#allocation7 + $0x88] sm:$0xff]
    %v401 = vld [vmem:[#allocation7 + $0x90] sm:$0xff]
    %v402 = vld [vmem:[#allocation7 + $0x98] sm:$0xff]
    %v403 = vld [vmem:[#allocation7 + $0xa0] sm:$0xff]
    %v404 = vld [vmem:[#allocation7 + $0xa8] sm:$0xff]
    %v405 = vld [vmem:[#allocation7 + $0xb0] sm:$0xff]
    %v406 = vld [vmem:[#allocation7 + $0xb8] sm:$0xff]
    %v407 = vld [vmem:[#allocation7 + $0xc0] sm:$0xff]
    %v408 = vld [vmem:[#allocation7 + $0xc8] sm:$0xff]
    %v409 = vld [vmem:[#allocation7 + $0xd0] sm:$0xff]
    %v410 = vld [vmem:[#allocation7 + $0xd8] sm:$0xff]
    %v411 = vld [vmem:[#allocation7 + $0xe0] sm:$0xff]
    %v412 = vld [vmem:[#allocation7 + $0xe8] sm:$0xff]
    %v413 = vld [vmem:[#allocation7 + $0xf0] sm:$0xff]
    %v414 = vld [vmem:[#allocation7 + $0xf8] sm:$0xff]
    %v447 = vunpack.c.l.b16 %v383
    %v448 = vunpack.c.h.b16 %v383
    %v449 = vunpack.c.l.b16 %v384
    %v450 = vunpack.c.h.b16 %v384
    %v451 = vunpack.c.l.b16 %v385
    %v452 = vunpack.c.h.b16 %v385
    %v453 = vunpack.c.l.b16 %v386
    %v454 = vunpack.c.h.b16 %v386
    %v455 = vunpack.c.l.b16 %v387
    %v456 = vunpack.c.h.b16 %v387
    %v457 = vunpack.c.l.b16 %v388
    %v458 = vunpack.c.h.b16 %v388
    %v459 = vunpack.c.l.b16 %v389
    %v460 = vunpack.c.h.b16 %v389
    %v461 = vunpack.c.l.b16 %v390
    %v462 = vunpack.c.h.b16 %v390
    %v463 = vunpack.c.l.b16 %v391
    %v464 = vunpack.c.h.b16 %v391
    %v465 = vunpack.c.l.b16 %v392
    %v466 = vunpack.c.h.b16 %v392
    %v467 = vunpack.c.l.b16 %v393
    %v468 = vunpack.c.h.b16 %v393
    %v469 = vunpack.c.l.b16 %v394
    %v470 = vunpack.c.h.b16 %v394
    %v471 = vunpack.c.l.b16 %v395
    %v472 = vunpack.c.h.b16 %v395
    %v473 = vunpack.c.l.b16 %v396
    %v474 = vunpack.c.h.b16 %v396
    %v475 = vunpack.c.l.b16 %v397
    %v476 = vunpack.c.h.b16 %v397
    %v477 = vunpack.c.l.b16 %v398
    %v478 = vunpack.c.h.b16 %v398
    %v479 = vunpack.c.l.b16 %v399
    %v480 = vunpack.c.h.b16 %v399
    %v481 = vunpack.c.l.b16 %v400
    %v482 = vunpack.c.h.b16 %v400
    %v483 = vunpack.c.l.b16 %v401
    %v484 = vunpack.c.h.b16 %v401
    %v485 = vunpack.c.l.b16 %v402
    %v486 = vunpack.c.h.b16 %v402
    %v487 = vunpack.c.l.b16 %v403
    %v488 = vunpack.c.h.b16 %v403
    %v489 = vunpack.c.l.b16 %v404
    %v490 = vunpack.c.h.b16 %v404
    %v491 = vunpack.c.l.b16 %v405
    %v492 = vunpack.c.h.b16 %v405
    %v493 = vunpack.c.l.b16 %v406
    %v494 = vunpack.c.h.b16 %v406
    %v495 = vunpack.c.l.b16 %v407
    %v496 = vunpack.c.h.b16 %v407
    %v497 = vunpack.c.l.b16 %v408
    %v498 = vunpack.c.h.b16 %v408
    %v499 = vunpack.c.l.b16 %v409
    %v500 = vunpack.c.h.b16 %v409
    %v501 = vunpack.c.l.b16 %v410
    %v502 = vunpack.c.h.b16 %v410
    %v503 = vunpack.c.l.b16 %v411
    %v504 = vunpack.c.h.b16 %v411
    %v505 = vunpack.c.l.b16 %v412
    %v506 = vunpack.c.h.b16 %v412
    %v507 = vunpack.c.l.b16 %v413
    %v508 = vunpack.c.h.b16 %v413
    %v509 = vunpack.c.l.b16 %v414
    %v510 = vunpack.c.h.b16 %v414
    %v511 = vpack.c.b16 %v451, %v447
    %v512 = vpack.c.b16 %v452, %v448
    %v513 = vpack.c.b16 %v453, %v449
    %v514 = vpack.c.b16 %v454, %v450
    %v515 = vpack.c.b16 %v459, %v455
    %v516 = vpack.c.b16 %v460, %v456
    %v517 = vpack.c.b16 %v461, %v457
    %v518 = vpack.c.b16 %v462, %v458
    %v519 = vpack.c.b16 %v467, %v463
    %v520 = vpack.c.b16 %v468, %v464
    %v521 = vpack.c.b16 %v469, %v465
    %v522 = vpack.c.b16 %v470, %v466
    %v523 = vpack.c.b16 %v475, %v471
    %v524 = vpack.c.b16 %v476, %v472
    %v525 = vpack.c.b16 %v477, %v473
    %v526 = vpack.c.b16 %v478, %v474
    %v527 = vpack.c.b16 %v483, %v479
    %v528 = vpack.c.b16 %v484, %v480
    %v529 = vpack.c.b16 %v485, %v481
    %v530 = vpack.c.b16 %v486, %v482
    %v531 = vpack.c.b16 %v491, %v487
    %v532 = vpack.c.b16 %v492, %v488
    %v533 = vpack.c.b16 %v493, %v489
    %v534 = vpack.c.b16 %v494, %v490
    %v535 = vpack.c.b16 %v499, %v495
    %v536 = vpack.c.b16 %v500, %v496
    %v537 = vpack.c.b16 %v501, %v497
    %v538 = vpack.c.b16 %v502, %v498
    %v539 = vpack.c.b16 %v507, %v503
    %v540 = vpack.c.b16 %v508, %v504
    %v541 = vpack.c.b16 %v509, %v505
    %v542 = vpack.c.b16 %v510, %v506
    %575 = vmatprep.subr.bf16.mxu0 %v512
    %576 = vmatpush1.bf16.msra.mxu0 %v511
    %577 = vmatprep.subr.bf16.mxu0 %v516
    %578 = vmatpush1.bf16.msra.mxu0 %v515
    %579 = vmatprep.subr.bf16.mxu0 %v520
    %580 = vmatpush1.bf16.msra.mxu0 %v519
    %581 = vmatprep.subr.bf16.mxu0 %v524
    %582 = vmatpush1.bf16.msra.mxu0 %v523
    %583 = vmatprep.subr.bf16.mxu0 %v528
    %584 = vmatpush1.bf16.msra.mxu0 %v527
    %585 = vmatprep.subr.bf16.mxu0 %v532
    %586 = vmatpush1.bf16.msra.mxu0 %v531
    %587 = vmatprep.subr.bf16.mxu0 %v536
    %588 = vmatpush1.bf16.msra.mxu0 %v535
    %589 = vmatprep.subr.bf16.mxu0 %v540
    %590 = vmatpush1.bf16.msra.mxu0 %v539
    %591 = vmatprep.subr.bf16.mxu0 0
    %592 = vmatpush1.bf16.msra.mxu0 0
    %593 = vmatprep.subr.bf16.mxu0 0
    %594 = vmatpush1.bf16.msra.mxu0 0
    %595 = vmatprep.subr.bf16.mxu0 0
    %596 = vmatpush1.bf16.msra.mxu0 0
    %597 = vmatprep.subr.bf16.mxu0 0
    %598 = vmatpush1.bf16.msra.mxu0 0
    %599 = vmatprep.subr.bf16.mxu0 0
    %600 = vmatpush1.bf16.msra.mxu0 0
    %601 = vmatprep.subr.bf16.mxu0 0
    %602 = vmatpush1.bf16.msra.mxu0 0
    %603 = vmatprep.subr.bf16.mxu0 0
    %604 = vmatpush1.bf16.msra.mxu0 0
    %605 = vmatprep.subr.bf16.mxu0 0
    %606 = vmatpush1.bf16.msra.mxu0 0
    %607 = vmatprep.mubr.bf16.mxu0 0
    %608 = vmatmul.mubr.bf16.gmra.mrb[0].mxu0 %v382
    %v609 = vpop.f32.mrb[0].mxu0
    %v610 = vadd.f32 0.0, %v609
    %v611 = vpop.f32.mrb[0].mxu0
    %v612 = vadd.f32 0.0, %v611
    %v613 = vpop.f32.mrb[0].mxu0
    %v614 = vpop.f32.mrb[0].mxu0
    %615 = vdwg.mxu0
    %616 = vmatprep.subr.bf16.mxu0 %v514
    %617 = vmatpush1.bf16.msra.mxu0 %v513
    %618 = vmatprep.subr.bf16.mxu0 %v518
    %619 = vmatpush1.bf16.msra.mxu0 %v517
    %620 = vmatprep.subr.bf16.mxu0 %v522
    %621 = vmatpush1.bf16.msra.mxu0 %v521
    %622 = vmatprep.subr.bf16.mxu0 %v526
    %623 = vmatpush1.bf16.msra.mxu0 %v525
    %624 = vmatprep.subr.bf16.mxu0 %v530
    %625 = vmatpush1.bf16.msra.mxu0 %v529
    %626 = vmatprep.subr.bf16.mxu0 %v534
    %627 = vmatpush1.bf16.msra.mxu0 %v533
    %628 = vmatprep.subr.bf16.mxu0 %v538
    %629 = vmatpush1.bf16.msra.mxu0 %v537
    %630 = vmatprep.subr.bf16.mxu0 %v542
    %631 = vmatpush1.bf16.msra.mxu0 %v541
    %632 = vmatprep.subr.bf16.mxu0 0
    %633 = vmatpush1.bf16.msra.mxu0 0
    %634 = vmatprep.subr.bf16.mxu0 0
    %635 = vmatpush1.bf16.msra.mxu0 0
    %636 = vmatprep.subr.bf16.mxu0 0
    %637 = vmatpush1.bf16.msra.mxu0 0
    %638 = vmatprep.subr.bf16.mxu0 0
    %639 = vmatpush1.bf16.msra.mxu0 0
    %640 = vmatprep.subr.bf16.mxu0 0
    %641 = vmatpush1.bf16.msra.mxu0 0
    %642 = vmatprep.subr.bf16.mxu0 0
    %643 = vmatpush1.bf16.msra.mxu0 0
    %644 = vmatprep.subr.bf16.mxu0 0
    %645 = vmatpush1.bf16.msra.mxu0 0
    %646 = vmatprep.subr.bf16.mxu0 0
    %647 = vmatpush1.bf16.msra.mxu0 0
    %648 = vmatprep.mubr.bf16.mxu0 0
    %649 = vmatmul.mubr.bf16.gmra.mrb[0].mxu0 %v382
    %v650 = vpop.f32.mrb[0].mxu0
    %v651 = vadd.f32 0.0, %v650
    %v652 = vpop.f32.mrb[0].mxu0
    %v653 = vadd.f32 0.0, %v652
    %v654 = vpop.f32.mrb[0].mxu0
    %v655 = vpop.f32.mrb[0].mxu0
    %656 = vdwg.mxu0
    %v661 = vcombine.low %v610, %v612
    %v662 = vcombine.low %v651, %v653
    %v664 = vunpack.c.l.s4 1983009808
    %v665 = vunpack.c.0.s8 %v664
    %v666 = vlaneseq
    %v667 = vshrl.u32 %v666, 7
    %v668 = vsub.s32 %v665, %v667
    %v669 = vrot.slane %v661, %v668
    %v671 = vunpack.c.l.s4 1983009808
    %v672 = vunpack.c.0.s8 %v671
    %v673 = vlaneseq
    %v674 = vshrl.u32 %v673, 7
    %v675 = vsub.s32 %v672, %v674
    %v676 = vrot.slane %v662, %v675
    %v677 = vcombine.low %v669, %v676
    %v679 = vadd.f32 %v381, %v677
    %v680 = vmul.f32 %v679, 0.5
    %v681 = vtanh.pop %v680
    %v682 = vadd.f32 %v681, 1.0
    %v683 = vmul.f32 %v682, 0.5
    %v685 = vrot.slane %v679, 2
    %v687 = vmul.f32 %v685, 0.5
    %v688 = vtanh.pop %v687
    %v689 = vadd.f32 %v688, 1.0
    %v690 = vmul.f32 %v689, 0.5
    %v691 = vrot.slane %v679, 4
    %v693 = vtanh.pop %v691
    %v694 = vrot.slane %v679, 6
    %v696 = vmul.f32 %v694, 0.5
    %v697 = vtanh.pop %v696
    %v698 = vadd.f32 %v697, 1.0
    %v699 = vmul.f32 %v698, 0.5
    %v700 = vmul.f32 %v690, %v375
    %v701 = vmul.f32 %v683, %v693
    %v702 = vadd.f32 %v700, %v701
    %v703 = vtanh.pop %v702
    %v704 = vmul.f32 %v699, %v703
    %s705 = scalar_lea.vmem [#allocation9], 2
    %706 = vst [vmem:[%s705] sm:$0x3] %v704
    %s707 = scalar_lea.vmem [#allocation4], 8
    %v708 = vld [vmem:[%s707] sm:$0xf]
    %v709 = vunpack.c.l.bf16 %v708
    %v710 = vpack.c.bf16 %v704, %v704
    %v711 = vld [vmem:[#allocation7] sm:$0xff]
    %v712 = vld [vmem:[#allocation7 + $0x8] sm:$0xff]
    %v713 = vld [vmem:[#allocation7 + $0x10] sm:$0xff]
    %v714 = vld [vmem:[#allocation7 + $0x18] sm:$0xff]
    %v715 = vld [vmem:[#allocation7 + $0x20] sm:$0xff]
    %v716 = vld [vmem:[#allocation7 + $0x28] sm:$0xff]
    %v717 = vld [vmem:[#allocation7 + $0x30] sm:$0xff]
    %v718 = vld [vmem:[#allocation7 + $0x38] sm:$0xff]
    %v719 = vld [vmem:[#allocation7 + $0x40] sm:$0xff]
    %v720 = vld [vmem:[#allocation7 + $0x48] sm:$0xff]
    %v721 = vld [vmem:[#allocation7 + $0x50] sm:$0xff]
    %v722 = vld [vmem:[#allocation7 + $0x58] sm:$0xff]
    %v723 = vld [vmem:[#allocation7 + $0x60] sm:$0xff]
    %v724 = vld [vmem:[#allocation7 + $0x68] sm:$0xff]
    %v725 = vld [vmem:[#allocation7 + $0x70] sm:$0xff]
    %v726 = vld [vmem:[#allocation7 + $0x78] sm:$0xff]
    %v727 = vld [vmem:[#allocation7 + $0x80] sm:$0xff]
    %v728 = vld [vmem:[#allocation7 + $0x88] sm:$0xff]
    %v729 = vld [vmem:[#allocation7 + $0x90] sm:$0xff]
    %v730 = vld [vmem:[#allocation7 + $0x98] sm:$0xff]
    %v731 = vld [vmem:[#allocation7 + $0xa0] sm:$0xff]
    %v732 = vld [vmem:[#allocation7 + $0xa8] sm:$0xff]
    %v733 = vld [vmem:[#allocation7 + $0xb0] sm:$0xff]
    %v734 = vld [vmem:[#allocation7 + $0xb8] sm:$0xff]
    %v735 = vld [vmem:[#allocation7 + $0xc0] sm:$0xff]
    %v736 = vld [vmem:[#allocation7 + $0xc8] sm:$0xff]
    %v737 = vld [vmem:[#allocation7 + $0xd0] sm:$0xff]
    %v738 = vld [vmem:[#allocation7 + $0xd8] sm:$0xff]
    %v739 = vld [vmem:[#allocation7 + $0xe0] sm:$0xff]
    %v740 = vld [vmem:[#allocation7 + $0xe8] sm:$0xff]
    %v741 = vld [vmem:[#allocation7 + $0xf0] sm:$0xff]
    %v742 = vld [vmem:[#allocation7 + $0xf8] sm:$0xff]
    %v775 = vunpack.c.l.b16 %v711
    %v776 = vunpack.c.h.b16 %v711
    %v777 = vunpack.c.l.b16 %v712
    %v778 = vunpack.c.h.b16 %v712
    %v779 = vunpack.c.l.b16 %v713
    %v780 = vunpack.c.h.b16 %v713
    %v781 = vunpack.c.l.b16 %v714
    %v782 = vunpack.c.h.b16 %v714
    %v783 = vunpack.c.l.b16 %v715
    %v784 = vunpack.c.h.b16 %v715
    %v785 = vunpack.c.l.b16 %v716
    %v786 = vunpack.c.h.b16 %v716
    %v787 = vunpack.c.l.b16 %v717
    %v788 = vunpack.c.h.b16 %v717
    %v789 = vunpack.c.l.b16 %v718
    %v790 = vunpack.c.h.b16 %v718
    %v791 = vunpack.c.l.b16 %v719
    %v792 = vunpack.c.h.b16 %v719
    %v793 = vunpack.c.l.b16 %v720
    %v794 = vunpack.c.h.b16 %v720
    %v795 = vunpack.c.l.b16 %v721
    %v796 = vunpack.c.h.b16 %v721
    %v797 = vunpack.c.l.b16 %v722
    %v798 = vunpack.c.h.b16 %v722
    %v799 = vunpack.c.l.b16 %v723
    %v800 = vunpack.c.h.b16 %v723
    %v801 = vunpack.c.l.b16 %v724
    %v802 = vunpack.c.h.b16 %v724
    %v803 = vunpack.c.l.b16 %v725
    %v804 = vunpack.c.h.b16 %v725
    %v805 = vunpack.c.l.b16 %v726
    %v806 = vunpack.c.h.b16 %v726
    %v807 = vunpack.c.l.b16 %v727
    %v808 = vunpack.c.h.b16 %v727
    %v809 = vunpack.c.l.b16 %v728
    %v810 = vunpack.c.h.b16 %v728
    %v811 = vunpack.c.l.b16 %v729
    %v812 = vunpack.c.h.b16 %v729
    %v813 = vunpack.c.l.b16 %v730
    %v814 = vunpack.c.h.b16 %v730
    %v815 = vunpack.c.l.b16 %v731
    %v816 = vunpack.c.h.b16 %v731
    %v817 = vunpack.c.l.b16 %v732
    %v818 = vunpack.c.h.b16 %v732
    %v819 = vunpack.c.l.b16 %v733
    %v820 = vunpack.c.h.b16 %v733
    %v821 = vunpack.c.l.b16 %v734
    %v822 = vunpack.c.h.b16 %v734
    %v823 = vunpack.c.l.b16 %v735
    %v824 = vunpack.c.h.b16 %v735
    %v825 = vunpack.c.l.b16 %v736
    %v826 = vunpack.c.h.b16 %v736
    %v827 = vunpack.c.l.b16 %v737
    %v828 = vunpack.c.h.b16 %v737
    %v829 = vunpack.c.l.b16 %v738
    %v830 = vunpack.c.h.b16 %v738
    %v831 = vunpack.c.l.b16 %v739
    %v832 = vunpack.c.h.b16 %v739
    %v833 = vunpack.c.l.b16 %v740
    %v834 = vunpack.c.h.b16 %v740
    %v835 = vunpack.c.l.b16 %v741
    %v836 = vunpack.c.h.b16 %v741
    %v837 = vunpack.c.l.b16 %v742
    %v838 = vunpack.c.h.b16 %v742
    %v839 = vpack.c.b16 %v779, %v775
    %v840 = vpack.c.b16 %v780, %v776
    %v841 = vpack.c.b16 %v781, %v777
    %v842 = vpack.c.b16 %v782, %v778
    %v843 = vpack.c.b16 %v787, %v783
    %v844 = vpack.c.b16 %v788, %v784
    %v845 = vpack.c.b16 %v789, %v785
    %v846 = vpack.c.b16 %v790, %v786
    %v847 = vpack.c.b16 %v795, %v791
    %v848 = vpack.c.b16 %v796, %v792
    %v849 = vpack.c.b16 %v797, %v793
    %v850 = vpack.c.b16 %v798, %v794
    %v851 = vpack.c.b16 %v803, %v799
    %v852 = vpack.c.b16 %v804, %v800
    %v853 = vpack.c.b16 %v805, %v801
    %v854 = vpack.c.b16 %v806, %v802
    %v855 = vpack.c.b16 %v811, %v807
    %v856 = vpack.c.b16 %v812, %v808
    %v857 = vpack.c.b16 %v813, %v809
    %v858 = vpack.c.b16 %v814, %v810
    %v859 = vpack.c.b16 %v819, %v815
    %v860 = vpack.c.b16 %v820, %v816
    %v861 = vpack.c.b16 %v821, %v817
    %v862 = vpack.c.b16 %v822, %v818
    %v863 = vpack.c.b16 %v827, %v823
    %v864 = vpack.c.b16 %v828, %v824
    %v865 = vpack.c.b16 %v829, %v825
    %v866 = vpack.c.b16 %v830, %v826
    %v867 = vpack.c.b16 %v835, %v831
    %v868 = vpack.c.b16 %v836, %v832
    %v869 = vpack.c.b16 %v837, %v833
    %v870 = vpack.c.b16 %v838, %v834
    %903 = vmatprep.subr.bf16.mxu0 %v840
    %904 = vmatpush1.bf16.msra.mxu0 %v839
    %905 = vmatprep.subr.bf16.mxu0 %v844
    %906 = vmatpush1.bf16.msra.mxu0 %v843
    %907 = vmatprep.subr.bf16.mxu0 %v848
    %908 = vmatpush1.bf16.msra.mxu0 %v847
    %909 = vmatprep.subr.bf16.mxu0 %v852
    %910 = vmatpush1.bf16.msra.mxu0 %v851
    %911 = vmatprep.subr.bf16.mxu0 %v856
    %912 = vmatpush1.bf16.msra.mxu0 %v855
    %913 = vmatprep.subr.bf16.mxu0 %v860
    %914 = vmatpush1.bf16.msra.mxu0 %v859
    %915 = vmatprep.subr.bf16.mxu0 %v864
    %916 = vmatpush1.bf16.msra.mxu0 %v863
    %917 = vmatprep.subr.bf16.mxu0 %v868
    %918 = vmatpush1.bf16.msra.mxu0 %v867
    %919 = vmatprep.subr.bf16.mxu0 0
    %920 = vmatpush1.bf16.msra.mxu0 0
    %921 = vmatprep.subr.bf16.mxu0 0
    %922 = vmatpush1.bf16.msra.mxu0 0
    %923 = vmatprep.subr.bf16.mxu0 0
    %924 = vmatpush1.bf16.msra.mxu0 0
    %925 = vmatprep.subr.bf16.mxu0 0
    %926 = vmatpush1.bf16.msra.mxu0 0
    %927 = vmatprep.subr.bf16.mxu0 0
    %928 = vmatpush1.bf16.msra.mxu0 0
    %929 = vmatprep.subr.bf16.mxu0 0
    %930 = vmatpush1.bf16.msra.mxu0 0
    %931 = vmatprep.subr.bf16.mxu0 0
    %932 = vmatpush1.bf16.msra.mxu0 0
    %933 = vmatprep.subr.bf16.mxu0 0
    %934 = vmatpush1.bf16.msra.mxu0 0
    %935 = vmatprep.mubr.bf16.mxu0 0
    %936 = vmatmul.mubr.bf16.gmra.mrb[0].mxu0 %v710
    %v937 = vpop.f32.mrb[0].mxu0
    %v938 = vadd.f32 0.0, %v937
    %v939 = vpop.f32.mrb[0].mxu0
    %v940 = vadd.f32 0.0, %v939
    %v941 = vpop.f32.mrb[0].mxu0
    %v942 = vpop.f32.mrb[0].mxu0
    %943 = vdwg.mxu0
    %944 = vmatprep.subr.bf16.mxu0 %v842
    %945 = vmatpush1.bf16.msra.mxu0 %v841
    %946 = vmatprep.subr.bf16.mxu0 %v846
    %947 = vmatpush1.bf16.msra.mxu0 %v845
    %948 = vmatprep.subr.bf16.mxu0 %v850
    %949 = vmatpush1.bf16.msra.mxu0 %v849
    %950 = vmatprep.subr.bf16.mxu0 %v854
    %951 = vmatpush1.bf16.msra.mxu0 %v853
    %952 = vmatprep.subr.bf16.mxu0 %v858
    %953 = vmatpush1.bf16.msra.mxu0 %v857
    %954 = vmatprep.subr.bf16.mxu0 %v862
    %955 = vmatpush1.bf16.msra.mxu0 %v861
    %956 = vmatprep.subr.bf16.mxu0 %v866
    %957 = vmatpush1.bf16.msra.mxu0 %v865
    %958 = vmatprep.subr.bf16.mxu0 %v870
    %959 = vmatpush1.bf16.msra.mxu0 %v869
    %960 = vmatprep.subr.bf16.mxu0 0
    %961 = vmatpush1.bf16.msra.mxu0 0
    %962 = vmatprep.subr.bf16.mxu0 0
    %963 = vmatpush1.bf16.msra.mxu0 0
    %964 = vmatprep.subr.bf16.mxu0 0
    %965 = vmatpush1.bf16.msra.mxu0 0
    %966 = vmatprep.subr.bf16.mxu0 0
    %967 = vmatpush1.bf16.msra.mxu0 0
    %968 = vmatprep.subr.bf16.mxu0 0
    %969 = vmatpush1.bf16.msra.mxu0 0
    %970 = vmatprep.subr.bf16.mxu0 0
    %971 = vmatpush1.bf16.msra.mxu0 0
    %972 = vmatprep.subr.bf16.mxu0 0
    %973 = vmatpush1.bf16.msra.mxu0 0
    %974 = vmatprep.subr.bf16.mxu0 0
    %975 = vmatpush1.bf16.msra.mxu0 0
    %976 = vmatprep.mubr.bf16.mxu0 0
    %977 = vmatmul.mubr.bf16.gmra.mrb[0].mxu0 %v710
    %v978 = vpop.f32.mrb[0].mxu0
    %v979 = vadd.f32 0.0, %v978
    %v980 = vpop.f32.mrb[0].mxu0
    %v981 = vadd.f32 0.0, %v980
    %v982 = vpop.f32.mrb[0].mxu0
    %v983 = vpop.f32.mrb[0].mxu0
    %984 = vdwg.mxu0
    %v989 = vcombine.low %v938, %v940
    %v990 = vcombine.low %v979, %v981
    %v992 = vunpack.c.l.s4 1983009808
    %v993 = vunpack.c.0.s8 %v992
    %v994 = vlaneseq
    %v995 = vshrl.u32 %v994, 7
    %v996 = vsub.s32 %v993, %v995
    %v997 = vrot.slane %v989, %v996
    %v999 = vunpack.c.l.s4 1983009808
    %v1000 = vunpack.c.0.s8 %v999
    %v1001 = vlaneseq
    %v1002 = vshrl.u32 %v1001, 7
    %v1003 = vsub.s32 %v1000, %v1002
    %v1004 = vrot.slane %v990, %v1003
    %v1005 = vcombine.low %v997, %v1004
    %v1007 = vadd.f32 %v709, %v1005
    %v1008 = vmul.f32 %v1007, 0.5
    %v1009 = vtanh.pop %v1008
    %v1010 = vadd.f32 %v1009, 1.0
    %v1011 = vmul.f32 %v1010, 0.5
    %v1013 = vrot.slane %v1007, 2
    %v1015 = vmul.f32 %v1013, 0.5
    %v1016 = vtanh.pop %v1015
    %v1017 = vadd.f32 %v1016, 1.0
    %v1018 = vmul.f32 %v1017, 0.5
    %v1019 = vrot.slane %v1007, 4
    %v1021 = vtanh.pop %v1019
    %v1022 = vrot.slane %v1007, 6
    %v1024 = vmul.f32 %v1022, 0.5
    %v1025 = vtanh.pop %v1024
    %v1026 = vadd.f32 %v1025, 1.0
    %v1027 = vmul.f32 %v1026, 0.5
    %v1028 = vmul.f32 %v1018, %v702
    %v1029 = vmul.f32 %v1011, %v1021
    %v1030 = vadd.f32 %v1028, %v1029
    %v1031 = vtanh.pop %v1030
    %v1032 = vmul.f32 %v1027, %v1031
    %s1033 = scalar_lea.vmem [#allocation9], 4
    %1034 = vst [vmem:[%s1033] sm:$0x3] %v1032
    %s1035 = scalar_lea.vmem [#allocation4], 12
    %v1036 = vld [vmem:[%s1035] sm:$0xf]
    %v1037 = vunpack.c.l.bf16 %v1036
    %v1038 = vpack.c.bf16 %v1032, %v1032
    %v1039 = vld [vmem:[#allocation7] sm:$0xff]
    %v1040 = vld [vmem:[#allocation7 + $0x8] sm:$0xff]
    %v1041 = vld [vmem:[#allocation7 + $0x10] sm:$0xff]
    %v1042 = vld [vmem:[#allocation7 + $0x18] sm:$0xff]
    %v1043 = vld [vmem:[#allocation7 + $0x20] sm:$0xff]
    %v1044 = vld [vmem:[#allocation7 + $0x28] sm:$0xff]
    %v1045 = vld [vmem:[#allocation7 + $0x30] sm:$0xff]
    %v1046 = vld [vmem:[#allocation7 + $0x38] sm:$0xff]
    %v1047 = vld [vmem:[#allocation7 + $0x40] sm:$0xff]
    %v1048 = vld [vmem:[#allocation7 + $0x48] sm:$0xff]
    %v1049 = vld [vmem:[#allocation7 + $0x50] sm:$0xff]
    %v1050 = vld [vmem:[#allocation7 + $0x58] sm:$0xff]
    %v1051 = vld [vmem:[#allocation7 + $0x60] sm:$0xff]
    %v1052 = vld [vmem:[#allocation7 + $0x68] sm:$0xff]
    %v1053 = vld [vmem:[#allocation7 + $0x70] sm:$0xff]
    %v1054 = vld [vmem:[#allocation7 + $0x78] sm:$0xff]
    %v1055 = vld [vmem:[#allocation7 + $0x80] sm:$0xff]
    %v1056 = vld [vmem:[#allocation7 + $0x88] sm:$0xff]
    %v1057 = vld [vmem:[#allocation7 + $0x90] sm:$0xff]
    %v1058 = vld [vmem:[#allocation7 + $0x98] sm:$0xff]
    %v1059 = vld [vmem:[#allocation7 + $0xa0] sm:$0xff]
    %v1060 = vld [vmem:[#allocation7 + $0xa8] sm:$0xff]
    %v1061 = vld [vmem:[#allocation7 + $0xb0] sm:$0xff]
    %v1062 = vld [vmem:[#allocation7 + $0xb8] sm:$0xff]
    %v1063 = vld [vmem:[#allocation7 + $0xc0] sm:$0xff]
    %v1064 = vld [vmem:[#allocation7 + $0xc8] sm:$0xff]
    %v1065 = vld [vmem:[#allocation7 + $0xd0] sm:$0xff]
    %v1066 = vld [vmem:[#allocation7 + $0xd8] sm:$0xff]
    %v1067 = vld [vmem:[#allocation7 + $0xe0] sm:$0xff]
    %v1068 = vld [vmem:[#allocation7 + $0xe8] sm:$0xff]
    %v1069 = vld [vmem:[#allocation7 + $0xf0] sm:$0xff]
    %v1070 = vld [vmem:[#allocation7 + $0xf8] sm:$0xff]
    %v1103 = vunpack.c.l.b16 %v1039
    %v1104 = vunpack.c.h.b16 %v1039
    %v1105 = vunpack.c.l.b16 %v1040
    %v1106 = vunpack.c.h.b16 %v1040
    %v1107 = vunpack.c.l.b16 %v1041
    %v1108 = vunpack.c.h.b16 %v1041
    %v1109 = vunpack.c.l.b16 %v1042
    %v1110 = vunpack.c.h.b16 %v1042
    %v1111 = vunpack.c.l.b16 %v1043
    %v1112 = vunpack.c.h.b16 %v1043
    %v1113 = vunpack.c.l.b16 %v1044
    %v1114 = vunpack.c.h.b16 %v1044
    %v1115 = vunpack.c.l.b16 %v1045
    %v1116 = vunpack.c.h.b16 %v1045
    %v1117 = vunpack.c.l.b16 %v1046
    %v1118 = vunpack.c.h.b16 %v1046
    %v1119 = vunpack.c.l.b16 %v1047
    %v1120 = vunpack.c.h.b16 %v1047
    %v1121 = vunpack.c.l.b16 %v1048
    %v1122 = vunpack.c.h.b16 %v1048
    %v1123 = vunpack.c.l.b16 %v1049
    %v1124 = vunpack.c.h.b16 %v1049
    %v1125 = vunpack.c.l.b16 %v1050
    %v1126 = vunpack.c.h.b16 %v1050
    %v1127 = vunpack.c.l.b16 %v1051
    %v1128 = vunpack.c.h.b16 %v1051
    %v1129 = vunpack.c.l.b16 %v1052
    %v1130 = vunpack.c.h.b16 %v1052
    %v1131 = vunpack.c.l.b16 %v1053
    %v1132 = vunpack.c.h.b16 %v1053
    %v1133 = vunpack.c.l.b16 %v1054
    %v1134 = vunpack.c.h.b16 %v1054
    %v1135 = vunpack.c.l.b16 %v1055
    %v1136 = vunpack.c.h.b16 %v1055
    %v1137 = vunpack.c.l.b16 %v1056
    %v1138 = vunpack.c.h.b16 %v1056
    %v1139 = vunpack.c.l.b16 %v1057
    %v1140 = vunpack.c.h.b16 %v1057
    %v1141 = vunpack.c.l.b16 %v1058
    %v1142 = vunpack.c.h.b16 %v1058
    %v1143 = vunpack.c.l.b16 %v1059
    %v1144 = vunpack.c.h.b16 %v1059
    %v1145 = vunpack.c.l.b16 %v1060
    %v1146 = vunpack.c.h.b16 %v1060
    %v1147 = vunpack.c.l.b16 %v1061
    %v1148 = vunpack.c.h.b16 %v1061
    %v1149 = vunpack.c.l.b16 %v1062
    %v1150 = vunpack.c.h.b16 %v1062
    %v1151 = vunpack.c.l.b16 %v1063
    %v1152 = vunpack.c.h.b16 %v1063
    %v1153 = vunpack.c.l.b16 %v1064
    %v1154 = vunpack.c.h.b16 %v1064
    %v1155 = vunpack.c.l.b16 %v1065
    %v1156 = vunpack.c.h.b16 %v1065
    %v1157 = vunpack.c.l.b16 %v1066
    %v1158 = vunpack.c.h.b16 %v1066
    %v1159 = vunpack.c.l.b16 %v1067
    %v1160 = vunpack.c.h.b16 %v1067
    %v1161 = vunpack.c.l.b16 %v1068
    %v1162 = vunpack.c.h.b16 %v1068
    %v1163 = vunpack.c.l.b16 %v1069
    %v1164 = vunpack.c.h.b16 %v1069
    %v1165 = vunpack.c.l.b16 %v1070
    %v1166 = vunpack.c.h.b16 %v1070
    %v1167 = vpack.c.b16 %v1107, %v1103
    %v1168 = vpack.c.b16 %v1108, %v1104
    %v1169 = vpack.c.b16 %v1109, %v1105
    %v1170 = vpack.c.b16 %v1110, %v1106
    %v1171 = vpack.c.b16 %v1115, %v1111
    %v1172 = vpack.c.b16 %v1116, %v1112
    %v1173 = vpack.c.b16 %v1117, %v1113
    %v1174 = vpack.c.b16 %v1118, %v1114
    %v1175 = vpack.c.b16 %v1123, %v1119
    %v1176 = vpack.c.b16 %v1124, %v1120
    %v1177 = vpack.c.b16 %v1125, %v1121
    %v1178 = vpack.c.b16 %v1126, %v1122
    %v1179 = vpack.c.b16 %v1131, %v1127
    %v1180 = vpack.c.b16 %v1132, %v1128
    %v1181 = vpack.c.b16 %v1133, %v1129
    %v1182 = vpack.c.b16 %v1134, %v1130
    %v1183 = vpack.c.b16 %v1139, %v1135
    %v1184 = vpack.c.b16 %v1140, %v1136
    %v1185 = vpack.c.b16 %v1141, %v1137
    %v1186 = vpack.c.b16 %v1142, %v1138
    %v1187 = vpack.c.b16 %v1147, %v1143
    %v1188 = vpack.c.b16 %v1148, %v1144
    %v1189 = vpack.c.b16 %v1149, %v1145
    %v1190 = vpack.c.b16 %v1150, %v1146
    %v1191 = vpack.c.b16 %v1155, %v1151
    %v1192 = vpack.c.b16 %v1156, %v1152
    %v1193 = vpack.c.b16 %v1157, %v1153
    %v1194 = vpack.c.b16 %v1158, %v1154
    %v1195 = vpack.c.b16 %v1163, %v1159
    %v1196 = vpack.c.b16 %v1164, %v1160
    %v1197 = vpack.c.b16 %v1165, %v1161
    %v1198 = vpack.c.b16 %v1166, %v1162
    %1231 = vmatprep.subr.bf16.mxu0 %v1168
    %1232 = vmatpush1.bf16.msra.mxu0 %v1167
    %1233 = vmatprep.subr.bf16.mxu0 %v1172
    %1234 = vmatpush1.bf16.msra.mxu0 %v1171
    %1235 = vmatprep.subr.bf16.mxu0 %v1176
    %1236 = vmatpush1.bf16.msra.mxu0 %v1175
    %1237 = vmatprep.subr.bf16.mxu0 %v1180
    %1238 = vmatpush1.bf16.msra.mxu0 %v1179
    %1239 = vmatprep.subr.bf16.mxu0 %v1184
    %1240 = vmatpush1.bf16.msra.mxu0 %v1183
    %1241 = vmatprep.subr.bf16.mxu0 %v1188
    %1242 = vmatpush1.bf16.msra.mxu0 %v1187
    %1243 = vmatprep.subr.bf16.mxu0 %v1192
    %1244 = vmatpush1.bf16.msra.mxu0 %v1191
    %1245 = vmatprep.subr.bf16.mxu0 %v1196
    %1246 = vmatpush1.bf16.msra.mxu0 %v1195
    %1247 = vmatprep.subr.bf16.mxu0 0
    %1248 = vmatpush1.bf16.msra.mxu0 0
    %1249 = vmatprep.subr.bf16.mxu0 0
    %1250 = vmatpush1.bf16.msra.mxu0 0
    %1251 = vmatprep.subr.bf16.mxu0 0
    %1252 = vmatpush1.bf16.msra.mxu0 0
    %1253 = vmatprep.subr.bf16.mxu0 0
    %1254 = vmatpush1.bf16.msra.mxu0 0
    %1255 = vmatprep.subr.bf16.mxu0 0
    %1256 = vmatpush1.bf16.msra.mxu0 0
    %1257 = vmatprep.subr.bf16.mxu0 0
    %1258 = vmatpush1.bf16.msra.mxu0 0
    %1259 = vmatprep.subr.bf16.mxu0 0
    %1260 = vmatpush1.bf16.msra.mxu0 0
    %1261 = vmatprep.subr.bf16.mxu0 0
    %1262 = vmatpush1.bf16.msra.mxu0 0
    %1263 = vmatprep.mubr.bf16.mxu0 0
    %1264 = vmatmul.mubr.bf16.gmra.mrb[0].mxu0 %v1038
    %v1265 = vpop.f32.mrb[0].mxu0
    %v1266 = vadd.f32 0.0, %v1265
    %v1267 = vpop.f32.mrb[0].mxu0
    %v1268 = vadd.f32 0.0, %v1267
    %v1269 = vpop.f32.mrb[0].mxu0
    %v1270 = vpop.f32.mrb[0].mxu0
    %1271 = vdwg.mxu0
    %1272 = vmatprep.subr.bf16.mxu0 %v1170
    %1273 = vmatpush1.bf16.msra.mxu0 %v1169
    %1274 = vmatprep.subr.bf16.mxu0 %v1174
    %1275 = vmatpush1.bf16.msra.mxu0 %v1173
    %1276 = vmatprep.subr.bf16.mxu0 %v1178
    %1277 = vmatpush1.bf16.msra.mxu0 %v1177
    %1278 = vmatprep.subr.bf16.mxu0 %v1182
    %1279 = vmatpush1.bf16.msra.mxu0 %v1181
    %1280 = vmatprep.subr.bf16.mxu0 %v1186
    %1281 = vmatpush1.bf16.msra.mxu0 %v1185
    %1282 = vmatprep.subr.bf16.mxu0 %v1190
    %1283 = vmatpush1.bf16.msra.mxu0 %v1189
    %1284 = vmatprep.subr.bf16.mxu0 %v1194
    %1285 = vmatpush1.bf16.msra.mxu0 %v1193
    %1286 = vmatprep.subr.bf16.mxu0 %v1198
    %1287 = vmatpush1.bf16.msra.mxu0 %v1197
    %1288 = vmatprep.subr.bf16.mxu0 0
    %1289 = vmatpush1.bf16.msra.mxu0 0
    %1290 = vmatprep.subr.bf16.mxu0 0
    %1291 = vmatpush1.bf16.msra.mxu0 0
    %1292 = vmatprep.subr.bf16.mxu0 0
    %1293 = vmatpush1.bf16.msra.mxu0 0
    %1294 = vmatprep.subr.bf16.mxu0 0
    %1295 = vmatpush1.bf16.msra.mxu0 0
    %1296 = vmatprep.subr.bf16.mxu0 0
    %1297 = vmatpush1.bf16.msra.mxu0 0
    %1298 = vmatprep.subr.bf16.mxu0 0
    %1299 = vmatpush1.bf16.msra.mxu0 0
    %1300 = vmatprep.subr.bf16.mxu0 0
    %1301 = vmatpush1.bf16.msra.mxu0 0
    %1302 = vmatprep.subr.bf16.mxu0 0
    %1303 = vmatpush1.bf16.msra.mxu0 0
    %1304 = vmatprep.mubr.bf16.mxu0 0
    %1305 = vmatmul.mubr.bf16.gmra.mrb[0].mxu0 %v1038
    %v1306 = vpop.f32.mrb[0].mxu0
    %v1307 = vadd.f32 0.0, %v1306
    %v1308 = vpop.f32.mrb[0].mxu0
    %v1309 = vadd.f32 0.0, %v1308
    %v1310 = vpop.f32.mrb[0].mxu0
    %v1311 = vpop.f32.mrb[0].mxu0
    %1312 = vdwg.mxu0
    %v1317 = vcombine.low %v1266, %v1268
    %v1318 = vcombine.low %v1307, %v1309
    %v1320 = vunpack.c.l.s4 1983009808
    %v1321 = vunpack.c.0.s8 %v1320
    %v1322 = vlaneseq
    %v1323 = vshrl.u32 %v1322, 7
    %v1324 = vsub.s32 %v1321, %v1323
    %v1325 = vrot.slane %v1317, %v1324
    %v1327 = vunpack.c.l.s4 1983009808
    %v1328 = vunpack.c.0.s8 %v1327
    %v1329 = vlaneseq
    %v1330 = vshrl.u32 %v1329, 7
    %v1331 = vsub.s32 %v1328, %v1330
    %v1332 = vrot.slane %v1318, %v1331
    %v1333 = vcombine.low %v1325, %v1332
    %v1335 = vadd.f32 %v1037, %v1333
    %v1336 = vmul.f32 %v1335, 0.5
    %v1337 = vtanh.pop %v1336
    %v1338 = vadd.f32 %v1337, 1.0
    %v1339 = vmul.f32 %v1338, 0.5
    %v1341 = vrot.slane %v1335, 2
    %v1343 = vmul.f32 %v1341, 0.5
    %v1344 = vtanh.pop %v1343
    %v1345 = vadd.f32 %v1344, 1.0
    %v1346 = vmul.f32 %v1345, 0.5
    %v1347 = vrot.slane %v1335, 4
    %v1349 = vtanh.pop %v1347
    %v1350 = vrot.slane %v1335, 6
    %v1352 = vmul.f32 %v1350, 0.5
    %v1353 = vtanh.pop %v1352
    %v1354 = vadd.f32 %v1353, 1.0
    %v1355 = vmul.f32 %v1354, 0.5
    %v1356 = vmul.f32 %v1346, %v1030
    %v1357 = vmul.f32 %v1339, %v1349
    %v1358 = vadd.f32 %v1356, %v1357
    %v1359 = vtanh.pop %v1358
    %v1360 = vmul.f32 %v1355, %v1359
    %s1361 = scalar_lea.vmem [#allocation9], 6
    %1362 = vst [vmem:[%s1361] sm:$0x3] %v1360
    %s1363 = scalar_lea.vmem [#allocation4], 16
    %v1364 = vld [vmem:[%s1363] sm:$0xf]
    %v1365 = vunpack.c.l.bf16 %v1364
    %v1366 = vpack.c.bf16 %v1360, %v1360
    %v1367 = vld [vmem:[#allocation7] sm:$0xff]
    %v1368 = vld [vmem:[#allocation7 + $0x8] sm:$0xff]
    %v1369 = vld [vmem:[#allocation7 + $0x10] sm:$0xff]
    %v1370 = vld [vmem:[#allocation7 + $0x18] sm:$0xff]
    %v1371 = vld [vmem:[#allocation7 + $0x20] sm:$0xff]
    %v1372 = vld [vmem:[#allocation7 + $0x28] sm:$0xff]
    %v1373 = vld [vmem:[#allocation7 + $0x30] sm:$0xff]
    %v1374 = vld [vmem:[#allocation7 + $0x38] sm:$0xff]
    %v1375 = vld [vmem:[#allocation7 + $0x40] sm:$0xff]
    %v1376 = vld [vmem:[#allocation7 + $0x48] sm:$0xff]
    %v1377 = vld [vmem:[#allocation7 + $0x50] sm:$0xff]
    %v1378 = vld [vmem:[#allocation7 + $0x58] sm:$0xff]
    %v1379 = vld [vmem:[#allocation7 + $0x60] sm:$0xff]
    %v1380 = vld [vmem:[#allocation7 + $0x68] sm:$0xff]
    %v1381 = vld [vmem:[#allocation7 + $0x70] sm:$0xff]
    %v1382 = vld [vmem:[#allocation7 + $0x78] sm:$0xff]
    %v1383 = vld [vmem:[#allocation7 + $0x80] sm:$0xff]
    %v1384 = vld [vmem:[#allocation7 + $0x88] sm:$0xff]
    %v1385 = vld [vmem:[#allocation7 + $0x90] sm:$0xff]
    %v1386 = vld [vmem:[#allocation7 + $0x98] sm:$0xff]
    %v1387 = vld [vmem:[#allocation7 + $0xa0] sm:$0xff]
    %v1388 = vld [vmem:[#allocation7 + $0xa8] sm:$0xff]
    %v1389 = vld [vmem:[#allocation7 + $0xb0] sm:$0xff]
    %v1390 = vld [vmem:[#allocation7 + $0xb8] sm:$0xff]
    %v1391 = vld [vmem:[#allocation7 + $0xc0] sm:$0xff]
    %v1392 = vld [vmem:[#allocation7 + $0xc8] sm:$0xff]
    %v1393 = vld [vmem:[#allocation7 + $0xd0] sm:$0xff]
    %v1394 = vld [vmem:[#allocation7 + $0xd8] sm:$0xff]
    %v1395 = vld [vmem:[#allocation7 + $0xe0] sm:$0xff]
    %v1396 = vld [vmem:[#allocation7 + $0xe8] sm:$0xff]
    %v1397 = vld [vmem:[#allocation7 + $0xf0] sm:$0xff]
    %v1398 = vld [vmem:[#allocation7 + $0xf8] sm:$0xff]
    %v1431 = vunpack.c.l.b16 %v1367
    %v1432 = vunpack.c.h.b16 %v1367
    %v1433 = vunpack.c.l.b16 %v1368
    %v1434 = vunpack.c.h.b16 %v1368
    %v1435 = vunpack.c.l.b16 %v1369
    %v1436 = vunpack.c.h.b16 %v1369
    %v1437 = vunpack.c.l.b16 %v1370
    %v1438 = vunpack.c.h.b16 %v1370
    %v1439 = vunpack.c.l.b16 %v1371
    %v1440 = vunpack.c.h.b16 %v1371
    %v1441 = vunpack.c.l.b16 %v1372
    %v1442 = vunpack.c.h.b16 %v1372
    %v1443 = vunpack.c.l.b16 %v1373
    %v1444 = vunpack.c.h.b16 %v1373
    %v1445 = vunpack.c.l.b16 %v1374
    %v1446 = vunpack.c.h.b16 %v1374
    %v1447 = vunpack.c.l.b16 %v1375
    %v1448 = vunpack.c.h.b16 %v1375
    %v1449 = vunpack.c.l.b16 %v1376
    %v1450 = vunpack.c.h.b16 %v1376
    %v1451 = vunpack.c.l.b16 %v1377
    %v1452 = vunpack.c.h.b16 %v1377
    %v1453 = vunpack.c.l.b16 %v1378
    %v1454 = vunpack.c.h.b16 %v1378
    %v1455 = vunpack.c.l.b16 %v1379
    %v1456 = vunpack.c.h.b16 %v1379
    %v1457 = vunpack.c.l.b16 %v1380
    %v1458 = vunpack.c.h.b16 %v1380
    %v1459 = vunpack.c.l.b16 %v1381
    %v1460 = vunpack.c.h.b16 %v1381
    %v1461 = vunpack.c.l.b16 %v1382
    %v1462 = vunpack.c.h.b16 %v1382
    %v1463 = vunpack.c.l.b16 %v1383
    %v1464 = vunpack.c.h.b16 %v1383
    %v1465 = vunpack.c.l.b16 %v1384
    %v1466 = vunpack.c.h.b16 %v1384
    %v1467 = vunpack.c.l.b16 %v1385
    %v1468 = vunpack.c.h.b16 %v1385
    %v1469 = vunpack.c.l.b16 %v1386
    %v1470 = vunpack.c.h.b16 %v1386
    %v1471 = vunpack.c.l.b16 %v1387
    %v1472 = vunpack.c.h.b16 %v1387
    %v1473 = vunpack.c.l.b16 %v1388
    %v1474 = vunpack.c.h.b16 %v1388
    %v1475 = vunpack.c.l.b16 %v1389
    %v1476 = vunpack.c.h.b16 %v1389
    %v1477 = vunpack.c.l.b16 %v1390
    %v1478 = vunpack.c.h.b16 %v1390
    %v1479 = vunpack.c.l.b16 %v1391
    %v1480 = vunpack.c.h.b16 %v1391
    %v1481 = vunpack.c.l.b16 %v1392
    %v1482 = vunpack.c.h.b16 %v1392
    %v1483 = vunpack.c.l.b16 %v1393
    %v1484 = vunpack.c.h.b16 %v1393
    %v1485 = vunpack.c.l.b16 %v1394
    %v1486 = vunpack.c.h.b16 %v1394
    %v1487 = vunpack.c.l.b16 %v1395
    %v1488 = vunpack.c.h.b16 %v1395
    %v1489 = vunpack.c.l.b16 %v1396
    %v1490 = vunpack.c.h.b16 %v1396
    %v1491 = vunpack.c.l.b16 %v1397
    %v1492 = vunpack.c.h.b16 %v1397
    %v1493 = vunpack.c.l.b16 %v1398
    %v1494 = vunpack.c.h.b16 %v1398
    %v1495 = vpack.c.b16 %v1435, %v1431
    %v1496 = vpack.c.b16 %v1436, %v1432
    %v1497 = vpack.c.b16 %v1437, %v1433
    %v1498 = vpack.c.b16 %v1438, %v1434
    %v1499 = vpack.c.b16 %v1443, %v1439
    %v1500 = vpack.c.b16 %v1444, %v1440
    %v1501 = vpack.c.b16 %v1445, %v1441
    %v1502 = vpack.c.b16 %v1446, %v1442
    %v1503 = vpack.c.b16 %v1451, %v1447
    %v1504 = vpack.c.b16 %v1452, %v1448
    %v1505 = vpack.c.b16 %v1453, %v1449
    %v1506 = vpack.c.b16 %v1454, %v1450
    %v1507 = vpack.c.b16 %v1459, %v1455
    %v1508 = vpack.c.b16 %v1460, %v1456
    %v1509 = vpack.c.b16 %v1461, %v1457
    %v1510 = vpack.c.b16 %v1462, %v1458
    %v1511 = vpack.c.b16 %v1467, %v1463
    %v1512 = vpack.c.b16 %v1468, %v1464
    %v1513 = vpack.c.b16 %v1469, %v1465
    %v1514 = vpack.c.b16 %v1470, %v1466
    %v1515 = vpack.c.b16 %v1475, %v1471
    %v1516 = vpack.c.b16 %v1476, %v1472
    %v1517 = vpack.c.b16 %v1477, %v1473
    %v1518 = vpack.c.b16 %v1478, %v1474
    %v1519 = vpack.c.b16 %v1483, %v1479
    %v1520 = vpack.c.b16 %v1484, %v1480
    %v1521 = vpack.c.b16 %v1485, %v1481
    %v1522 = vpack.c.b16 %v1486, %v1482
    %v1523 = vpack.c.b16 %v1491, %v1487
    %v1524 = vpack.c.b16 %v1492, %v1488
    %v1525 = vpack.c.b16 %v1493, %v1489
    %v1526 = vpack.c.b16 %v1494, %v1490
    %1559 = vmatprep.subr.bf16.mxu0 %v1496
    %1560 = vmatpush1.bf16.msra.mxu0 %v1495
    %1561 = vmatprep.subr.bf16.mxu0 %v1500
    %1562 = vmatpush1.bf16.msra.mxu0 %v1499
    %1563 = vmatprep.subr.bf16.mxu0 %v1504
    %1564 = vmatpush1.bf16.msra.mxu0 %v1503
    %1565 = vmatprep.subr.bf16.mxu0 %v1508
    %1566 = vmatpush1.bf16.msra.mxu0 %v1507
    %1567 = vmatprep.subr.bf16.mxu0 %v1512
    %1568 = vmatpush1.bf16.msra.mxu0 %v1511
    %1569 = vmatprep.subr.bf16.mxu0 %v1516
    %1570 = vmatpush1.bf16.msra.mxu0 %v1515
    %1571 = vmatprep.subr.bf16.mxu0 %v1520
    %1572 = vmatpush1.bf16.msra.mxu0 %v1519
    %1573 = vmatprep.subr.bf16.mxu0 %v1524
    %1574 = vmatpush1.bf16.msra.mxu0 %v1523
    %1575 = vmatprep.subr.bf16.mxu0 0
    %1576 = vmatpush1.bf16.msra.mxu0 0
    %1577 = vmatprep.subr.bf16.mxu0 0
    %1578 = vmatpush1.bf16.msra.mxu0 0
    %1579 = vmatprep.subr.bf16.mxu0 0
    %1580 = vmatpush1.bf16.msra.mxu0 0
    %1581 = vmatprep.subr.bf16.mxu0 0
    %1582 = vmatpush1.bf16.msra.mxu0 0
    %1583 = vmatprep.subr.bf16.mxu0 0
    %1584 = vmatpush1.bf16.msra.mxu0 0
    %1585 = vmatprep.subr.bf16.mxu0 0
    %1586 = vmatpush1.bf16.msra.mxu0 0
    %1587 = vmatprep.subr.bf16.mxu0 0
    %1588 = vmatpush1.bf16.msra.mxu0 0
    %1589 = vmatprep.subr.bf16.mxu0 0
    %1590 = vmatpush1.bf16.msra.mxu0 0
    %1591 = vmatprep.mubr.bf16.mxu0 0
    %1592 = vmatmul.mubr.bf16.gmra.mrb[0].mxu0 %v1366
    %v1593 = vpop.f32.mrb[0].mxu0
    %v1594 = vadd.f32 0.0, %v1593
    %v1595 = vpop.f32.mrb[0].mxu0
    %v1596 = vadd.f32 0.0, %v1595
    %v1597 = vpop.f32.mrb[0].mxu0
    %v1598 = vpop.f32.mrb[0].mxu0
    %1599 = vdwg.mxu0
    %1600 = vmatprep.subr.bf16.mxu0 %v1498
    %1601 = vmatpush1.bf16.msra.mxu0 %v1497
    %1602 = vmatprep.subr.bf16.mxu0 %v1502
    %1603 = vmatpush1.bf16.msra.mxu0 %v1501
    %1604 = vmatprep.subr.bf16.mxu0 %v1506
    %1605 = vmatpush1.bf16.msra.mxu0 %v1505
    %1606 = vmatprep.subr.bf16.mxu0 %v1510
    %1607 = vmatpush1.bf16.msra.mxu0 %v1509
    %1608 = vmatprep.subr.bf16.mxu0 %v1514
    %1609 = vmatpush1.bf16.msra.mxu0 %v1513
    %1610 = vmatprep.subr.bf16.mxu0 %v1518
    %1611 = vmatpush1.bf16.msra.mxu0 %v1517
    %1612 = vmatprep.subr.bf16.mxu0 %v1522
    %1613 = vmatpush1.bf16.msra.mxu0 %v1521
    %1614 = vmatprep.subr.bf16.mxu0 %v1526
    %1615 = vmatpush1.bf16.msra.mxu0 %v1525
    %1616 = vmatprep.subr.bf16.mxu0 0
    %1617 = vmatpush1.bf16.msra.mxu0 0
    %1618 = vmatprep.subr.bf16.mxu0 0
    %1619 = vmatpush1.bf16.msra.mxu0 0
    %1620 = vmatprep.subr.bf16.mxu0 0
    %1621 = vmatpush1.bf16.msra.mxu0 0
    %1622 = vmatprep.subr.bf16.mxu0 0
    %1623 = vmatpush1.bf16.msra.mxu0 0
    %1624 = vmatprep.subr.bf16.mxu0 0
    %1625 = vmatpush1.bf16.msra.mxu0 0
    %1626 = vmatprep.subr.bf16.mxu0 0
    %1627 = vmatpush1.bf16.msra.mxu0 0
    %1628 = vmatprep.subr.bf16.mxu0 0
    %1629 = vmatpush1.bf16.msra.mxu0 0
    %1630 = vmatprep.subr.bf16.mxu0 0
    %1631 = vmatpush1.bf16.msra.mxu0 0
    %1632 = vmatprep.mubr.bf16.mxu0 0
    %1633 = vmatmul.mubr.bf16.gmra.mrb[0].mxu0 %v1366
    %v1634 = vpop.f32.mrb[0].mxu0
    %v1635 = vadd.f32 0.0, %v1634
    %v1636 = vpop.f32.mrb[0].mxu0
    %v1637 = vadd.f32 0.0, %v1636
    %v1638 = vpop.f32.mrb[0].mxu0
    %v1639 = vpop.f32.mrb[0].mxu0
    %1640 = vdwg.mxu0
    %v1645 = vcombine.low %v1594, %v1596
    %v1646 = vcombine.low %v1635, %v1637
    %v1648 = vunpack.c.l.s4 1983009808
    %v1649 = vunpack.c.0.s8 %v1648
    %v1650 = vlaneseq
    %v1651 = vshrl.u32 %v1650, 7
    %v1652 = vsub.s32 %v1649, %v1651
    %v1653 = vrot.slane %v1645, %v1652
    %v1655 = vunpack.c.l.s4 1983009808
    %v1656 = vunpack.c.0.s8 %v1655
    %v1657 = vlaneseq
    %v1658 = vshrl.u32 %v1657, 7
    %v1659 = vsub.s32 %v1656, %v1658
    %v1660 = vrot.slane %v1646, %v1659
    %v1661 = vcombine.low %v1653, %v1660
    %v1663 = vadd.f32 %v1365, %v1661
    %v1664 = vmul.f32 %v1663, 0.5
    %v1665 = vtanh.pop %v1664
    %v1666 = vadd.f32 %v1665, 1.0
    %v1667 = vmul.f32 %v1666, 0.5
    %v1669 = vrot.slane %v1663, 2
    %v1671 = vmul.f32 %v1669, 0.5
    %v1672 = vtanh.pop %v1671
    %v1673 = vadd.f32 %v1672, 1.0
    %v1674 = vmul.f32 %v1673, 0.5
    %v1675 = vrot.slane %v1663, 4
    %v1677 = vtanh.pop %v1675
    %v1678 = vrot.slane %v1663, 6
    %v1680 = vmul.f32 %v1678, 0.5
    %v1681 = vtanh.pop %v1680
    %v1682 = vadd.f32 %v1681, 1.0
    %v1683 = vmul.f32 %v1682, 0.5
    %v1684 = vmul.f32 %v1674, %v1358
    %v1685 = vmul.f32 %v1667, %v1677
    %v1686 = vadd.f32 %v1684, %v1685
    %v1687 = vtanh.pop %v1686
    %v1688 = vmul.f32 %v1683, %v1687
    %s1689 = scalar_lea.vmem [#allocation9], 8
    %1690 = vst [vmem:[%s1689] sm:$0x3] %v1688
    %s1691 = scalar_lea.vmem [#allocation4], 20
    %v1692 = vld [vmem:[%s1691] sm:$0xf]
    %v1693 = vunpack.c.l.bf16 %v1692
    %v1694 = vpack.c.bf16 %v1688, %v1688
    %v1695 = vld [vmem:[#allocation7] sm:$0xff]
    %v1696 = vld [vmem:[#allocation7 + $0x8] sm:$0xff]
    %v1697 = vld [vmem:[#allocation7 + $0x10] sm:$0xff]
    %v1698 = vld [vmem:[#allocation7 + $0x18] sm:$0xff]
    %v1699 = vld [vmem:[#allocation7 + $0x20] sm:$0xff]
    %v1700 = vld [vmem:[#allocation7 + $0x28] sm:$0xff]
    %v1701 = vld [vmem:[#allocation7 + $0x30] sm:$0xff]
    %v1702 = vld [vmem:[#allocation7 + $0x38] sm:$0xff]
    %v1703 = vld [vmem:[#allocation7 + $0x40] sm:$0xff]
    %v1704 = vld [vmem:[#allocation7 + $0x48] sm:$0xff]
    %v1705 = vld [vmem:[#allocation7 + $0x50] sm:$0xff]
    %v1706 = vld [vmem:[#allocation7 + $0x58] sm:$0xff]
    %v1707 = vld [vmem:[#allocation7 + $0x60] sm:$0xff]
    %v1708 = vld [vmem:[#allocation7 + $0x68] sm:$0xff]
    %v1709 = vld [vmem:[#allocation7 + $0x70] sm:$0xff]
    %v1710 = vld [vmem:[#allocation7 + $0x78] sm:$0xff]
    %v1711 = vld [vmem:[#allocation7 + $0x80] sm:$0xff]
    %v1712 = vld [vmem:[#allocation7 + $0x88] sm:$0xff]
    %v1713 = vld [vmem:[#allocation7 + $0x90] sm:$0xff]
    %v1714 = vld [vmem:[#allocation7 + $0x98] sm:$0xff]
    %v1715 = vld [vmem:[#allocation7 + $0xa0] sm:$0xff]
    %v1716 = vld [vmem:[#allocation7 + $0xa8] sm:$0xff]
    %v1717 = vld [vmem:[#allocation7 + $0xb0] sm:$0xff]
    %v1718 = vld [vmem:[#allocation7 + $0xb8] sm:$0xff]
    %v1719 = vld [vmem:[#allocation7 + $0xc0] sm:$0xff]
    %v1720 = vld [vmem:[#allocation7 + $0xc8] sm:$0xff]
    %v1721 = vld [vmem:[#allocation7 + $0xd0] sm:$0xff]
    %v1722 = vld [vmem:[#allocation7 + $0xd8] sm:$0xff]
    %v1723 = vld [vmem:[#allocation7 + $0xe0] sm:$0xff]
    %v1724 = vld [vmem:[#allocation7 + $0xe8] sm:$0xff]
    %v1725 = vld [vmem:[#allocation7 + $0xf0] sm:$0xff]
    %v1726 = vld [vmem:[#allocation7 + $0xf8] sm:$0xff]
    %v1759 = vunpack.c.l.b16 %v1695
    %v1760 = vunpack.c.h.b16 %v1695
    %v1761 = vunpack.c.l.b16 %v1696
    %v1762 = vunpack.c.h.b16 %v1696
    %v1763 = vunpack.c.l.b16 %v1697
    %v1764 = vunpack.c.h.b16 %v1697
    %v1765 = vunpack.c.l.b16 %v1698
    %v1766 = vunpack.c.h.b16 %v1698
    %v1767 = vunpack.c.l.b16 %v1699
    %v1768 = vunpack.c.h.b16 %v1699
    %v1769 = vunpack.c.l.b16 %v1700
    %v1770 = vunpack.c.h.b16 %v1700
    %v1771 = vunpack.c.l.b16 %v1701
    %v1772 = vunpack.c.h.b16 %v1701
    %v1773 = vunpack.c.l.b16 %v1702
    %v1774 = vunpack.c.h.b16 %v1702
    %v1775 = vunpack.c.l.b16 %v1703
    %v1776 = vunpack.c.h.b16 %v1703
    %v1777 = vunpack.c.l.b16 %v1704
    %v1778 = vunpack.c.h.b16 %v1704
    %v1779 = vunpack.c.l.b16 %v1705
    %v1780 = vunpack.c.h.b16 %v1705
    %v1781 = vunpack.c.l.b16 %v1706
    %v1782 = vunpack.c.h.b16 %v1706
    %v1783 = vunpack.c.l.b16 %v1707
    %v1784 = vunpack.c.h.b16 %v1707
    %v1785 = vunpack.c.l.b16 %v1708
    %v1786 = vunpack.c.h.b16 %v1708
    %v1787 = vunpack.c.l.b16 %v1709
    %v1788 = vunpack.c.h.b16 %v1709
    %v1789 = vunpack.c.l.b16 %v1710
    %v1790 = vunpack.c.h.b16 %v1710
    %v1791 = vunpack.c.l.b16 %v1711
    %v1792 = vunpack.c.h.b16 %v1711
    %v1793 = vunpack.c.l.b16 %v1712
    %v1794 = vunpack.c.h.b16 %v1712
    %v1795 = vunpack.c.l.b16 %v1713
    %v1796 = vunpack.c.h.b16 %v1713
    %v1797 = vunpack.c.l.b16 %v1714
    %v1798 = vunpack.c.h.b16 %v1714
    %v1799 = vunpack.c.l.b16 %v1715
    %v1800 = vunpack.c.h.b16 %v1715
    %v1801 = vunpack.c.l.b16 %v1716
    %v1802 = vunpack.c.h.b16 %v1716
    %v1803 = vunpack.c.l.b16 %v1717
    %v1804 = vunpack.c.h.b16 %v1717
    %v1805 = vunpack.c.l.b16 %v1718
    %v1806 = vunpack.c.h.b16 %v1718
    %v1807 = vunpack.c.l.b16 %v1719
    %v1808 = vunpack.c.h.b16 %v1719
    %v1809 = vunpack.c.l.b16 %v1720
    %v1810 = vunpack.c.h.b16 %v1720
    %v1811 = vunpack.c.l.b16 %v1721
    %v1812 = vunpack.c.h.b16 %v1721
    %v1813 = vunpack.c.l.b16 %v1722
    %v1814 = vunpack.c.h.b16 %v1722
    %v1815 = vunpack.c.l.b16 %v1723
    %v1816 = vunpack.c.h.b16 %v1723
    %v1817 = vunpack.c.l.b16 %v1724
    %v1818 = vunpack.c.h.b16 %v1724
    %v1819 = vunpack.c.l.b16 %v1725
    %v1820 = vunpack.c.h.b16 %v1725
    %v1821 = vunpack.c.l.b16 %v1726
    %v1822 = vunpack.c.h.b16 %v1726
    %v1823 = vpack.c.b16 %v1763, %v1759
    %v1824 = vpack.c.b16 %v1764, %v1760
    %v1825 = vpack.c.b16 %v1765, %v1761
    %v1826 = vpack.c.b16 %v1766, %v1762
    %v1827 = vpack.c.b16 %v1771, %v1767
    %v1828 = vpack.c.b16 %v1772, %v1768
    %v1829 = vpack.c.b16 %v1773, %v1769
    %v1830 = vpack.c.b16 %v1774, %v1770
    %v1831 = vpack.c.b16 %v1779, %v1775
    %v1832 = vpack.c.b16 %v1780, %v1776
    %v1833 = vpack.c.b16 %v1781, %v1777
    %v1834 = vpack.c.b16 %v1782, %v1778
    %v1835 = vpack.c.b16 %v1787, %v1783
    %v1836 = vpack.c.b16 %v1788, %v1784
    %v1837 = vpack.c.b16 %v1789, %v1785
    %v1838 = vpack.c.b16 %v1790, %v1786
    %v1839 = vpack.c.b16 %v1795, %v1791
    %v1840 = vpack.c.b16 %v1796, %v1792
    %v1841 = vpack.c.b16 %v1797, %v1793
    %v1842 = vpack.c.b16 %v1798, %v1794
    %v1843 = vpack.c.b16 %v1803, %v1799
    %v1844 = vpack.c.b16 %v1804, %v1800
    %v1845 = vpack.c.b16 %v1805, %v1801
    %v1846 = vpack.c.b16 %v1806, %v1802
    %v1847 = vpack.c.b16 %v1811, %v1807
    %v1848 = vpack.c.b16 %v1812, %v1808
    %v1849 = vpack.c.b16 %v1813, %v1809
    %v1850 = vpack.c.b16 %v1814, %v1810
    %v1851 = vpack.c.b16 %v1819, %v1815
    %v1852 = vpack.c.b16 %v1820, %v1816
    %v1853 = vpack.c.b16 %v1821, %v1817
    %v1854 = vpack.c.b16 %v1822, %v1818
    %1887 = vmatprep.subr.bf16.mxu0 %v1824
    %1888 = vmatpush1.bf16.msra.mxu0 %v1823
    %1889 = vmatprep.subr.bf16.mxu0 %v1828
    %1890 = vmatpush1.bf16.msra.mxu0 %v1827
    %1891 = vmatprep.subr.bf16.mxu0 %v1832
    %1892 = vmatpush1.bf16.msra.mxu0 %v1831
    %1893 = vmatprep.subr.bf16.mxu0 %v1836
    %1894 = vmatpush1.bf16.msra.mxu0 %v1835
    %1895 = vmatprep.subr.bf16.mxu0 %v1840
    %1896 = vmatpush1.bf16.msra.mxu0 %v1839
    %1897 = vmatprep.subr.bf16.mxu0 %v1844
    %1898 = vmatpush1.bf16.msra.mxu0 %v1843
    %1899 = vmatprep.subr.bf16.mxu0 %v1848
    %1900 = vmatpush1.bf16.msra.mxu0 %v1847
    %1901 = vmatprep.subr.bf16.mxu0 %v1852
    %1902 = vmatpush1.bf16.msra.mxu0 %v1851
    %1903 = vmatprep.subr.bf16.mxu0 0
    %1904 = vmatpush1.bf16.msra.mxu0 0
    %1905 = vmatprep.subr.bf16.mxu0 0
    %1906 = vmatpush1.bf16.msra.mxu0 0
    %1907 = vmatprep.subr.bf16.mxu0 0
    %1908 = vmatpush1.bf16.msra.mxu0 0
    %1909 = vmatprep.subr.bf16.mxu0 0
    %1910 = vmatpush1.bf16.msra.mxu0 0
    %1911 = vmatprep.subr.bf16.mxu0 0
    %1912 = vmatpush1.bf16.msra.mxu0 0
    %1913 = vmatprep.subr.bf16.mxu0 0
    %1914 = vmatpush1.bf16.msra.mxu0 0
    %1915 = vmatprep.subr.bf16.mxu0 0
    %1916 = vmatpush1.bf16.msra.mxu0 0
    %1917 = vmatprep.subr.bf16.mxu0 0
    %1918 = vmatpush1.bf16.msra.mxu0 0
    %1919 = vmatprep.mubr.bf16.mxu0 0
    %1920 = vmatmul.mubr.bf16.gmra.mrb[0].mxu0 %v1694
    %v1921 = vpop.f32.mrb[0].mxu0
    %v1922 = vadd.f32 0.0, %v1921
    %v1923 = vpop.f32.mrb[0].mxu0
    %v1924 = vadd.f32 0.0, %v1923
    %v1925 = vpop.f32.mrb[0].mxu0
    %v1926 = vpop.f32.mrb[0].mxu0
    %1927 = vdwg.mxu0
    %1928 = vmatprep.subr.bf16.mxu0 %v1826
    %1929 = vmatpush1.bf16.msra.mxu0 %v1825
    %1930 = vmatprep.subr.bf16.mxu0 %v1830
    %1931 = vmatpush1.bf16.msra.mxu0 %v1829
    %1932 = vmatprep.subr.bf16.mxu0 %v1834
    %1933 = vmatpush1.bf16.msra.mxu0 %v1833
    %1934 = vmatprep.subr.bf16.mxu0 %v1838
    %1935 = vmatpush1.bf16.msra.mxu0 %v1837
    %1936 = vmatprep.subr.bf16.mxu0 %v1842
    %1937 = vmatpush1.bf16.msra.mxu0 %v1841
    %1938 = vmatprep.subr.bf16.mxu0 %v1846
    %1939 = vmatpush1.bf16.msra.mxu0 %v1845
    %1940 = vmatprep.subr.bf16.mxu0 %v1850
    %1941 = vmatpush1.bf16.msra.mxu0 %v1849
    %1942 = vmatprep.subr.bf16.mxu0 %v1854
    %1943 = vmatpush1.bf16.msra.mxu0 %v1853
    %1944 = vmatprep.subr.bf16.mxu0 0
    %1945 = vmatpush1.bf16.msra.mxu0 0
    %1946 = vmatprep.subr.bf16.mxu0 0
    %1947 = vmatpush1.bf16.msra.mxu0 0
    %1948 = vmatprep.subr.bf16.mxu0 0
    %1949 = vmatpush1.bf16.msra.mxu0 0
    %1950 = vmatprep.subr.bf16.mxu0 0
    %1951 = vmatpush1.bf16.msra.mxu0 0
    %1952 = vmatprep.subr.bf16.mxu0 0
    %1953 = vmatpush1.bf16.msra.mxu0 0
    %1954 = vmatprep.subr.bf16.mxu0 0
    %1955 = vmatpush1.bf16.msra.mxu0 0
    %1956 = vmatprep.subr.bf16.mxu0 0
    %1957 = vmatpush1.bf16.msra.mxu0 0
    %1958 = vmatprep.subr.bf16.mxu0 0
    %1959 = vmatpush1.bf16.msra.mxu0 0
    %1960 = vmatprep.mubr.bf16.mxu0 0
    %1961 = vmatmul.mubr.bf16.gmra.mrb[0].mxu0 %v1694
    %v1962 = vpop.f32.mrb[0].mxu0
    %v1963 = vadd.f32 0.0, %v1962
    %v1964 = vpop.f32.mrb[0].mxu0
    %v1965 = vadd.f32 0.0, %v1964
    %v1966 = vpop.f32.mrb[0].mxu0
    %v1967 = vpop.f32.mrb[0].mxu0
    %1968 = vdwg.mxu0
    %v1973 = vcombine.low %v1922, %v1924
    %v1974 = vcombine.low %v1963, %v1965
    %v1976 = vunpack.c.l.s4 1983009808
    %v1977 = vunpack.c.0.s8 %v1976
    %v1978 = vlaneseq
    %v1979 = vshrl.u32 %v1978, 7
    %v1980 = vsub.s32 %v1977, %v1979
    %v1981 = vrot.slane %v1973, %v1980
    %v1983 = vunpack.c.l.s4 1983009808
    %v1984 = vunpack.c.0.s8 %v1983
    %v1985 = vlaneseq
    %v1986 = vshrl.u32 %v1985, 7
    %v1987 = vsub.s32 %v1984, %v1986
    %v1988 = vrot.slane %v1974, %v1987
    %v1989 = vcombine.low %v1981, %v1988
    %v1991 = vadd.f32 %v1693, %v1989
    %v1992 = vmul.f32 %v1991, 0.5
    %v1993 = vtanh.pop %v1992
    %v1994 = vadd.f32 %v1993, 1.0
    %v1995 = vmul.f32 %v1994, 0.5
    %v1997 = vrot.slane %v1991, 2
    %v1999 = vmul.f32 %v1997, 0.5
    %v2000 = vtanh.pop %v1999
    %v2001 = vadd.f32 %v2000, 1.0
    %v2002 = vmul.f32 %v2001, 0.5
    %v2003 = vrot.slane %v1991, 4
    %v2005 = vtanh.pop %v2003
    %v2006 = vrot.slane %v1991, 6
    %v2008 = vmul.f32 %v2006, 0.5
    %v2009 = vtanh.pop %v2008
    %v2010 = vadd.f32 %v2009, 1.0
    %v2011 = vmul.f32 %v2010, 0.5
    %v2012 = vmul.f32 %v2002, %v1686
    %v2013 = vmul.f32 %v1995, %v2005
    %v2014 = vadd.f32 %v2012, %v2013
    %v2015 = vtanh.pop %v2014
    %v2016 = vmul.f32 %v2011, %v2015
    %s2017 = scalar_lea.vmem [#allocation9], 10
    %2018 = vst [vmem:[%s2017] sm:$0x3] %v2016
    %s2019 = scalar_lea.vmem [#allocation4], 24
    %v2020 = vld [vmem:[%s2019] sm:$0xf]
    %v2021 = vunpack.c.l.bf16 %v2020
    %v2022 = vpack.c.bf16 %v2016, %v2016
    %v2023 = vld [vmem:[#allocation7] sm:$0xff]
    %v2024 = vld [vmem:[#allocation7 + $0x8] sm:$0xff]
    %v2025 = vld [vmem:[#allocation7 + $0x10] sm:$0xff]
    %v2026 = vld [vmem:[#allocation7 + $0x18] sm:$0xff]
    %v2027 = vld [vmem:[#allocation7 + $0x20] sm:$0xff]
    %v2028 = vld [vmem:[#allocation7 + $0x28] sm:$0xff]
    %v2029 = vld [vmem:[#allocation7 + $0x30] sm:$0xff]
    %v2030 = vld [vmem:[#allocation7 + $0x38] sm:$0xff]
    %v2031 = vld [vmem:[#allocation7 + $0x40] sm:$0xff]
    %v2032 = vld [vmem:[#allocation7 + $0x48] sm:$0xff]
    %v2033 = vld [vmem:[#allocation7 + $0x50] sm:$0xff]
    %v2034 = vld [vmem:[#allocation7 + $0x58] sm:$0xff]
    %v2035 = vld [vmem:[#allocation7 + $0x60] sm:$0xff]
    %v2036 = vld [vmem:[#allocation7 + $0x68] sm:$0xff]
    %v2037 = vld [vmem:[#allocation7 + $0x70] sm:$0xff]
    %v2038 = vld [vmem:[#allocation7 + $0x78] sm:$0xff]
    %v2039 = vld [vmem:[#allocation7 + $0x80] sm:$0xff]
    %v2040 = vld [vmem:[#allocation7 + $0x88] sm:$0xff]
    %v2041 = vld [vmem:[#allocation7 + $0x90] sm:$0xff]
    %v2042 = vld [vmem:[#allocation7 + $0x98] sm:$0xff]
    %v2043 = vld [vmem:[#allocation7 + $0xa0] sm:$0xff]
    %v2044 = vld [vmem:[#allocation7 + $0xa8] sm:$0xff]
    %v2045 = vld [vmem:[#allocation7 + $0xb0] sm:$0xff]
    %v2046 = vld [vmem:[#allocation7 + $0xb8] sm:$0xff]
    %v2047 = vld [vmem:[#allocation7 + $0xc0] sm:$0xff]
    %v2048 = vld [vmem:[#allocation7 + $0xc8] sm:$0xff]
    %v2049 = vld [vmem:[#allocation7 + $0xd0] sm:$0xff]
    %v2050 = vld [vmem:[#allocation7 + $0xd8] sm:$0xff]
    %v2051 = vld [vmem:[#allocation7 + $0xe0] sm:$0xff]
    %v2052 = vld [vmem:[#allocation7 + $0xe8] sm:$0xff]
    %v2053 = vld [vmem:[#allocation7 + $0xf0] sm:$0xff]
    %v2054 = vld [vmem:[#allocation7 + $0xf8] sm:$0xff]
    %v2087 = vunpack.c.l.b16 %v2023
    %v2088 = vunpack.c.h.b16 %v2023
    %v2089 = vunpack.c.l.b16 %v2024
    %v2090 = vunpack.c.h.b16 %v2024
    %v2091 = vunpack.c.l.b16 %v2025
    %v2092 = vunpack.c.h.b16 %v2025
    %v2093 = vunpack.c.l.b16 %v2026
    %v2094 = vunpack.c.h.b16 %v2026
    %v2095 = vunpack.c.l.b16 %v2027
    %v2096 = vunpack.c.h.b16 %v2027
    %v2097 = vunpack.c.l.b16 %v2028
    %v2098 = vunpack.c.h.b16 %v2028
    %v2099 = vunpack.c.l.b16 %v2029
    %v2100 = vunpack.c.h.b16 %v2029
    %v2101 = vunpack.c.l.b16 %v2030
    %v2102 = vunpack.c.h.b16 %v2030
    %v2103 = vunpack.c.l.b16 %v2031
    %v2104 = vunpack.c.h.b16 %v2031
    %v2105 = vunpack.c.l.b16 %v2032
    %v2106 = vunpack.c.h.b16 %v2032
    %v2107 = vunpack.c.l.b16 %v2033
    %v2108 = vunpack.c.h.b16 %v2033
    %v2109 = vunpack.c.l.b16 %v2034
    %v2110 = vunpack.c.h.b16 %v2034
    %v2111 = vunpack.c.l.b16 %v2035
    %v2112 = vunpack.c.h.b16 %v2035
    %v2113 = vunpack.c.l.b16 %v2036
    %v2114 = vunpack.c.h.b16 %v2036
    %v2115 = vunpack.c.l.b16 %v2037
    %v2116 = vunpack.c.h.b16 %v2037
    %v2117 = vunpack.c.l.b16 %v2038
    %v2118 = vunpack.c.h.b16 %v2038
    %v2119 = vunpack.c.l.b16 %v2039
    %v2120 = vunpack.c.h.b16 %v2039
    %v2121 = vunpack.c.l.b16 %v2040
    %v2122 = vunpack.c.h.b16 %v2040
    %v2123 = vunpack.c.l.b16 %v2041
    %v2124 = vunpack.c.h.b16 %v2041
    %v2125 = vunpack.c.l.b16 %v2042
    %v2126 = vunpack.c.h.b16 %v2042
    %v2127 = vunpack.c.l.b16 %v2043
    %v2128 = vunpack.c.h.b16 %v2043
    %v2129 = vunpack.c.l.b16 %v2044
    %v2130 = vunpack.c.h.b16 %v2044
    %v2131 = vunpack.c.l.b16 %v2045
    %v2132 = vunpack.c.h.b16 %v2045
    %v2133 = vunpack.c.l.b16 %v2046
    %v2134 = vunpack.c.h.b16 %v2046
    %v2135 = vunpack.c.l.b16 %v2047
    %v2136 = vunpack.c.h.b16 %v2047
    %v2137 = vunpack.c.l.b16 %v2048
    %v2138 = vunpack.c.h.b16 %v2048
    %v2139 = vunpack.c.l.b16 %v2049
    %v2140 = vunpack.c.h.b16 %v2049
    %v2141 = vunpack.c.l.b16 %v2050
    %v2142 = vunpack.c.h.b16 %v2050
    %v2143 = vunpack.c.l.b16 %v2051
    %v2144 = vunpack.c.h.b16 %v2051
    %v2145 = vunpack.c.l.b16 %v2052
    %v2146 = vunpack.c.h.b16 %v2052
    %v2147 = vunpack.c.l.b16 %v2053
    %v2148 = vunpack.c.h.b16 %v2053
    %v2149 = vunpack.c.l.b16 %v2054
    %v2150 = vunpack.c.h.b16 %v2054
    %v2151 = vpack.c.b16 %v2091, %v2087
    %v2152 = vpack.c.b16 %v2092, %v2088
    %v2153 = vpack.c.b16 %v2093, %v2089
    %v2154 = vpack.c.b16 %v2094, %v2090
    %v2155 = vpack.c.b16 %v2099, %v2095
    %v2156 = vpack.c.b16 %v2100, %v2096
    %v2157 = vpack.c.b16 %v2101, %v2097
    %v2158 = vpack.c.b16 %v2102, %v2098
    %v2159 = vpack.c.b16 %v2107, %v2103
    %v2160 = vpack.c.b16 %v2108, %v2104
    %v2161 = vpack.c.b16 %v2109, %v2105
    %v2162 = vpack.c.b16 %v2110, %v2106
    %v2163 = vpack.c.b16 %v2115, %v2111
    %v2164 = vpack.c.b16 %v2116, %v2112
    %v2165 = vpack.c.b16 %v2117, %v2113
    %v2166 = vpack.c.b16 %v2118, %v2114
    %v2167 = vpack.c.b16 %v2123, %v2119
    %v2168 = vpack.c.b16 %v2124, %v2120
    %v2169 = vpack.c.b16 %v2125, %v2121
    %v2170 = vpack.c.b16 %v2126, %v2122
    %v2171 = vpack.c.b16 %v2131, %v2127
    %v2172 = vpack.c.b16 %v2132, %v2128
    %v2173 = vpack.c.b16 %v2133, %v2129
    %v2174 = vpack.c.b16 %v2134, %v2130
    %v2175 = vpack.c.b16 %v2139, %v2135
    %v2176 = vpack.c.b16 %v2140, %v2136
    %v2177 = vpack.c.b16 %v2141, %v2137
    %v2178 = vpack.c.b16 %v2142, %v2138
    %v2179 = vpack.c.b16 %v2147, %v2143
    %v2180 = vpack.c.b16 %v2148, %v2144
    %v2181 = vpack.c.b16 %v2149, %v2145
    %v2182 = vpack.c.b16 %v2150, %v2146
    %2215 = vmatprep.subr.bf16.mxu0 %v2152
    %2216 = vmatpush1.bf16.msra.mxu0 %v2151
    %2217 = vmatprep.subr.bf16.mxu0 %v2156
    %2218 = vmatpush1.bf16.msra.mxu0 %v2155
    %2219 = vmatprep.subr.bf16.mxu0 %v2160
    %2220 = vmatpush1.bf16.msra.mxu0 %v2159
    %2221 = vmatprep.subr.bf16.mxu0 %v2164
    %2222 = vmatpush1.bf16.msra.mxu0 %v2163
    %2223 = vmatprep.subr.bf16.mxu0 %v2168
    %2224 = vmatpush1.bf16.msra.mxu0 %v2167
    %2225 = vmatprep.subr.bf16.mxu0 %v2172
    %2226 = vmatpush1.bf16.msra.mxu0 %v2171
    %2227 = vmatprep.subr.bf16.mxu0 %v2176
    %2228 = vmatpush1.bf16.msra.mxu0 %v2175
    %2229 = vmatprep.subr.bf16.mxu0 %v2180
    %2230 = vmatpush1.bf16.msra.mxu0 %v2179
    %2231 = vmatprep.subr.bf16.mxu0 0
    %2232 = vmatpush1.bf16.msra.mxu0 0
    %2233 = vmatprep.subr.bf16.mxu0 0
    %2234 = vmatpush1.bf16.msra.mxu0 0
    %2235 = vmatprep.subr.bf16.mxu0 0
    %2236 = vmatpush1.bf16.msra.mxu0 0
    %2237 = vmatprep.subr.bf16.mxu0 0
    %2238 = vmatpush1.bf16.msra.mxu0 0
    %2239 = vmatprep.subr.bf16.mxu0 0
    %2240 = vmatpush1.bf16.msra.mxu0 0
    %2241 = vmatprep.subr.bf16.mxu0 0
    %2242 = vmatpush1.bf16.msra.mxu0 0
    %2243 = vmatprep.subr.bf16.mxu0 0
    %2244 = vmatpush1.bf16.msra.mxu0 0
    %2245 = vmatprep.subr.bf16.mxu0 0
    %2246 = vmatpush1.bf16.msra.mxu0 0
    %2247 = vmatprep.mubr.bf16.mxu0 0
    %2248 = vmatmul.mubr.bf16.gmra.mrb[0].mxu0 %v2022
    %v2249 = vpop.f32.mrb[0].mxu0
    %v2250 = vadd.f32 0.0, %v2249
    %v2251 = vpop.f32.mrb[0].mxu0
    %v2252 = vadd.f32 0.0, %v2251
    %v2253 = vpop.f32.mrb[0].mxu0
    %v2254 = vpop.f32.mrb[0].mxu0
    %2255 = vdwg.mxu0
    %2256 = vmatprep.subr.bf16.mxu0 %v2154
    %2257 = vmatpush1.bf16.msra.mxu0 %v2153
    %2258 = vmatprep.subr.bf16.mxu0 %v2158
    %2259 = vmatpush1.bf16.msra.mxu0 %v2157
    %2260 = vmatprep.subr.bf16.mxu0 %v2162
    %2261 = vmatpush1.bf16.msra.mxu0 %v2161
    %2262 = vmatprep.subr.bf16.mxu0 %v2166
    %2263 = vmatpush1.bf16.msra.mxu0 %v2165
    %2264 = vmatprep.subr.bf16.mxu0 %v2170
    %2265 = vmatpush1.bf16.msra.mxu0 %v2169
    %2266 = vmatprep.subr.bf16.mxu0 %v2174
    %2267 = vmatpush1.bf16.msra.mxu0 %v2173
    %2268 = vmatprep.subr.bf16.mxu0 %v2178
    %2269 = vmatpush1.bf16.msra.mxu0 %v2177
    %2270 = vmatprep.subr.bf16.mxu0 %v2182
    %2271 = vmatpush1.bf16.msra.mxu0 %v2181
    %2272 = vmatprep.subr.bf16.mxu0 0
    %2273 = vmatpush1.bf16.msra.mxu0 0
    %2274 = vmatprep.subr.bf16.mxu0 0
    %2275 = vmatpush1.bf16.msra.mxu0 0
    %2276 = vmatprep.subr.bf16.mxu0 0
    %2277 = vmatpush1.bf16.msra.mxu0 0
    %2278 = vmatprep.subr.bf16.mxu0 0
    %2279 = vmatpush1.bf16.msra.mxu0 0
    %2280 = vmatprep.subr.bf16.mxu0 0
    %2281 = vmatpush1.bf16.msra.mxu0 0
    %2282 = vmatprep.subr.bf16.mxu0 0
    %2283 = vmatpush1.bf16.msra.mxu0 0
    %2284 = vmatprep.subr.bf16.mxu0 0
    %2285 = vmatpush1.bf16.msra.mxu0 0
    %2286 = vmatprep.subr.bf16.mxu0 0
    %2287 = vmatpush1.bf16.msra.mxu0 0
    %2288 = vmatprep.mubr.bf16.mxu0 0
    %2289 = vmatmul.mubr.bf16.gmra.mrb[0].mxu0 %v2022
    %v2290 = vpop.f32.mrb[0].mxu0
    %v2291 = vadd.f32 0.0, %v2290
    %v2292 = vpop.f32.mrb[0].mxu0
    %v2293 = vadd.f32 0.0, %v2292
    %v2294 = vpop.f32.mrb[0].mxu0
    %v2295 = vpop.f32.mrb[0].mxu0
    %2296 = vdwg.mxu0
    %v2301 = vcombine.low %v2250, %v2252
    %v2302 = vcombine.low %v2291, %v2293
    %v2304 = vunpack.c.l.s4 1983009808
    %v2305 = vunpack.c.0.s8 %v2304
    %v2306 = vlaneseq
    %v2307 = vshrl.u32 %v2306, 7
    %v2308 = vsub.s32 %v2305, %v2307
    %v2309 = vrot.slane %v2301, %v2308
    %v2311 = vunpack.c.l.s4 1983009808
    %v2312 = vunpack.c.0.s8 %v2311
    %v2313 = vlaneseq
    %v2314 = vshrl.u32 %v2313, 7
    %v2315 = vsub.s32 %v2312, %v2314
    %v2316 = vrot.slane %v2302, %v2315
    %v2317 = vcombine.low %v2309, %v2316
    %v2319 = vadd.f32 %v2021, %v2317
    %v2320 = vmul.f32 %v2319, 0.5
    %v2321 = vtanh.pop %v2320
    %v2322 = vadd.f32 %v2321, 1.0
    %v2323 = vmul.f32 %v2322, 0.5
    %v2325 = vrot.slane %v2319, 2
    %v2327 = vmul.f32 %v2325, 0.5
    %v2328 = vtanh.pop %v2327
    %v2329 = vadd.f32 %v2328, 1.0
    %v2330 = vmul.f32 %v2329, 0.5
    %v2331 = vrot.slane %v2319, 4
    %v2333 = vtanh.pop %v2331
    %v2334 = vrot.slane %v2319, 6
    %v2336 = vmul.f32 %v2334, 0.5
    %v2337 = vtanh.pop %v2336
    %v2338 = vadd.f32 %v2337, 1.0
    %v2339 = vmul.f32 %v2338, 0.5
    %v2340 = vmul.f32 %v2330, %v2014
    %v2341 = vmul.f32 %v2323, %v2333
    %v2342 = vadd.f32 %v2340, %v2341
    %v2343 = vtanh.pop %v2342
    %v2344 = vmul.f32 %v2339, %v2343
    %s2345 = scalar_lea.vmem [#allocation9], 12
    %2346 = vst [vmem:[%s2345] sm:$0x3] %v2344
    %s2347 = scalar_lea.vmem [#allocation4], 28
    %v2348 = vld [vmem:[%s2347] sm:$0xf]
    %v2349 = vunpack.c.l.bf16 %v2348
    %v2350 = vpack.c.bf16 %v2344, %v2344
    %v2351 = vld [vmem:[#allocation7] sm:$0xff]
    %v2352 = vld [vmem:[#allocation7 + $0x8] sm:$0xff]
    %v2353 = vld [vmem:[#allocation7 + $0x10] sm:$0xff]
    %v2354 = vld [vmem:[#allocation7 + $0x18] sm:$0xff]
    %v2355 = vld [vmem:[#allocation7 + $0x20] sm:$0xff]
    %v2356 = vld [vmem:[#allocation7 + $0x28] sm:$0xff]
    %v2357 = vld [vmem:[#allocation7 + $0x30] sm:$0xff]
    %v2358 = vld [vmem:[#allocation7 + $0x38] sm:$0xff]
    %v2359 = vld [vmem:[#allocation7 + $0x40] sm:$0xff]
    %v2360 = vld [vmem:[#allocation7 + $0x48] sm:$0xff]
    %v2361 = vld [vmem:[#allocation7 + $0x50] sm:$0xff]
    %v2362 = vld [vmem:[#allocation7 + $0x58] sm:$0xff]
    %v2363 = vld [vmem:[#allocation7 + $0x60] sm:$0xff]
    %v2364 = vld [vmem:[#allocation7 + $0x68] sm:$0xff]
    %v2365 = vld [vmem:[#allocation7 + $0x70] sm:$0xff]
    %v2366 = vld [vmem:[#allocation7 + $0x78] sm:$0xff]
    %v2367 = vld [vmem:[#allocation7 + $0x80] sm:$0xff]
    %v2368 = vld [vmem:[#allocation7 + $0x88] sm:$0xff]
    %v2369 = vld [vmem:[#allocation7 + $0x90] sm:$0xff]
    %v2370 = vld [vmem:[#allocation7 + $0x98] sm:$0xff]
    %v2371 = vld [vmem:[#allocation7 + $0xa0] sm:$0xff]
    %v2372 = vld [vmem:[#allocation7 + $0xa8] sm:$0xff]
    %v2373 = vld [vmem:[#allocation7 + $0xb0] sm:$0xff]
    %v2374 = vld [vmem:[#allocation7 + $0xb8] sm:$0xff]
    %v2375 = vld [vmem:[#allocation7 + $0xc0] sm:$0xff]
    %v2376 = vld [vmem:[#allocation7 + $0xc8] sm:$0xff]
    %v2377 = vld [vmem:[#allocation7 + $0xd0] sm:$0xff]
    %v2378 = vld [vmem:[#allocation7 + $0xd8] sm:$0xff]
    %v2379 = vld [vmem:[#allocation7 + $0xe0] sm:$0xff]
    %v2380 = vld [vmem:[#allocation7 + $0xe8] sm:$0xff]
    %v2381 = vld [vmem:[#allocation7 + $0xf0] sm:$0xff]
    %v2382 = vld [vmem:[#allocation7 + $0xf8] sm:$0xff]
    %v2415 = vunpack.c.l.b16 %v2351
    %v2416 = vunpack.c.h.b16 %v2351
    %v2417 = vunpack.c.l.b16 %v2352
    %v2418 = vunpack.c.h.b16 %v2352
    %v2419 = vunpack.c.l.b16 %v2353
    %v2420 = vunpack.c.h.b16 %v2353
    %v2421 = vunpack.c.l.b16 %v2354
    %v2422 = vunpack.c.h.b16 %v2354
    %v2423 = vunpack.c.l.b16 %v2355
    %v2424 = vunpack.c.h.b16 %v2355
    %v2425 = vunpack.c.l.b16 %v2356
    %v2426 = vunpack.c.h.b16 %v2356
    %v2427 = vunpack.c.l.b16 %v2357
    %v2428 = vunpack.c.h.b16 %v2357
    %v2429 = vunpack.c.l.b16 %v2358
    %v2430 = vunpack.c.h.b16 %v2358
    %v2431 = vunpack.c.l.b16 %v2359
    %v2432 = vunpack.c.h.b16 %v2359
    %v2433 = vunpack.c.l.b16 %v2360
    %v2434 = vunpack.c.h.b16 %v2360
    %v2435 = vunpack.c.l.b16 %v2361
    %v2436 = vunpack.c.h.b16 %v2361
    %v2437 = vunpack.c.l.b16 %v2362
    %v2438 = vunpack.c.h.b16 %v2362
    %v2439 = vunpack.c.l.b16 %v2363
    %v2440 = vunpack.c.h.b16 %v2363
    %v2441 = vunpack.c.l.b16 %v2364
    %v2442 = vunpack.c.h.b16 %v2364
    %v2443 = vunpack.c.l.b16 %v2365
    %v2444 = vunpack.c.h.b16 %v2365
    %v2445 = vunpack.c.l.b16 %v2366
    %v2446 = vunpack.c.h.b16 %v2366
    %v2447 = vunpack.c.l.b16 %v2367
    %v2448 = vunpack.c.h.b16 %v2367
    %v2449 = vunpack.c.l.b16 %v2368
    %v2450 = vunpack.c.h.b16 %v2368
    %v2451 = vunpack.c.l.b16 %v2369
    %v2452 = vunpack.c.h.b16 %v2369
    %v2453 = vunpack.c.l.b16 %v2370
    %v2454 = vunpack.c.h.b16 %v2370
    %v2455 = vunpack.c.l.b16 %v2371
    %v2456 = vunpack.c.h.b16 %v2371
    %v2457 = vunpack.c.l.b16 %v2372
    %v2458 = vunpack.c.h.b16 %v2372
    %v2459 = vunpack.c.l.b16 %v2373
    %v2460 = vunpack.c.h.b16 %v2373
    %v2461 = vunpack.c.l.b16 %v2374
    %v2462 = vunpack.c.h.b16 %v2374
    %v2463 = vunpack.c.l.b16 %v2375
    %v2464 = vunpack.c.h.b16 %v2375
    %v2465 = vunpack.c.l.b16 %v2376
    %v2466 = vunpack.c.h.b16 %v2376
    %v2467 = vunpack.c.l.b16 %v2377
    %v2468 = vunpack.c.h.b16 %v2377
    %v2469 = vunpack.c.l.b16 %v2378
    %v2470 = vunpack.c.h.b16 %v2378
    %v2471 = vunpack.c.l.b16 %v2379
    %v2472 = vunpack.c.h.b16 %v2379
    %v2473 = vunpack.c.l.b16 %v2380
    %v2474 = vunpack.c.h.b16 %v2380
    %v2475 = vunpack.c.l.b16 %v2381
    %v2476 = vunpack.c.h.b16 %v2381
    %v2477 = vunpack.c.l.b16 %v2382
    %v2478 = vunpack.c.h.b16 %v2382
    %v2479 = vpack.c.b16 %v2419, %v2415
    %v2480 = vpack.c.b16 %v2420, %v2416
    %v2481 = vpack.c.b16 %v2421, %v2417
    %v2482 = vpack.c.b16 %v2422, %v2418
    %v2483 = vpack.c.b16 %v2427, %v2423
    %v2484 = vpack.c.b16 %v2428, %v2424
    %v2485 = vpack.c.b16 %v2429, %v2425
    %v2486 = vpack.c.b16 %v2430, %v2426
    %v2487 = vpack.c.b16 %v2435, %v2431
    %v2488 = vpack.c.b16 %v2436, %v2432
    %v2489 = vpack.c.b16 %v2437, %v2433
    %v2490 = vpack.c.b16 %v2438, %v2434
    %v2491 = vpack.c.b16 %v2443, %v2439
    %v2492 = vpack.c.b16 %v2444, %v2440
    %v2493 = vpack.c.b16 %v2445, %v2441
    %v2494 = vpack.c.b16 %v2446, %v2442
    %v2495 = vpack.c.b16 %v2451, %v2447
    %v2496 = vpack.c.b16 %v2452, %v2448
    %v2497 = vpack.c.b16 %v2453, %v2449
    %v2498 = vpack.c.b16 %v2454, %v2450
    %v2499 = vpack.c.b16 %v2459, %v2455
    %v2500 = vpack.c.b16 %v2460, %v2456
    %v2501 = vpack.c.b16 %v2461, %v2457
    %v2502 = vpack.c.b16 %v2462, %v2458
    %v2503 = vpack.c.b16 %v2467, %v2463
    %v2504 = vpack.c.b16 %v2468, %v2464
    %v2505 = vpack.c.b16 %v2469, %v2465
    %v2506 = vpack.c.b16 %v2470, %v2466
    %v2507 = vpack.c.b16 %v2475, %v2471
    %v2508 = vpack.c.b16 %v2476, %v2472
    %v2509 = vpack.c.b16 %v2477, %v2473
    %v2510 = vpack.c.b16 %v2478, %v2474
    %2543 = vmatprep.subr.bf16.mxu0 %v2480
    %2544 = vmatpush1.bf16.msra.mxu0 %v2479
    %2545 = vmatprep.subr.bf16.mxu0 %v2484
    %2546 = vmatpush1.bf16.msra.mxu0 %v2483
    %2547 = vmatprep.subr.bf16.mxu0 %v2488
    %2548 = vmatpush1.bf16.msra.mxu0 %v2487
    %2549 = vmatprep.subr.bf16.mxu0 %v2492
    %2550 = vmatpush1.bf16.msra.mxu0 %v2491
    %2551 = vmatprep.subr.bf16.mxu0 %v2496
    %2552 = vmatpush1.bf16.msra.mxu0 %v2495
    %2553 = vmatprep.subr.bf16.mxu0 %v2500
    %2554 = vmatpush1.bf16.msra.mxu0 %v2499
    %2555 = vmatprep.subr.bf16.mxu0 %v2504
    %2556 = vmatpush1.bf16.msra.mxu0 %v2503
    %2557 = vmatprep.subr.bf16.mxu0 %v2508
    %2558 = vmatpush1.bf16.msra.mxu0 %v2507
    %2559 = vmatprep.subr.bf16.mxu0 0
    %2560 = vmatpush1.bf16.msra.mxu0 0
    %2561 = vmatprep.subr.bf16.mxu0 0
    %2562 = vmatpush1.bf16.msra.mxu0 0
    %2563 = vmatprep.subr.bf16.mxu0 0
    %2564 = vmatpush1.bf16.msra.mxu0 0
    %2565 = vmatprep.subr.bf16.mxu0 0
    %2566 = vmatpush1.bf16.msra.mxu0 0
    %2567 = vmatprep.subr.bf16.mxu0 0
    %2568 = vmatpush1.bf16.msra.mxu0 0
    %2569 = vmatprep.subr.bf16.mxu0 0
    %2570 = vmatpush1.bf16.msra.mxu0 0
    %2571 = vmatprep.subr.bf16.mxu0 0
    %2572 = vmatpush1.bf16.msra.mxu0 0
    %2573 = vmatprep.subr.bf16.mxu0 0
    %2574 = vmatpush1.bf16.msra.mxu0 0
    %2575 = vmatprep.mubr.bf16.mxu0 0
    %2576 = vmatmul.mubr.bf16.gmra.mrb[0].mxu0 %v2350
    %v2577 = vpop.f32.mrb[0].mxu0
    %v2578 = vadd.f32 0.0, %v2577
    %v2579 = vpop.f32.mrb[0].mxu0
    %v2580 = vadd.f32 0.0, %v2579
    %v2581 = vpop.f32.mrb[0].mxu0
    %v2582 = vpop.f32.mrb[0].mxu0
    %2583 = vdwg.mxu0
    %2584 = vmatprep.subr.bf16.mxu0 %v2482
    %2585 = vmatpush1.bf16.msra.mxu0 %v2481
    %2586 = vmatprep.subr.bf16.mxu0 %v2486
    %2587 = vmatpush1.bf16.msra.mxu0 %v2485
    %2588 = vmatprep.subr.bf16.mxu0 %v2490
    %2589 = vmatpush1.bf16.msra.mxu0 %v2489
    %2590 = vmatprep.subr.bf16.mxu0 %v2494
    %2591 = vmatpush1.bf16.msra.mxu0 %v2493
    %2592 = vmatprep.subr.bf16.mxu0 %v2498
    %2593 = vmatpush1.bf16.msra.mxu0 %v2497
    %2594 = vmatprep.subr.bf16.mxu0 %v2502
    %2595 = vmatpush1.bf16.msra.mxu0 %v2501
    %2596 = vmatprep.subr.bf16.mxu0 %v2506
    %2597 = vmatpush1.bf16.msra.mxu0 %v2505
    %2598 = vmatprep.subr.bf16.mxu0 %v2510
    %2599 = vmatpush1.bf16.msra.mxu0 %v2509
    %2600 = vmatprep.subr.bf16.mxu0 0
    %2601 = vmatpush1.bf16.msra.mxu0 0
    %2602 = vmatprep.subr.bf16.mxu0 0
    %2603 = vmatpush1.bf16.msra.mxu0 0
    %2604 = vmatprep.subr.bf16.mxu0 0
    %2605 = vmatpush1.bf16.msra.mxu0 0
    %2606 = vmatprep.subr.bf16.mxu0 0
    %2607 = vmatpush1.bf16.msra.mxu0 0
    %2608 = vmatprep.subr.bf16.mxu0 0
    %2609 = vmatpush1.bf16.msra.mxu0 0
    %2610 = vmatprep.subr.bf16.mxu0 0
    %2611 = vmatpush1.bf16.msra.mxu0 0
    %2612 = vmatprep.subr.bf16.mxu0 0
    %2613 = vmatpush1.bf16.msra.mxu0 0
    %2614 = vmatprep.subr.bf16.mxu0 0
    %2615 = vmatpush1.bf16.msra.mxu0 0
    %2616 = vmatprep.mubr.bf16.mxu0 0
    %2617 = vmatmul.mubr.bf16.gmra.mrb[0].mxu0 %v2350
    %v2618 = vpop.f32.mrb[0].mxu0
    %v2619 = vadd.f32 0.0, %v2618
    %v2620 = vpop.f32.mrb[0].mxu0
    %v2621 = vadd.f32 0.0, %v2620
    %v2622 = vpop.f32.mrb[0].mxu0
    %v2623 = vpop.f32.mrb[0].mxu0
    %2624 = vdwg.mxu0
    %v2629 = vcombine.low %v2578, %v2580
    %v2630 = vcombine.low %v2619, %v2621
    %v2632 = vunpack.c.l.s4 1983009808
    %v2633 = vunpack.c.0.s8 %v2632
    %v2634 = vlaneseq
    %v2635 = vshrl.u32 %v2634, 7
    %v2636 = vsub.s32 %v2633, %v2635
    %v2637 = vrot.slane %v2629, %v2636
    %v2639 = vunpack.c.l.s4 1983009808
    %v2640 = vunpack.c.0.s8 %v2639
    %v2641 = vlaneseq
    %v2642 = vshrl.u32 %v2641, 7
    %v2643 = vsub.s32 %v2640, %v2642
    %v2644 = vrot.slane %v2630, %v2643
    %v2645 = vcombine.low %v2637, %v2644
    %v2647 = vadd.f32 %v2349, %v2645
    %v2648 = vmul.f32 %v2647, 0.5
    %v2649 = vtanh.pop %v2648
    %v2650 = vadd.f32 %v2649, 1.0
    %v2651 = vmul.f32 %v2650, 0.5
    %v2653 = vrot.slane %v2647, 2
    %v2655 = vmul.f32 %v2653, 0.5
    %v2656 = vtanh.pop %v2655
    %v2657 = vadd.f32 %v2656, 1.0
    %v2658 = vmul.f32 %v2657, 0.5
    %v2659 = vrot.slane %v2647, 4
    %v2661 = vtanh.pop %v2659
    %v2662 = vrot.slane %v2647, 6
    %v2664 = vmul.f32 %v2662, 0.5
    %v2665 = vtanh.pop %v2664
    %v2666 = vadd.f32 %v2665, 1.0
    %v2667 = vmul.f32 %v2666, 0.5
    %v2668 = vmul.f32 %v2658, %v2342
    %v2669 = vmul.f32 %v2651, %v2661
    %v2670 = vadd.f32 %v2668, %v2669
    %v2671 = vtanh.pop %v2670
    %v2672 = vmul.f32 %v2667, %v2671
    %s2673 = scalar_lea.vmem [#allocation9], 14
    %2674 = vst [vmem:[%s2673] sm:$0x3] %v2672
    %2675 = vst [vmem:[#allocation2] sm:$0x3] %v2672
    %2676 = vst [vmem:[#allocation3] sm:$0x3] %v2670
    // Predicated region
    $region22: #{tpu_custom_call.1} parent=1 // pred_check
      %p2677 = pneg %p45
    $region23: #{tpu_custom_call.1} parent=1 // pred_check_branch
      %2679 = sbr.rel (%p2677) target = $region25
    $region24: #{tpu_custom_call.1} parent=1 // pred_region
      %2680 = vst [vmem:[#allocation10] sm:$0x3] %v2672
      %2681 = vst [vmem:[#allocation12] sm:$0x3] %v2670
    $region25: #{tpu_custom_call.1} parent=1 // pred_fallthru
      _
    // Predicated region
    $region26: #{tpu_custom_call.1} parent=1 // pred_check
      _
    $region27: #{tpu_custom_call.1} parent=1 // pred_check_branch
      %2683 = sbr.rel (0) target = $region29
    $region28: #{tpu_custom_call.1} parent=1 // pred_region
      %s2685 = ssub.s32 256, 256
      %2686 = vsyncadd [#allocation6], %s2685
      %s2687 = sshll.u32 [#allocation9], 4
      %s2688 = int_to_ptr.vmem [resolvable:$true] %s2687
      %2693 = dma.vmem_to_hbm [thread:$0]  %s2688, 256, %s2, [#allocation6], 32, 32, 2
    $region29: #{tpu_custom_call.1} parent=1 // pred_fallthru
      _
    // Predicated region
    $region30: #{tpu_custom_call.1} parent=1 // pred_check
      _
    $region31: #{tpu_custom_call.1} parent=1 // pred_check_branch
      %2695 = sbr.rel (0) target = $region33
    $region32: #{tpu_custom_call.1} parent=1 // pred_region
      %s2697 = ssub.s32 32, 32
      %2698 = vsyncadd [#allocation11], %s2697
      %s2700 = sshll.u32 [#allocation10], 4
      %s2701 = int_to_ptr.vmem [resolvable:$true] %s2700
      %2703 = dma.vmem_to_hbm [thread:$0]  %s2701, 32, %s3, [#allocation11]
    $region33: #{tpu_custom_call.1} parent=1 // pred_fallthru
      _
    // Predicated region
    $region34: #{tpu_custom_call.1} parent=1 // pred_check
      _
    $region35: #{tpu_custom_call.1} parent=1 // pred_check_branch
      %2705 = sbr.rel (0) target = $region37
    $region36: #{tpu_custom_call.1} parent=1 // pred_region
      %s2707 = ssub.s32 32, 32
      %2708 = vsyncadd [#allocation11], %s2707
      %s2710 = sshll.u32 [#allocation12], 4
      %s2711 = int_to_ptr.vmem [resolvable:$true] %s2710
      %2713 = dma.vmem_to_hbm [thread:$0]  %s2711, 32, %s4, [#allocation11]
    $region37: #{tpu_custom_call.1} parent=1 // pred_fallthru
      _
    // Predicated region
    $region38: #{tpu_custom_call.1} parent=1 // pred_check
      _
    $region39: #{tpu_custom_call.1} parent=1 // pred_check_branch
      %2715 = sbr.rel (0) target = $region41
    $region40: #{tpu_custom_call.1} parent=1 // pred_region
      %2716 = dma.done [#allocation6], 256
    $region41: #{tpu_custom_call.1} parent=1 // pred_fallthru
      _
    // Predicated region
    $region42: #{tpu_custom_call.1} parent=1 // pred_check
      _
    $region43: #{tpu_custom_call.1} parent=1 // pred_check_branch
      %2718 = sbr.rel (0) target = $region45
    $region44: #{tpu_custom_call.1} parent=1 // pred_region
      %2719 = dma.done [#allocation11], 32
    $region45: #{tpu_custom_call.1} parent=1 // pred_fallthru
      _
    // Predicated region
    $region46: #{tpu_custom_call.1} parent=1 // pred_check
      _
    $region47: #{tpu_custom_call.1} parent=1 // pred_check_branch
      %2721 = sbr.rel (0) target = $region49
    $region48: #{tpu_custom_call.1} parent=1 // pred_region
      %2722 = dma.done [#allocation11], 32
    $region49: #{tpu_custom_call.1} parent=1 // pred_fallthru
      _
    %2723 = vsyncpa [#allocation5], 1
    %2724 = vsyncpa [#allocation8], 1
    %2725 = vsyncpa [#allocation6], 1
    %2726 = vsyncpa [#allocation11], 1

</llo_original>
